<compile_context>
chip_gen: v7x
topology: tpu7x:2x2x1
jax: 0.10.0
libtpu: 0.0.40
codegen_flags: <defaults>
</compile_context>

<pallas_src>
import functools

import jax
import jax.numpy as jnp
import numpy as np
from jax.experimental import pallas as pl
from jax.experimental.pallas import tpu as pltpu


# ------------------------- Fused LSTM-stack + decoder ------------------------- #

def _fused_lstm_kernel(len_ref, x_ref, wih0_ref, b0_ref, wihr_ref, br_ref,
                       whh_ref, h0_ref, c0_ref, wdec_ref, bdec_ref,
                       dec_ref, hn_ref, cn_ref,
                       h_scr, c_scr, xbuf, gbuf,
                       *, nhid, nlayers, t_chunk):
    c_idx = pl.program_id(1)
    n_chunks = pl.num_programs(1)
    bb = h_scr.shape[1]

    @pl.when(c_idx == 0)
    def _():
        h_scr[...] = h0_ref[...]
        c_scr[...] = c0_ref[...]

    lens = len_ref[...]                      # (bb, 1) int32
    t0 = c_idx * t_chunk                     # global timestep offset of this chunk

    def run_layer(l, gx):
        # gx: (t_chunk*bb, 4*nhid) f32 — chunk input projection (+bias) for layer l.
        gbuf[...] = gx.reshape(t_chunk, bb, 4 * nhid)
        whh_l = whh_ref[l]                   # (nhid, 4*nhid) bf16, static index

        def step(i, carry):
            h, c = carry                     # (bb, nhid) f32
            gates = gbuf[i] + jnp.dot(h.astype(jnp.bfloat16), whh_l,
                                      preferred_element_type=jnp.float32)
            i_g = jax.nn.sigmoid(gates[:, 0 * nhid:1 * nhid])
            f_g = jax.nn.sigmoid(gates[:, 1 * nhid:2 * nhid])
            g_g = jnp.tanh(gates[:, 2 * nhid:3 * nhid])
            o_g = jax.nn.sigmoid(gates[:, 3 * nhid:4 * nhid])
            c_new = f_g * c + i_g * g_g
            h_new = o_g * jnp.tanh(c_new)
            # Packed-sequence masking: freeze state once t >= length.
            mask = lens > (t0 + i)           # (bb, 1) bool
            h = jnp.where(mask, h_new, h)
            c = jnp.where(mask, c_new, c)
            xbuf[i] = h                      # chunk output -> input of next layer
            return (h, c)

        h, c = jax.lax.fori_loop(0, t_chunk, step,
                                 (h_scr[l], c_scr[l]), unroll=True)
        h_scr[l] = h
        c_scr[l] = c

    # ---- layer 0: input projection over the whole chunk (bf16 MXU, bias folded) ----
    x0 = x_ref[...].reshape(t_chunk * bb, -1)            # bf16 (t_chunk*bb, ninp)
    gx0 = (jnp.dot(x0, wih0_ref[...], preferred_element_type=jnp.float32)
           + b0_ref[...])
    run_layer(0, gx0)

    # ---- layers 1..L-1: chunk input is previous layer's chunk output (VMEM) ----
    for l in range(1, nlayers):
        xl = xbuf[...].astype(jnp.bfloat16).reshape(t_chunk * bb, nhid)
        gxl = (jnp.dot(xl, wihr_ref[l - 1], preferred_element_type=jnp.float32)
               + br_ref[l - 1])
        run_layer(l, gxl)

    # ---- epilogue: final hidden states + fused decoder(+sigmoid) ----
    @pl.when(c_idx == n_chunks - 1)
    def _():
        hn_ref[...] = h_scr[...]
        cn_ref[...] = c_scr[...]
        logits = (jnp.dot(h_scr[nlayers - 1].astype(jnp.bfloat16), wdec_ref[...],
                          preferred_element_type=jnp.float32) + bdec_ref[...])
        dec_ref[...] = jax.nn.sigmoid(logits)


def fused_lstm_decode(lengths_col, emb, w_ih0, b0, w_ih_rest, b_rest, w_hh,
                      h0, c0, w_dec, b_dec, *, t_chunk):
    """Runs the whole LSTM stack + decoder in one pallas_call.

    lengths_col: (batch, 1) int32
    emb:         (seq_p, batch, ninp) bf16, seq_p % t_chunk == 0
    w_ih0:       (ninp, 4*nhid) bf16         b0:     (1, 4*nhid) f32
    w_ih_rest:   (max(L-1,1), nhid, 4*nhid) bf16
    b_rest:      (max(L-1,1), 1, 4*nhid) f32
    w_hh:        (L, nhid, 4*nhid) bf16
    h0, c0:      (L, batch, nhid) f32
    w_dec:       (nhid, nlabel_p) bf16       b_dec:  (1, nlabel_p) f32
    returns (decoded_padded (batch, nlabel_p), h_n (L,batch,nhid), c_n (L,batch,nhid))
    """
    seq_p, batch, ninp = emb.shape
    nlayers, _, nhid = h0.shape
    nlabel_p = w_dec.shape[1]
    n_chunks = seq_p // t_chunk
    bb = 8 if batch % 8 == 0 else batch      # sublane-aligned batch block
    n_bb = batch // bb
    wr = w_ih_rest.shape[0]

    kernel = functools.partial(_fused_lstm_kernel, nhid=nhid, nlayers=nlayers,
                               t_chunk=t_chunk)

    return pl.pallas_call(
        kernel,
        out_shape=(
            jax.ShapeDtypeStruct((batch, nlabel_p), jnp.float32),
            jax.ShapeDtypeStruct((nlayers, batch, nhid), jnp.float32),
            jax.ShapeDtypeStruct((nlayers, batch, nhid), jnp.float32),
        ),
        grid_spec=pltpu.PrefetchScalarGridSpec(
            num_scalar_prefetch=0,
            grid=(n_bb, n_chunks),
            in_specs=[
                pl.BlockSpec((bb, 1), lambda b, c: (b, 0)),                       # lengths
                pl.BlockSpec((t_chunk, bb, ninp), lambda b, c: (c, b, 0)),        # emb chunk
                pl.BlockSpec((ninp, 4 * nhid), lambda b, c: (0, 0)),              # W_ih layer 0
                pl.BlockSpec((1, 4 * nhid), lambda b, c: (0, 0)),                 # bias layer 0
                pl.BlockSpec((wr, nhid, 4 * nhid), lambda b, c: (0, 0, 0)),       # W_ih layers>=1
                pl.BlockSpec((wr, 1, 4 * nhid), lambda b, c: (0, 0, 0)),          # bias layers>=1
                pl.BlockSpec((nlayers, nhid, 4 * nhid), lambda b, c: (0, 0, 0)),  # W_hh (all)
                pl.BlockSpec((nlayers, bb, nhid), lambda b, c: (0, b, 0)),        # h0
                pl.BlockSpec((nlayers, bb, nhid), lambda b, c: (0, b, 0)),        # c0
                pl.BlockSpec((nhid, nlabel_p), lambda b, c: (0, 0)),              # W_dec
                pl.BlockSpec((1, nlabel_p), lambda b, c: (0, 0)),                 # b_dec
            ],
            out_specs=(
                pl.BlockSpec((bb, nlabel_p), lambda b, c: (b, 0)),                # decoded
                pl.BlockSpec((nlayers, bb, nhid), lambda b, c: (0, b, 0)),        # h_n
                pl.BlockSpec((nlayers, bb, nhid), lambda b, c: (0, b, 0)),        # c_n
            ),
            scratch_shapes=[
                pltpu.VMEM((nlayers, bb, nhid), jnp.float32),                     # h state
                pltpu.VMEM((nlayers, bb, nhid), jnp.float32),                     # c state
                pltpu.VMEM((t_chunk, bb, nhid), jnp.float32),                     # chunk outputs
                pltpu.VMEM((t_chunk, bb, 4 * nhid), jnp.float32),                 # chunk gates_x
            ],
        ),
        compiler_params=pltpu.CompilerParams(
            dimension_semantics=("parallel", "arbitrary")),
    )(lengths_col, emb, w_ih0, b0, w_ih_rest, b_rest, w_hh, h0, c0, w_dec, b_dec)


# ------------------------------- Full forward -------------------------------- #

def build_params(raw, nlayers, nhid, nlabel):
    """Converts PyTorch-layout weights into the kernel's stacked / bf16 layout."""
    w_ih0 = raw["w_ih_t"][0].astype(jnp.bfloat16)
    b0 = raw["bias"][0].astype(jnp.float32)
    if nlayers > 1:
        w_ih_rest = jnp.stack([raw["w_ih_t"][l] for l in range(1, nlayers)]
                              ).astype(jnp.bfloat16)
        b_rest = jnp.stack([raw["bias"][l] for l in range(1, nlayers)]
                           ).astype(jnp.float32)
    else:
        w_ih_rest = jnp.zeros((1, nhid, 4 * nhid), jnp.bfloat16)
        b_rest = jnp.zeros((1, 1, 4 * nhid), jnp.float32)
    w_hh = jnp.stack(raw["w_hh_t"]).astype(jnp.bfloat16)
    nlabel_p = ((nlabel + 127) // 128) * 128                     # lane-dense decoder out
    w_dec_p = jnp.zeros((nhid, nlabel_p), jnp.float32
                        ).at[:, :nlabel].set(raw["w_dec_t"]).astype(jnp.bfloat16)
    b_dec_p = jnp.zeros((1, nlabel_p), jnp.float32).at[:, :nlabel].set(raw["b_dec_row"])
    return {"embedding": raw["embedding"], "w_ih0": w_ih0, "b0": b0,
            "w_ih_rest": w_ih_rest, "b_rest": b_rest, "w_hh": w_hh,
            "w_dec": w_dec_p, "b_dec": b_dec_p, "nlabel": nlabel}


def rnn_model_forward(tokens, lengths, params, h0, c0, *, t_chunk=8):
    """Mirrors RNNModel.forward (eval mode).

    tokens:  (seq, batch) int32 token ids
    lengths: (batch,) int32 valid lengths
    h0, c0:  (nlayers, batch, nhid) f32
    returns (decoded (batch, nlabel), (h_n, c_n), perm_index)
    """
    nlayers, batch, nhid = h0.shape

    # lengths.sort(0, descending=True) + column permutation of the input
    perm_index = jnp.argsort(-lengths)
    sorted_lengths = lengths[perm_index].astype(jnp.int32)
    tokens = tokens[:, perm_index]

    # Embedding lookup (glue, plain JAX gather)
    emb = params["embedding"][tokens]                    # (seq, batch, ninp) f32
    seq = emb.shape[0]
    seq_p = ((seq + t_chunk - 1) // t_chunk) * t_chunk
    if seq_p != seq:                                     # pad time to chunk multiple;
        emb = jnp.pad(emb, ((0, seq_p - seq), (0, 0), (0, 0)))  # masked by lengths
    emb = emb.astype(jnp.bfloat16)

    lengths_col = sorted_lengths.reshape(batch, 1)

    decoded_p, h_n, c_n = fused_lstm_decode(
        lengths_col, emb, params["w_ih0"], params["b0"],
        params["w_ih_rest"], params["b_rest"], params["w_hh"],
        h0, c0, params["w_dec"], params["b_dec"], t_chunk=t_chunk)

    decoded = decoded_p[:, :params["nlabel"]]
    return decoded, (h_n, c_n), perm_index


# ----------------------------- Pure-JAX reference ----------------------------- #

def _reference_forward(tokens, lengths, raw, h0, c0):
    """Same math & precision choices (bf16 matmul inputs, f32 accum/elementwise)."""
    perm_index = jnp.argsort(-lengths)
    sorted_lengths = lengths[perm_index]
    tokens = tokens[:, perm_index]
    emb = raw["embedding"][tokens]
    nlayers, _, nhid = h0.shape

    x = emb
    hns, cns = [], []
    for l in range(nlayers):
        w_ih = raw["w_ih_t"][l].astype(jnp.bfloat16)
        w_hh = raw["w_hh_t"][l].astype(jnp.bfloat16)
        b = raw["bias"][l]

        def step(carry, inp, w_ih=w_ih, w_hh=w_hh, b=b):
            h, c = carry
            x_t, t = inp
            gx = jnp.dot(x_t.astype(jnp.bfloat16), w_ih,
                         preferred_element_type=jnp.float32) + b
            gates = gx + jnp.dot(h.astype(jnp.bfloat16), w_hh,
                                 preferred_element_type=jnp.float32)
            i = jax.nn.sigmoid(gates[:, 0 * nhid:1 * nhid])
            f = jax.nn.sigmoid(gates[:, 1 * nhid:2 * nhid])
            g = jnp.tanh(gates[:, 2 * nhid:3 * nhid])
            o = jax.nn.sigmoid(gates[:, 3 * nhid:4 * nhid])
            c_new = f * c + i * g
            h_new = o * jnp.tanh(c_new)
            mask = (sorted_lengths > t)[:, None]
            h = jnp.where(mask, h_new, h)
            c = jnp.where(mask, c_new, c)
            return (h, c), h

        (h_n, c_n), outs = jax.lax.scan(
            step, (h0[l], c0[l]), (x, jnp.arange(x.shape[0], dtype=jnp.int32)))
        x = outs
        hns.append(h_n)
        cns.append(c_n)

    logits = jnp.dot(hns[-1].astype(jnp.bfloat16),
                     raw["w_dec_t"].astype(jnp.bfloat16),
                     preferred_element_type=jnp.float32) + raw["b_dec_row"]
    return jax.nn.sigmoid(logits), jnp.stack(hns), jnp.stack(cns)


# ----------------------------------- Main ------------------------------------ #

if __name__ == "__main__":
    # Lane/sublane-friendly small shapes: nhid multiple of 128, batch multiple of 8.
    NTOKEN, NINP, NHID, NLAYERS, NLABEL = 50, 64, 128, 2, 4
    SEQ, BATCH = 16, 8
    T_CHUNK = 8

    key = jax.random.PRNGKey(0)
    ks = jax.random.split(key, 20)
    initrange = 0.1
    stdv = 1.0 / np.sqrt(NHID)

    # Parameters (mirrors nn.Embedding / nn.LSTM / nn.Linear shapes).
    embedding = jax.random.uniform(ks[0], (NTOKEN, NINP), jnp.float32,
                                   -initrange, initrange)

    w_ih_t, w_hh_t, bias = [], [], []
    for l in range(NLAYERS):
        in_feat = NINP if l == 0 else NHID
        w_ih = jax.random.uniform(ks[1 + 4 * l], (4 * NHID, in_feat), jnp.float32, -stdv, stdv)
        w_hh = jax.random.uniform(ks[2 + 4 * l], (4 * NHID, NHID), jnp.float32, -stdv, stdv)
        b_ih = jax.random.uniform(ks[3 + 4 * l], (4 * NHID,), jnp.float32, -stdv, stdv)
        b_hh = jax.random.uniform(ks[4 + 4 * l], (4 * NHID,), jnp.float32, -stdv, stdv)
        w_ih_t.append(w_ih.T)                      # (in_feat, 4*nhid)
        w_hh_t.append(w_hh.T)                      # (nhid, 4*nhid)
        bias.append((b_ih + b_hh).reshape(1, -1))  # (1, 4*nhid)

    w_dec = jax.random.uniform(ks[10], (NLABEL, NHID), jnp.float32, -initrange, initrange)
    b_dec = jnp.zeros((NLABEL,), jnp.float32)

    raw = {"embedding": embedding, "w_ih_t": w_ih_t, "w_hh_t": w_hh_t, "bias": bias,
           "w_dec_t": w_dec.T, "b_dec_row": b_dec.reshape(1, -1)}
    params = build_params(raw, NLAYERS, NHID, NLABEL)

    # Inputs: token ids (seq, batch), variable lengths, zero initial hidden.
    tokens = jax.random.randint(ks[11], (SEQ, BATCH), 0, NTOKEN, dtype=jnp.int32)
    lengths = jnp.array([5, 16, 3, 9, 12, 7, 14, 2], dtype=jnp.int32)
    h0 = jnp.zeros((NLAYERS, BATCH, NHID), jnp.float32)
    c0 = jnp.zeros((NLAYERS, BATCH, NHID), jnp.float32)

    decoded, (h_n, c_n), perm_index = rnn_model_forward(
        tokens, lengths, params, h0, c0, t_chunk=T_CHUNK)
    jax.block_until_ready((decoded, h_n, c_n, perm_index))

    # Sanity check against a pure-JAX reference of the same math/precision.
    ref_dec, ref_hn, ref_cn = _reference_forward(tokens, lengths, raw, h0, c0)
    jax.block_until_ready((ref_dec, ref_hn, ref_cn))

    np.testing.assert_allclose(np.asarray(decoded), np.asarray(ref_dec),
                               rtol=5e-3, atol=5e-3)
    np.testing.assert_allclose(np.asarray(h_n), np.asarray(ref_hn),
                               rtol=5e-3, atol=5e-3)
    np.testing.assert_allclose(np.asarray(c_n), np.asarray(ref_cn),
                               rtol=5e-3, atol=5e-3)

    print("KERNEL_OK")
</pallas_src>

<mosaic_0001>
module attributes {stable_mosaic.version = 11 : i64} {
  func.func @_fused_lstm_kernel(%arg0: i32, %arg1: i32, %arg2: memref<8x1xi32, #tpu.memory_space<vmem>>, %arg3: memref<8x8x64xbf16, #tpu.memory_space<vmem>>, %arg4: memref<64x512xbf16, #tpu.memory_space<vmem>>, %arg5: memref<1x512xf32, #tpu.memory_space<vmem>>, %arg6: memref<1x128x512xbf16, #tpu.memory_space<vmem>>, %arg7: memref<1x1x512xf32, #tpu.memory_space<vmem>>, %arg8: memref<2x128x512xbf16, #tpu.memory_space<vmem>>, %arg9: memref<2x8x128xf32, #tpu.memory_space<vmem>>, %arg10: memref<2x8x128xf32, #tpu.memory_space<vmem>>, %arg11: memref<128x128xbf16, #tpu.memory_space<vmem>>, %arg12: memref<1x128xf32, #tpu.memory_space<vmem>>, %arg13: memref<8x128xf32, #tpu.memory_space<vmem>>, %arg14: memref<2x8x128xf32, #tpu.memory_space<vmem>>, %arg15: memref<2x8x128xf32, #tpu.memory_space<vmem>>, %arg16: memref<2x8x128xf32, #tpu.memory_space<vmem>>, %arg17: memref<2x8x128xf32, #tpu.memory_space<vmem>>, %arg18: memref<8x8x128xf32, #tpu.memory_space<vmem>>, %arg19: memref<8x8x512xf32, #tpu.memory_space<vmem>>) attributes {dimension_semantics = [#tpu.dimension_semantics<parallel>, #tpu.dimension_semantics<arbitrary>], iteration_bounds = array<i64: 1, 2>, scalar_prefetch = 0 : i64, scratch_operands = 4 : i64, tpu.core_type = #tpu.core_type<tc>, window_params = [{transform_indices = @transform_0, window_bounds = array<i64: 8, 1>}, {transform_indices = @transform_1, window_bounds = array<i64: 8, 8, 64>}, {pipeline_mode = #tpu.pipeline_mode<synchronous>, transform_indices = @transform_2, window_bounds = array<i64: 64, 512>}, {pipeline_mode = #tpu.pipeline_mode<synchronous>, transform_indices = @transform_3, window_bounds = array<i64: 1, 512>}, {pipeline_mode = #tpu.pipeline_mode<synchronous>, transform_indices = @transform_4, window_bounds = array<i64: 1, 128, 512>}, {pipeline_mode = #tpu.pipeline_mode<synchronous>, transform_indices = @transform_5, window_bounds = array<i64: 1, 1, 512>}, {pipeline_mode = #tpu.pipeline_mode<synchronous>, transform_indices = @transform_6, window_bounds = array<i64: 2, 128, 512>}, {transform_indices = @transform_7, window_bounds = array<i64: 2, 8, 128>}, {transform_indices = @transform_8, window_bounds = array<i64: 2, 8, 128>}, {pipeline_mode = #tpu.pipeline_mode<synchronous>, transform_indices = @transform_9, window_bounds = array<i64: 128, 128>}, {pipeline_mode = #tpu.pipeline_mode<synchronous>, transform_indices = @transform_10, window_bounds = array<i64: 1, 128>}, {transform_indices = @transform_11, window_bounds = array<i64: 8, 128>}, {transform_indices = @transform_12, window_bounds = array<i64: 2, 8, 128>}, {transform_indices = @transform_13, window_bounds = array<i64: 2, 8, 128>}]} {
    %c0_i32 = arith.constant 0 : i32
    %0 = arith.cmpi eq, %arg1, %c0_i32 : i32
    %1 = arith.extui %0 : i1 to i32
    %c0_i32_0 = arith.constant 0 : i32
    %2 = arith.cmpi ne, %1, %c0_i32_0 : i32
    scf.if %2 {
      %c0_195 = arith.constant 0 : index
      %c0_196 = arith.constant 0 : index
      %c0_197 = arith.constant 0 : index
      %757 = vector.load %arg9[%c0_195, %c0_196, %c0_197] : memref<2x8x128xf32, #tpu.memory_space<vmem>>, vector<2x8x128xf32>
      %c0_198 = arith.constant 0 : index
      %c0_199 = arith.constant 0 : index
      %c0_200 = arith.constant 0 : index
      %758 = vector.load %arg16[%c0_198, %c0_199, %c0_200] : memref<2x8x128xf32, #tpu.memory_space<vmem>>, vector<2x8x128xf32>
      tpu.vector_store %arg16[%c0_198, %c0_199, %c0_200], %757 {strides = array<i32>} : memref<2x8x128xf32, #tpu.memory_space<vmem>>, vector<2x8x128xf32>,
      %c0_201 = arith.constant 0 : index
      %c0_202 = arith.constant 0 : index
      %c0_203 = arith.constant 0 : index
      %759 = vector.load %arg10[%c0_201, %c0_202, %c0_203] : memref<2x8x128xf32, #tpu.memory_space<vmem>>, vector<2x8x128xf32>
      %c0_204 = arith.constant 0 : index
      %c0_205 = arith.constant 0 : index
      %c0_206 = arith.constant 0 : index
      %760 = vector.load %arg17[%c0_204, %c0_205, %c0_206] : memref<2x8x128xf32, #tpu.memory_space<vmem>>, vector<2x8x128xf32>
      tpu.vector_store %arg17[%c0_204, %c0_205, %c0_206], %759 {strides = array<i32>} : memref<2x8x128xf32, #tpu.memory_space<vmem>>, vector<2x8x128xf32>,
    } else {
    }
    %c0 = arith.constant 0 : index
    %c0_1 = arith.constant 0 : index
    %3 = vector.load %arg2[%c0, %c0_1] : memref<8x1xi32, #tpu.memory_space<vmem>>, vector<8x1xi32>
    %c8_i32 = arith.constant 8 : i32
    %4 = arith.muli %arg1, %c8_i32 : i32
    %c0_2 = arith.constant 0 : index
    %c0_3 = arith.constant 0 : index
    %c0_4 = arith.constant 0 : index
    %5 = vector.load %arg3[%c0_2, %c0_3, %c0_4] : memref<8x8x64xbf16, #tpu.memory_space<vmem>>, vector<8x8x64xbf16>
    %6 = vector.shape_cast %5 : vector<8x8x64xbf16> to vector<64x64xbf16>
    %c0_5 = arith.constant 0 : index
    %c0_6 = arith.constant 0 : index
    %7 = vector.load %arg4[%c0_5, %c0_6] : memref<64x512xbf16, #tpu.memory_space<vmem>>, vector<64x512xbf16>
    %cst = arith.constant dense<0.000000e+00> : vector<64x512xf32>
    %8 = tpu.matmul %6, %7, %cst {dimension_numbers = #tpu.dot_dimension_numbers<[1], [0], [0], [1], [0, 0, 1, 1], [], []>} : vector<64x64xbf16>, vector<64x512xbf16>, vector<64x512xf32> -> vector<64x512xf32>
    %c0_7 = arith.constant 0 : index
    %c0_8 = arith.constant 0 : index
    %9 = vector.load %arg5[%c0_7, %c0_8] : memref<1x512xf32, #tpu.memory_space<vmem>>, vector<1x512xf32>
    %10 = vector.broadcast %9 : vector<1x512xf32> to vector<64x512xf32>
    %11 = arith.addf %8, %10 : vector<64x512xf32>
    %12 = vector.shape_cast %11 : vector<64x512xf32> to vector<8x8x512xf32>
    %c0_9 = arith.constant 0 : index
    %c0_10 = arith.constant 0 : index
    %c0_11 = arith.constant 0 : index
    %13 = vector.load %arg19[%c0_9, %c0_10, %c0_11] : memref<8x8x512xf32, #tpu.memory_space<vmem>>, vector<8x8x512xf32>
    tpu.vector_store %arg19[%c0_9, %c0_10, %c0_11], %12 {strides = array<i32>} : memref<8x8x512xf32, #tpu.memory_space<vmem>>, vector<8x8x512xf32>,
    %c0_12 = arith.constant 0 : index
    %c0_13 = arith.constant 0 : index
    %c0_14 = arith.constant 0 : index
    %14 = vector.load %arg8[%c0_12, %c0_13, %c0_14] : memref<2x128x512xbf16, #tpu.memory_space<vmem>>, vector<1x128x512xbf16>
    %15 = vector.shape_cast %14 : vector<1x128x512xbf16> to vector<128x512xbf16>
    %c0_15 = arith.constant 0 : index
    %c0_16 = arith.constant 0 : index
    %c0_17 = arith.constant 0 : index
    %16 = vector.load %arg16[%c0_15, %c0_16, %c0_17] : memref<2x8x128xf32, #tpu.memory_space<vmem>>, vector<1x8x128xf32>
    %17 = vector.shape_cast %16 : vector<1x8x128xf32> to vector<8x128xf32>
    %c0_18 = arith.constant 0 : index
    %c0_19 = arith.constant 0 : index
    %c0_20 = arith.constant 0 : index
    %18 = vector.load %arg17[%c0_18, %c0_19, %c0_20] : memref<2x8x128xf32, #tpu.memory_space<vmem>>, vector<1x8x128xf32>
    %19 = vector.shape_cast %18 : vector<1x8x128xf32> to vector<8x128xf32>
    %c0_i32_21 = arith.constant 0 : i32
    %20 = arith.index_cast %c0_i32_21 : i32 to index
    %c0_22 = arith.constant 0 : index
    %c0_23 = arith.constant 0 : index
    %21 = vector.load %arg19[%20, %c0_22, %c0_23] : memref<8x8x512xf32, #tpu.memory_space<vmem>>, vector<1x8x512xf32>
    %22 = vector.shape_cast %21 : vector<1x8x512xf32> to vector<8x512xf32>
    %23 = arith.truncf %17 : vector<8x128xf32> to vector<8x128xbf16>
    %cst_24 = arith.constant dense<0.000000e+00> : vector<8x512xf32>
    %24 = tpu.matmul %23, %15, %cst_24 {dimension_numbers = #tpu.dot_dimension_numbers<[1], [0], [0], [1], [0, 0, 1, 1], [], []>} : vector<8x128xbf16>, vector<128x512xbf16>, vector<8x512xf32> -> vector<8x512xf32>
    %25 = arith.addf %22, %24 : vector<8x512xf32>
    %26 = vector.extract_strided_slice %25 {offsets = [0, 0], sizes = [8, 128], strides = [1, 1]} : vector<8x512xf32> to vector<8x128xf32>
    %27 = arith.negf %26 : vector<8x128xf32>
    %28 = math.exp %27 : vector<8x128xf32>
    %cst_25 = arith.constant 1.000000e+00 : f32
    %29 = vector.broadcast %cst_25 : f32 to vector<8x128xf32>
    %30 = arith.addf %29, %28 : vector<8x128xf32>
    %31 = arith.divf %29, %30 : vector<8x128xf32>
    %32 = vector.extract_strided_slice %25 {offsets = [0, 128], sizes = [8, 128], strides = [1, 1]} : vector<8x512xf32> to vector<8x128xf32>
    %33 = arith.negf %32 : vector<8x128xf32>
    %34 = math.exp %33 : vector<8x128xf32>
    %cst_26 = arith.constant 1.000000e+00 : f32
    %35 = vector.broadcast %cst_26 : f32 to vector<8x128xf32>
    %36 = arith.addf %35, %34 : vector<8x128xf32>
    %37 = arith.divf %35, %36 : vector<8x128xf32>
    %38 = vector.extract_strided_slice %25 {offsets = [0, 256], sizes = [8, 128], strides = [1, 1]} : vector<8x512xf32> to vector<8x128xf32>
    %39 = math.tanh %38 : vector<8x128xf32>
    %40 = vector.extract_strided_slice %25 {offsets = [0, 384], sizes = [8, 128], strides = [1, 1]} : vector<8x512xf32> to vector<8x128xf32>
    %41 = arith.negf %40 : vector<8x128xf32>
    %42 = math.exp %41 : vector<8x128xf32>
    %cst_27 = arith.constant 1.000000e+00 : f32
    %43 = vector.broadcast %cst_27 : f32 to vector<8x128xf32>
    %44 = arith.addf %43, %42 : vector<8x128xf32>
    %45 = arith.divf %43, %44 : vector<8x128xf32>
    %46 = arith.mulf %37, %19 : vector<8x128xf32>
    %47 = arith.mulf %31, %39 : vector<8x128xf32>
    %48 = arith.addf %46, %47 : vector<8x128xf32>
    %49 = math.tanh %48 : vector<8x128xf32>
    %50 = arith.mulf %45, %49 : vector<8x128xf32>
    %51 = arith.addi %4, %c0_i32_21 : i32
    %52 = vector.broadcast %51 : i32 to vector<8x1xi32>
    %53 = arith.cmpi sgt, %3, %52 : vector<8x1xi32>
    %54 = vector.shape_cast %53 : vector<8x1xi1> to vector<8x1xi1>
    %55 = vector.broadcast %54 : vector<8x1xi1> to vector<8x128xi1>
    %56 = arith.select %55, %50, %17 : vector<8x128xi1>, vector<8x128xf32>
    %57 = vector.shape_cast %53 : vector<8x1xi1> to vector<8x1xi1>
    %58 = vector.broadcast %57 : vector<8x1xi1> to vector<8x128xi1>
    %59 = arith.select %58, %48, %19 : vector<8x128xi1>, vector<8x128xf32>
    %60 = arith.index_cast %c0_i32_21 : i32 to index
    %c0_28 = arith.constant 0 : index
    %c0_29 = arith.constant 0 : index
    %61 = vector.load %arg18[%60, %c0_28, %c0_29] : memref<8x8x128xf32, #tpu.memory_space<vmem>>, vector<1x8x128xf32>
    %62 = vector.shape_cast %61 : vector<1x8x128xf32> to vector<8x128xf32>
    %63 = vector.shape_cast %56 : vector<8x128xf32> to vector<1x8x128xf32>
    tpu.vector_store %arg18[%60, %c0_28, %c0_29], %63 {strides = array<i32>} : memref<8x8x128xf32, #tpu.memory_space<vmem>>, vector<1x8x128xf32>,
    %c1_i32 = arith.constant 1 : i32
    %64 = arith.index_cast %c1_i32 : i32 to index
    %c0_30 = arith.constant 0 : index
    %c0_31 = arith.constant 0 : index
    %65 = vector.load %arg19[%64, %c0_30, %c0_31] : memref<8x8x512xf32, #tpu.memory_space<vmem>>, vector<1x8x512xf32>
    %66 = vector.shape_cast %65 : vector<1x8x512xf32> to vector<8x512xf32>
    %67 = arith.truncf %56 : vector<8x128xf32> to vector<8x128xbf16>
    %cst_32 = arith.constant dense<0.000000e+00> : vector<8x512xf32>
    %68 = tpu.matmul %67, %15, %cst_32 {dimension_numbers = #tpu.dot_dimension_numbers<[1], [0], [0], [1], [0, 0, 1, 1], [], []>} : vector<8x128xbf16>, vector<128x512xbf16>, vector<8x512xf32> -> vector<8x512xf32>
    %69 = arith.addf %66, %68 : vector<8x512xf32>
    %70 = vector.extract_strided_slice %69 {offsets = [0, 0], sizes = [8, 128], strides = [1, 1]} : vector<8x512xf32> to vector<8x128xf32>
    %71 = arith.negf %70 : vector<8x128xf32>
    %72 = math.exp %71 : vector<8x128xf32>
    %cst_33 = arith.constant 1.000000e+00 : f32
    %73 = vector.broadcast %cst_33 : f32 to vector<8x128xf32>
    %74 = arith.addf %73, %72 : vector<8x128xf32>
    %75 = arith.divf %73, %74 : vector<8x128xf32>
    %76 = vector.extract_strided_slice %69 {offsets = [0, 128], sizes = [8, 128], strides = [1, 1]} : vector<8x512xf32> to vector<8x128xf32>
    %77 = arith.negf %76 : vector<8x128xf32>
    %78 = math.exp %77 : vector<8x128xf32>
    %cst_34 = arith.constant 1.000000e+00 : f32
    %79 = vector.broadcast %cst_34 : f32 to vector<8x128xf32>
    %80 = arith.addf %79, %78 : vector<8x128xf32>
    %81 = arith.divf %79, %80 : vector<8x128xf32>
    %82 = vector.extract_strided_slice %69 {offsets = [0, 256], sizes = [8, 128], strides = [1, 1]} : vector<8x512xf32> to vector<8x128xf32>
    %83 = math.tanh %82 : vector<8x128xf32>
    %84 = vector.extract_strided_slice %69 {offsets = [0, 384], sizes = [8, 128], strides = [1, 1]} : vector<8x512xf32> to vector<8x128xf32>
    %85 = arith.negf %84 : vector<8x128xf32>
    %86 = math.exp %85 : vector<8x128xf32>
    %cst_35 = arith.constant 1.000000e+00 : f32
    %87 = vector.broadcast %cst_35 : f32 to vector<8x128xf32>
    %88 = arith.addf %87, %86 : vector<8x128xf32>
    %89 = arith.divf %87, %88 : vector<8x128xf32>
    %90 = arith.mulf %81, %59 : vector<8x128xf32>
    %91 = arith.mulf %75, %83 : vector<8x128xf32>
    %92 = arith.addf %90, %91 : vector<8x128xf32>
    %93 = math.tanh %92 : vector<8x128xf32>
    %94 = arith.mulf %89, %93 : vector<8x128xf32>
    %95 = arith.addi %4, %c1_i32 : i32
    %96 = vector.broadcast %95 : i32 to vector<8x1xi32>
    %97 = arith.cmpi sgt, %3, %96 : vector<8x1xi32>
    %98 = vector.shape_cast %97 : vector<8x1xi1> to vector<8x1xi1>
    %99 = vector.broadcast %98 : vector<8x1xi1> to vector<8x128xi1>
    %100 = arith.select %99, %94, %56 : vector<8x128xi1>, vector<8x128xf32>
    %101 = vector.shape_cast %97 : vector<8x1xi1> to vector<8x1xi1>
    %102 = vector.broadcast %101 : vector<8x1xi1> to vector<8x128xi1>
    %103 = arith.select %102, %92, %59 : vector<8x128xi1>, vector<8x128xf32>
    %104 = arith.index_cast %c1_i32 : i32 to index
    %c0_36 = arith.constant 0 : index
    %c0_37 = arith.constant 0 : index
    %105 = vector.load %arg18[%104, %c0_36, %c0_37] : memref<8x8x128xf32, #tpu.memory_space<vmem>>, vector<1x8x128xf32>
    %106 = vector.shape_cast %105 : vector<1x8x128xf32> to vector<8x128xf32>
    %107 = vector.shape_cast %100 : vector<8x128xf32> to vector<1x8x128xf32>
    tpu.vector_store %arg18[%104, %c0_36, %c0_37], %107 {strides = array<i32>} : memref<8x8x128xf32, #tpu.memory_space<vmem>>, vector<1x8x128xf32>,
    %c2_i32 = arith.constant 2 : i32
    %108 = arith.index_cast %c2_i32 : i32 to index
    %c0_38 = arith.constant 0 : index
    %c0_39 = arith.constant 0 : index
    %109 = vector.load %arg19[%108, %c0_38, %c0_39] : memref<8x8x512xf32, #tpu.memory_space<vmem>>, vector<1x8x512xf32>
    %110 = vector.shape_cast %109 : vector<1x8x512xf32> to vector<8x512xf32>
    %111 = arith.truncf %100 : vector<8x128xf32> to vector<8x128xbf16>
    %cst_40 = arith.constant dense<0.000000e+00> : vector<8x512xf32>
    %112 = tpu.matmul %111, %15, %cst_40 {dimension_numbers = #tpu.dot_dimension_numbers<[1], [0], [0], [1], [0, 0, 1, 1], [], []>} : vector<8x128xbf16>, vector<128x512xbf16>, vector<8x512xf32> -> vector<8x512xf32>
    %113 = arith.addf %110, %112 : vector<8x512xf32>
    %114 = vector.extract_strided_slice %113 {offsets = [0, 0], sizes = [8, 128], strides = [1, 1]} : vector<8x512xf32> to vector<8x128xf32>
    %115 = arith.negf %114 : vector<8x128xf32>
    %116 = math.exp %115 : vector<8x128xf32>
    %cst_41 = arith.constant 1.000000e+00 : f32
    %117 = vector.broadcast %cst_41 : f32 to vector<8x128xf32>
    %118 = arith.addf %117, %116 : vector<8x128xf32>
    %119 = arith.divf %117, %118 : vector<8x128xf32>
    %120 = vector.extract_strided_slice %113 {offsets = [0, 128], sizes = [8, 128], strides = [1, 1]} : vector<8x512xf32> to vector<8x128xf32>
    %121 = arith.negf %120 : vector<8x128xf32>
    %122 = math.exp %121 : vector<8x128xf32>
    %cst_42 = arith.constant 1.000000e+00 : f32
    %123 = vector.broadcast %cst_42 : f32 to vector<8x128xf32>
    %124 = arith.addf %123, %122 : vector<8x128xf32>
    %125 = arith.divf %123, %124 : vector<8x128xf32>
    %126 = vector.extract_strided_slice %113 {offsets = [0, 256], sizes = [8, 128], strides = [1, 1]} : vector<8x512xf32> to vector<8x128xf32>
    %127 = math.tanh %126 : vector<8x128xf32>
    %128 = vector.extract_strided_slice %113 {offsets = [0, 384], sizes = [8, 128], strides = [1, 1]} : vector<8x512xf32> to vector<8x128xf32>
    %129 = arith.negf %128 : vector<8x128xf32>
    %130 = math.exp %129 : vector<8x128xf32>
    %cst_43 = arith.constant 1.000000e+00 : f32
    %131 = vector.broadcast %cst_43 : f32 to vector<8x128xf32>
    %132 = arith.addf %131, %130 : vector<8x128xf32>
    %133 = arith.divf %131, %132 : vector<8x128xf32>
    %134 = arith.mulf %125, %103 : vector<8x128xf32>
    %135 = arith.mulf %119, %127 : vector<8x128xf32>
    %136 = arith.addf %134, %135 : vector<8x128xf32>
    %137 = math.tanh %136 : vector<8x128xf32>
    %138 = arith.mulf %133, %137 : vector<8x128xf32>
    %139 = arith.addi %4, %c2_i32 : i32
    %140 = vector.broadcast %139 : i32 to vector<8x1xi32>
    %141 = arith.cmpi sgt, %3, %140 : vector<8x1xi32>
    %142 = vector.shape_cast %141 : vector<8x1xi1> to vector<8x1xi1>
    %143 = vector.broadcast %142 : vector<8x1xi1> to vector<8x128xi1>
    %144 = arith.select %143, %138, %100 : vector<8x128xi1>, vector<8x128xf32>
    %145 = vector.shape_cast %141 : vector<8x1xi1> to vector<8x1xi1>
    %146 = vector.broadcast %145 : vector<8x1xi1> to vector<8x128xi1>
    %147 = arith.select %146, %136, %103 : vector<8x128xi1>, vector<8x128xf32>
    %148 = arith.index_cast %c2_i32 : i32 to index
    %c0_44 = arith.constant 0 : index
    %c0_45 = arith.constant 0 : index
    %149 = vector.load %arg18[%148, %c0_44, %c0_45] : memref<8x8x128xf32, #tpu.memory_space<vmem>>, vector<1x8x128xf32>
    %150 = vector.shape_cast %149 : vector<1x8x128xf32> to vector<8x128xf32>
    %151 = vector.shape_cast %144 : vector<8x128xf32> to vector<1x8x128xf32>
    tpu.vector_store %arg18[%148, %c0_44, %c0_45], %151 {strides = array<i32>} : memref<8x8x128xf32, #tpu.memory_space<vmem>>, vector<1x8x128xf32>,
    %c3_i32 = arith.constant 3 : i32
    %152 = arith.index_cast %c3_i32 : i32 to index
    %c0_46 = arith.constant 0 : index
    %c0_47 = arith.constant 0 : index
    %153 = vector.load %arg19[%152, %c0_46, %c0_47] : memref<8x8x512xf32, #tpu.memory_space<vmem>>, vector<1x8x512xf32>
    %154 = vector.shape_cast %153 : vector<1x8x512xf32> to vector<8x512xf32>
    %155 = arith.truncf %144 : vector<8x128xf32> to vector<8x128xbf16>
    %cst_48 = arith.constant dense<0.000000e+00> : vector<8x512xf32>
    %156 = tpu.matmul %155, %15, %cst_48 {dimension_numbers = #tpu.dot_dimension_numbers<[1], [0], [0], [1], [0, 0, 1, 1], [], []>} : vector<8x128xbf16>, vector<128x512xbf16>, vector<8x512xf32> -> vector<8x512xf32>
    %157 = arith.addf %154, %156 : vector<8x512xf32>
    %158 = vector.extract_strided_slice %157 {offsets = [0, 0], sizes = [8, 128], strides = [1, 1]} : vector<8x512xf32> to vector<8x128xf32>
    %159 = arith.negf %158 : vector<8x128xf32>
    %160 = math.exp %159 : vector<8x128xf32>
    %cst_49 = arith.constant 1.000000e+00 : f32
    %161 = vector.broadcast %cst_49 : f32 to vector<8x128xf32>
    %162 = arith.addf %161, %160 : vector<8x128xf32>
    %163 = arith.divf %161, %162 : vector<8x128xf32>
    %164 = vector.extract_strided_slice %157 {offsets = [0, 128], sizes = [8, 128], strides = [1, 1]} : vector<8x512xf32> to vector<8x128xf32>
    %165 = arith.negf %164 : vector<8x128xf32>
    %166 = math.exp %165 : vector<8x128xf32>
    %cst_50 = arith.constant 1.000000e+00 : f32
    %167 = vector.broadcast %cst_50 : f32 to vector<8x128xf32>
    %168 = arith.addf %167, %166 : vector<8x128xf32>
    %169 = arith.divf %167, %168 : vector<8x128xf32>
    %170 = vector.extract_strided_slice %157 {offsets = [0, 256], sizes = [8, 128], strides = [1, 1]} : vector<8x512xf32> to vector<8x128xf32>
    %171 = math.tanh %170 : vector<8x128xf32>
    %172 = vector.extract_strided_slice %157 {offsets = [0, 384], sizes = [8, 128], strides = [1, 1]} : vector<8x512xf32> to vector<8x128xf32>
    %173 = arith.negf %172 : vector<8x128xf32>
    %174 = math.exp %173 : vector<8x128xf32>
    %cst_51 = arith.constant 1.000000e+00 : f32
    %175 = vector.broadcast %cst_51 : f32 to vector<8x128xf32>
    %176 = arith.addf %175, %174 : vector<8x128xf32>
    %177 = arith.divf %175, %176 : vector<8x128xf32>
    %178 = arith.mulf %169, %147 : vector<8x128xf32>
    %179 = arith.mulf %163, %171 : vector<8x128xf32>
    %180 = arith.addf %178, %179 : vector<8x128xf32>
    %181 = math.tanh %180 : vector<8x128xf32>
    %182 = arith.mulf %177, %181 : vector<8x128xf32>
    %183 = arith.addi %4, %c3_i32 : i32
    %184 = vector.broadcast %183 : i32 to vector<8x1xi32>
    %185 = arith.cmpi sgt, %3, %184 : vector<8x1xi32>
    %186 = vector.shape_cast %185 : vector<8x1xi1> to vector<8x1xi1>
    %187 = vector.broadcast %186 : vector<8x1xi1> to vector<8x128xi1>
    %188 = arith.select %187, %182, %144 : vector<8x128xi1>, vector<8x128xf32>
    %189 = vector.shape_cast %185 : vector<8x1xi1> to vector<8x1xi1>
    %190 = vector.broadcast %189 : vector<8x1xi1> to vector<8x128xi1>
    %191 = arith.select %190, %180, %147 : vector<8x128xi1>, vector<8x128xf32>
    %192 = arith.index_cast %c3_i32 : i32 to index
    %c0_52 = arith.constant 0 : index
    %c0_53 = arith.constant 0 : index
    %193 = vector.load %arg18[%192, %c0_52, %c0_53] : memref<8x8x128xf32, #tpu.memory_space<vmem>>, vector<1x8x128xf32>
    %194 = vector.shape_cast %193 : vector<1x8x128xf32> to vector<8x128xf32>
    %195 = vector.shape_cast %188 : vector<8x128xf32> to vector<1x8x128xf32>
    tpu.vector_store %arg18[%192, %c0_52, %c0_53], %195 {strides = array<i32>} : memref<8x8x128xf32, #tpu.memory_space<vmem>>, vector<1x8x128xf32>,
    %c4_i32 = arith.constant 4 : i32
    %196 = arith.index_cast %c4_i32 : i32 to index
    %c0_54 = arith.constant 0 : index
    %c0_55 = arith.constant 0 : index
    %197 = vector.load %arg19[%196, %c0_54, %c0_55] : memref<8x8x512xf32, #tpu.memory_space<vmem>>, vector<1x8x512xf32>
    %198 = vector.shape_cast %197 : vector<1x8x512xf32> to vector<8x512xf32>
    %199 = arith.truncf %188 : vector<8x128xf32> to vector<8x128xbf16>
    %cst_56 = arith.constant dense<0.000000e+00> : vector<8x512xf32>
    %200 = tpu.matmul %199, %15, %cst_56 {dimension_numbers = #tpu.dot_dimension_numbers<[1], [0], [0], [1], [0, 0, 1, 1], [], []>} : vector<8x128xbf16>, vector<128x512xbf16>, vector<8x512xf32> -> vector<8x512xf32>
    %201 = arith.addf %198, %200 : vector<8x512xf32>
    %202 = vector.extract_strided_slice %201 {offsets = [0, 0], sizes = [8, 128], strides = [1, 1]} : vector<8x512xf32> to vector<8x128xf32>
    %203 = arith.negf %202 : vector<8x128xf32>
    %204 = math.exp %203 : vector<8x128xf32>
    %cst_57 = arith.constant 1.000000e+00 : f32
    %205 = vector.broadcast %cst_57 : f32 to vector<8x128xf32>
    %206 = arith.addf %205, %204 : vector<8x128xf32>
    %207 = arith.divf %205, %206 : vector<8x128xf32>
    %208 = vector.extract_strided_slice %201 {offsets = [0, 128], sizes = [8, 128], strides = [1, 1]} : vector<8x512xf32> to vector<8x128xf32>
    %209 = arith.negf %208 : vector<8x128xf32>
    %210 = math.exp %209 : vector<8x128xf32>
    %cst_58 = arith.constant 1.000000e+00 : f32
    %211 = vector.broadcast %cst_58 : f32 to vector<8x128xf32>
    %212 = arith.addf %211, %210 : vector<8x128xf32>
    %213 = arith.divf %211, %212 : vector<8x128xf32>
    %214 = vector.extract_strided_slice %201 {offsets = [0, 256], sizes = [8, 128], strides = [1, 1]} : vector<8x512xf32> to vector<8x128xf32>
    %215 = math.tanh %214 : vector<8x128xf32>
    %216 = vector.extract_strided_slice %201 {offsets = [0, 384], sizes = [8, 128], strides = [1, 1]} : vector<8x512xf32> to vector<8x128xf32>
    %217 = arith.negf %216 : vector<8x128xf32>
    %218 = math.exp %217 : vector<8x128xf32>
    %cst_59 = arith.constant 1.000000e+00 : f32
    %219 = vector.broadcast %cst_59 : f32 to vector<8x128xf32>
    %220 = arith.addf %219, %218 : vector<8x128xf32>
    %221 = arith.divf %219, %220 : vector<8x128xf32>
    %222 = arith.mulf %213, %191 : vector<8x128xf32>
    %223 = arith.mulf %207, %215 : vector<8x128xf32>
    %224 = arith.addf %222, %223 : vector<8x128xf32>
    %225 = math.tanh %224 : vector<8x128xf32>
    %226 = arith.mulf %221, %225 : vector<8x128xf32>
    %227 = arith.addi %4, %c4_i32 : i32
    %228 = vector.broadcast %227 : i32 to vector<8x1xi32>
    %229 = arith.cmpi sgt, %3, %228 : vector<8x1xi32>
    %230 = vector.shape_cast %229 : vector<8x1xi1> to vector<8x1xi1>
    %231 = vector.broadcast %230 : vector<8x1xi1> to vector<8x128xi1>
    %232 = arith.select %231, %226, %188 : vector<8x128xi1>, vector<8x128xf32>
    %233 = vector.shape_cast %229 : vector<8x1xi1> to vector<8x1xi1>
    %234 = vector.broadcast %233 : vector<8x1xi1> to vector<8x128xi1>
    %235 = arith.select %234, %224, %191 : vector<8x128xi1>, vector<8x128xf32>
    %236 = arith.index_cast %c4_i32 : i32 to index
    %c0_60 = arith.constant 0 : index
    %c0_61 = arith.constant 0 : index
    %237 = vector.load %arg18[%236, %c0_60, %c0_61] : memref<8x8x128xf32, #tpu.memory_space<vmem>>, vector<1x8x128xf32>
    %238 = vector.shape_cast %237 : vector<1x8x128xf32> to vector<8x128xf32>
    %239 = vector.shape_cast %232 : vector<8x128xf32> to vector<1x8x128xf32>
    tpu.vector_store %arg18[%236, %c0_60, %c0_61], %239 {strides = array<i32>} : memref<8x8x128xf32, #tpu.memory_space<vmem>>, vector<1x8x128xf32>,
    %c5_i32 = arith.constant 5 : i32
    %240 = arith.index_cast %c5_i32 : i32 to index
    %c0_62 = arith.constant 0 : index
    %c0_63 = arith.constant 0 : index
    %241 = vector.load %arg19[%240, %c0_62, %c0_63] : memref<8x8x512xf32, #tpu.memory_space<vmem>>, vector<1x8x512xf32>
    %242 = vector.shape_cast %241 : vector<1x8x512xf32> to vector<8x512xf32>
    %243 = arith.truncf %232 : vector<8x128xf32> to vector<8x128xbf16>
    %cst_64 = arith.constant dense<0.000000e+00> : vector<8x512xf32>
    %244 = tpu.matmul %243, %15, %cst_64 {dimension_numbers = #tpu.dot_dimension_numbers<[1], [0], [0], [1], [0, 0, 1, 1], [], []>} : vector<8x128xbf16>, vector<128x512xbf16>, vector<8x512xf32> -> vector<8x512xf32>
    %245 = arith.addf %242, %244 : vector<8x512xf32>
    %246 = vector.extract_strided_slice %245 {offsets = [0, 0], sizes = [8, 128], strides = [1, 1]} : vector<8x512xf32> to vector<8x128xf32>
    %247 = arith.negf %246 : vector<8x128xf32>
    %248 = math.exp %247 : vector<8x128xf32>
    %cst_65 = arith.constant 1.000000e+00 : f32
    %249 = vector.broadcast %cst_65 : f32 to vector<8x128xf32>
    %250 = arith.addf %249, %248 : vector<8x128xf32>
    %251 = arith.divf %249, %250 : vector<8x128xf32>
    %252 = vector.extract_strided_slice %245 {offsets = [0, 128], sizes = [8, 128], strides = [1, 1]} : vector<8x512xf32> to vector<8x128xf32>
    %253 = arith.negf %252 : vector<8x128xf32>
    %254 = math.exp %253 : vector<8x128xf32>
    %cst_66 = arith.constant 1.000000e+00 : f32
    %255 = vector.broadcast %cst_66 : f32 to vector<8x128xf32>
    %256 = arith.addf %255, %254 : vector<8x128xf32>
    %257 = arith.divf %255, %256 : vector<8x128xf32>
    %258 = vector.extract_strided_slice %245 {offsets = [0, 256], sizes = [8, 128], strides = [1, 1]} : vector<8x512xf32> to vector<8x128xf32>
    %259 = math.tanh %258 : vector<8x128xf32>
    %260 = vector.extract_strided_slice %245 {offsets = [0, 384], sizes = [8, 128], strides = [1, 1]} : vector<8x512xf32> to vector<8x128xf32>
    %261 = arith.negf %260 : vector<8x128xf32>
    %262 = math.exp %261 : vector<8x128xf32>
    %cst_67 = arith.constant 1.000000e+00 : f32
    %263 = vector.broadcast %cst_67 : f32 to vector<8x128xf32>
    %264 = arith.addf %263, %262 : vector<8x128xf32>
    %265 = arith.divf %263, %264 : vector<8x128xf32>
    %266 = arith.mulf %257, %235 : vector<8x128xf32>
    %267 = arith.mulf %251, %259 : vector<8x128xf32>
    %268 = arith.addf %266, %267 : vector<8x128xf32>
    %269 = math.tanh %268 : vector<8x128xf32>
    %270 = arith.mulf %265, %269 : vector<8x128xf32>
    %271 = arith.addi %4, %c5_i32 : i32
    %272 = vector.broadcast %271 : i32 to vector<8x1xi32>
    %273 = arith.cmpi sgt, %3, %272 : vector<8x1xi32>
    %274 = vector.shape_cast %273 : vector<8x1xi1> to vector<8x1xi1>
    %275 = vector.broadcast %274 : vector<8x1xi1> to vector<8x128xi1>
    %276 = arith.select %275, %270, %232 : vector<8x128xi1>, vector<8x128xf32>
    %277 = vector.shape_cast %273 : vector<8x1xi1> to vector<8x1xi1>
    %278 = vector.broadcast %277 : vector<8x1xi1> to vector<8x128xi1>
    %279 = arith.select %278, %268, %235 : vector<8x128xi1>, vector<8x128xf32>
    %280 = arith.index_cast %c5_i32 : i32 to index
    %c0_68 = arith.constant 0 : index
    %c0_69 = arith.constant 0 : index
    %281 = vector.load %arg18[%280, %c0_68, %c0_69] : memref<8x8x128xf32, #tpu.memory_space<vmem>>, vector<1x8x128xf32>
    %282 = vector.shape_cast %281 : vector<1x8x128xf32> to vector<8x128xf32>
    %283 = vector.shape_cast %276 : vector<8x128xf32> to vector<1x8x128xf32>
    tpu.vector_store %arg18[%280, %c0_68, %c0_69], %283 {strides = array<i32>} : memref<8x8x128xf32, #tpu.memory_space<vmem>>, vector<1x8x128xf32>,
    %c6_i32 = arith.constant 6 : i32
    %284 = arith.index_cast %c6_i32 : i32 to index
    %c0_70 = arith.constant 0 : index
    %c0_71 = arith.constant 0 : index
    %285 = vector.load %arg19[%284, %c0_70, %c0_71] : memref<8x8x512xf32, #tpu.memory_space<vmem>>, vector<1x8x512xf32>
    %286 = vector.shape_cast %285 : vector<1x8x512xf32> to vector<8x512xf32>
    %287 = arith.truncf %276 : vector<8x128xf32> to vector<8x128xbf16>
    %cst_72 = arith.constant dense<0.000000e+00> : vector<8x512xf32>
    %288 = tpu.matmul %287, %15, %cst_72 {dimension_numbers = #tpu.dot_dimension_numbers<[1], [0], [0], [1], [0, 0, 1, 1], [], []>} : vector<8x128xbf16>, vector<128x512xbf16>, vector<8x512xf32> -> vector<8x512xf32>
    %289 = arith.addf %286, %288 : vector<8x512xf32>
    %290 = vector.extract_strided_slice %289 {offsets = [0, 0], sizes = [8, 128], strides = [1, 1]} : vector<8x512xf32> to vector<8x128xf32>
    %291 = arith.negf %290 : vector<8x128xf32>
    %292 = math.exp %291 : vector<8x128xf32>
    %cst_73 = arith.constant 1.000000e+00 : f32
    %293 = vector.broadcast %cst_73 : f32 to vector<8x128xf32>
    %294 = arith.addf %293, %292 : vector<8x128xf32>
    %295 = arith.divf %293, %294 : vector<8x128xf32>
    %296 = vector.extract_strided_slice %289 {offsets = [0, 128], sizes = [8, 128], strides = [1, 1]} : vector<8x512xf32> to vector<8x128xf32>
    %297 = arith.negf %296 : vector<8x128xf32>
    %298 = math.exp %297 : vector<8x128xf32>
    %cst_74 = arith.constant 1.000000e+00 : f32
    %299 = vector.broadcast %cst_74 : f32 to vector<8x128xf32>
    %300 = arith.addf %299, %298 : vector<8x128xf32>
    %301 = arith.divf %299, %300 : vector<8x128xf32>
    %302 = vector.extract_strided_slice %289 {offsets = [0, 256], sizes = [8, 128], strides = [1, 1]} : vector<8x512xf32> to vector<8x128xf32>
    %303 = math.tanh %302 : vector<8x128xf32>
    %304 = vector.extract_strided_slice %289 {offsets = [0, 384], sizes = [8, 128], strides = [1, 1]} : vector<8x512xf32> to vector<8x128xf32>
    %305 = arith.negf %304 : vector<8x128xf32>
    %306 = math.exp %305 : vector<8x128xf32>
    %cst_75 = arith.constant 1.000000e+00 : f32
    %307 = vector.broadcast %cst_75 : f32 to vector<8x128xf32>
    %308 = arith.addf %307, %306 : vector<8x128xf32>
    %309 = arith.divf %307, %308 : vector<8x128xf32>
    %310 = arith.mulf %301, %279 : vector<8x128xf32>
    %311 = arith.mulf %295, %303 : vector<8x128xf32>
    %312 = arith.addf %310, %311 : vector<8x128xf32>
    %313 = math.tanh %312 : vector<8x128xf32>
    %314 = arith.mulf %309, %313 : vector<8x128xf32>
    %315 = arith.addi %4, %c6_i32 : i32
    %316 = vector.broadcast %315 : i32 to vector<8x1xi32>
    %317 = arith.cmpi sgt, %3, %316 : vector<8x1xi32>
    %318 = vector.shape_cast %317 : vector<8x1xi1> to vector<8x1xi1>
    %319 = vector.broadcast %318 : vector<8x1xi1> to vector<8x128xi1>
    %320 = arith.select %319, %314, %276 : vector<8x128xi1>, vector<8x128xf32>
    %321 = vector.shape_cast %317 : vector<8x1xi1> to vector<8x1xi1>
    %322 = vector.broadcast %321 : vector<8x1xi1> to vector<8x128xi1>
    %323 = arith.select %322, %312, %279 : vector<8x128xi1>, vector<8x128xf32>
    %324 = arith.index_cast %c6_i32 : i32 to index
    %c0_76 = arith.constant 0 : index
    %c0_77 = arith.constant 0 : index
    %325 = vector.load %arg18[%324, %c0_76, %c0_77] : memref<8x8x128xf32, #tpu.memory_space<vmem>>, vector<1x8x128xf32>
    %326 = vector.shape_cast %325 : vector<1x8x128xf32> to vector<8x128xf32>
    %327 = vector.shape_cast %320 : vector<8x128xf32> to vector<1x8x128xf32>
    tpu.vector_store %arg18[%324, %c0_76, %c0_77], %327 {strides = array<i32>} : memref<8x8x128xf32, #tpu.memory_space<vmem>>, vector<1x8x128xf32>,
    %c7_i32 = arith.constant 7 : i32
    %328 = arith.index_cast %c7_i32 : i32 to index
    %c0_78 = arith.constant 0 : index
    %c0_79 = arith.constant 0 : index
    %329 = vector.load %arg19[%328, %c0_78, %c0_79] : memref<8x8x512xf32, #tpu.memory_space<vmem>>, vector<1x8x512xf32>
    %330 = vector.shape_cast %329 : vector<1x8x512xf32> to vector<8x512xf32>
    %331 = arith.truncf %320 : vector<8x128xf32> to vector<8x128xbf16>
    %cst_80 = arith.constant dense<0.000000e+00> : vector<8x512xf32>
    %332 = tpu.matmul %331, %15, %cst_80 {dimension_numbers = #tpu.dot_dimension_numbers<[1], [0], [0], [1], [0, 0, 1, 1], [], []>} : vector<8x128xbf16>, vector<128x512xbf16>, vector<8x512xf32> -> vector<8x512xf32>
    %333 = arith.addf %330, %332 : vector<8x512xf32>
    %334 = vector.extract_strided_slice %333 {offsets = [0, 0], sizes = [8, 128], strides = [1, 1]} : vector<8x512xf32> to vector<8x128xf32>
    %335 = arith.negf %334 : vector<8x128xf32>
    %336 = math.exp %335 : vector<8x128xf32>
    %cst_81 = arith.constant 1.000000e+00 : f32
    %337 = vector.broadcast %cst_81 : f32 to vector<8x128xf32>
    %338 = arith.addf %337, %336 : vector<8x128xf32>
    %339 = arith.divf %337, %338 : vector<8x128xf32>
    %340 = vector.extract_strided_slice %333 {offsets = [0, 128], sizes = [8, 128], strides = [1, 1]} : vector<8x512xf32> to vector<8x128xf32>
    %341 = arith.negf %340 : vector<8x128xf32>
    %342 = math.exp %341 : vector<8x128xf32>
    %cst_82 = arith.constant 1.000000e+00 : f32
    %343 = vector.broadcast %cst_82 : f32 to vector<8x128xf32>
    %344 = arith.addf %343, %342 : vector<8x128xf32>
    %345 = arith.divf %343, %344 : vector<8x128xf32>
    %346 = vector.extract_strided_slice %333 {offsets = [0, 256], sizes = [8, 128], strides = [1, 1]} : vector<8x512xf32> to vector<8x128xf32>
    %347 = math.tanh %346 : vector<8x128xf32>
    %348 = vector.extract_strided_slice %333 {offsets = [0, 384], sizes = [8, 128], strides = [1, 1]} : vector<8x512xf32> to vector<8x128xf32>
    %349 = arith.negf %348 : vector<8x128xf32>
    %350 = math.exp %349 : vector<8x128xf32>
    %cst_83 = arith.constant 1.000000e+00 : f32
    %351 = vector.broadcast %cst_83 : f32 to vector<8x128xf32>
    %352 = arith.addf %351, %350 : vector<8x128xf32>
    %353 = arith.divf %351, %352 : vector<8x128xf32>
    %354 = arith.mulf %345, %323 : vector<8x128xf32>
    %355 = arith.mulf %339, %347 : vector<8x128xf32>
    %356 = arith.addf %354, %355 : vector<8x128xf32>
    %357 = math.tanh %356 : vector<8x128xf32>
    %358 = arith.mulf %353, %357 : vector<8x128xf32>
    %359 = arith.addi %4, %c7_i32 : i32
    %360 = vector.broadcast %359 : i32 to vector<8x1xi32>
    %361 = arith.cmpi sgt, %3, %360 : vector<8x1xi32>
    %362 = vector.shape_cast %361 : vector<8x1xi1> to vector<8x1xi1>
    %363 = vector.broadcast %362 : vector<8x1xi1> to vector<8x128xi1>
    %364 = arith.select %363, %358, %320 : vector<8x128xi1>, vector<8x128xf32>
    %365 = vector.shape_cast %361 : vector<8x1xi1> to vector<8x1xi1>
    %366 = vector.broadcast %365 : vector<8x1xi1> to vector<8x128xi1>
    %367 = arith.select %366, %356, %323 : vector<8x128xi1>, vector<8x128xf32>
    %368 = arith.index_cast %c7_i32 : i32 to index
    %c0_84 = arith.constant 0 : index
    %c0_85 = arith.constant 0 : index
    %369 = vector.load %arg18[%368, %c0_84, %c0_85] : memref<8x8x128xf32, #tpu.memory_space<vmem>>, vector<1x8x128xf32>
    %370 = vector.shape_cast %369 : vector<1x8x128xf32> to vector<8x128xf32>
    %371 = vector.shape_cast %364 : vector<8x128xf32> to vector<1x8x128xf32>
    tpu.vector_store %arg18[%368, %c0_84, %c0_85], %371 {strides = array<i32>} : memref<8x8x128xf32, #tpu.memory_space<vmem>>, vector<1x8x128xf32>,
    %c8_i32_86 = arith.constant 8 : i32
    %c0_87 = arith.constant 0 : index
    %c0_88 = arith.constant 0 : index
    %c0_89 = arith.constant 0 : index
    %372 = vector.load %arg16[%c0_87, %c0_88, %c0_89] : memref<2x8x128xf32, #tpu.memory_space<vmem>>, vector<1x8x128xf32>
    %373 = vector.shape_cast %372 : vector<1x8x128xf32> to vector<8x128xf32>
    %374 = vector.shape_cast %364 : vector<8x128xf32> to vector<1x8x128xf32>
    tpu.vector_store %arg16[%c0_87, %c0_88, %c0_89], %374 {strides = array<i32>} : memref<2x8x128xf32, #tpu.memory_space<vmem>>, vector<1x8x128xf32>,
    %c0_90 = arith.constant 0 : index
    %c0_91 = arith.constant 0 : index
    %c0_92 = arith.constant 0 : index
    %375 = vector.load %arg17[%c0_90, %c0_91, %c0_92] : memref<2x8x128xf32, #tpu.memory_space<vmem>>, vector<1x8x128xf32>
    %376 = vector.shape_cast %375 : vector<1x8x128xf32> to vector<8x128xf32>
    %377 = vector.shape_cast %367 : vector<8x128xf32> to vector<1x8x128xf32>
    tpu.vector_store %arg17[%c0_90, %c0_91, %c0_92], %377 {strides = array<i32>} : memref<2x8x128xf32, #tpu.memory_space<vmem>>, vector<1x8x128xf32>,
    %c0_93 = arith.constant 0 : index
    %c0_94 = arith.constant 0 : index
    %c0_95 = arith.constant 0 : index
    %378 = vector.load %arg18[%c0_93, %c0_94, %c0_95] : memref<8x8x128xf32, #tpu.memory_space<vmem>>, vector<8x8x128xf32>
    %379 = arith.truncf %378 : vector<8x8x128xf32> to vector<8x8x128xbf16>
    %380 = vector.shape_cast %379 : vector<8x8x128xbf16> to vector<64x128xbf16>
    %c0_96 = arith.constant 0 : index
    %c0_97 = arith.constant 0 : index
    %c0_98 = arith.constant 0 : index
    %381 = vector.load %arg6[%c0_96, %c0_97, %c0_98] : memref<1x128x512xbf16, #tpu.memory_space<vmem>>, vector<1x128x512xbf16>
    %382 = vector.shape_cast %381 : vector<1x128x512xbf16> to vector<128x512xbf16>
    %cst_99 = arith.constant dense<0.000000e+00> : vector<64x512xf32>
    %383 = tpu.matmul %380, %382, %cst_99 {dimension_numbers = #tpu.dot_dimension_numbers<[1], [0], [0], [1], [0, 0, 1, 1], [], []>} : vector<64x128xbf16>, vector<128x512xbf16>, vector<64x512xf32> -> vector<64x512xf32>
    %c0_100 = arith.constant 0 : index
    %c0_101 = arith.constant 0 : index
    %c0_102 = arith.constant 0 : index
    %384 = vector.load %arg7[%c0_100, %c0_101, %c0_102] : memref<1x1x512xf32, #tpu.memory_space<vmem>>, vector<1x1x512xf32>
    %385 = vector.shape_cast %384 : vector<1x1x512xf32> to vector<1x512xf32>
    %386 = vector.broadcast %385 : vector<1x512xf32> to vector<64x512xf32>
    %387 = arith.addf %383, %386 : vector<64x512xf32>
    %388 = vector.shape_cast %387 : vector<64x512xf32> to vector<8x8x512xf32>
    %c0_103 = arith.constant 0 : index
    %c0_104 = arith.constant 0 : index
    %c0_105 = arith.constant 0 : index
    %389 = vector.load %arg19[%c0_103, %c0_104, %c0_105] : memref<8x8x512xf32, #tpu.memory_space<vmem>>, vector<8x8x512xf32>
    tpu.vector_store %arg19[%c0_103, %c0_104, %c0_105], %388 {strides = array<i32>} : memref<8x8x512xf32, #tpu.memory_space<vmem>>, vector<8x8x512xf32>,
    %c1 = arith.constant 1 : index
    %c0_106 = arith.constant 0 : index
    %c0_107 = arith.constant 0 : index
    %390 = vector.load %arg8[%c1, %c0_106, %c0_107] : memref<2x128x512xbf16, #tpu.memory_space<vmem>>, vector<1x128x512xbf16>
    %391 = vector.shape_cast %390 : vector<1x128x512xbf16> to vector<128x512xbf16>
    %c1_108 = arith.constant 1 : index
    %c0_109 = arith.constant 0 : index
    %c0_110 = arith.constant 0 : index
    %392 = vector.load %arg16[%c1_108, %c0_109, %c0_110] : memref<2x8x128xf32, #tpu.memory_space<vmem>>, vector<1x8x128xf32>
    %393 = vector.shape_cast %392 : vector<1x8x128xf32> to vector<8x128xf32>
    %c1_111 = arith.constant 1 : index
    %c0_112 = arith.constant 0 : index
    %c0_113 = arith.constant 0 : index
    %394 = vector.load %arg17[%c1_111, %c0_112, %c0_113] : memref<2x8x128xf32, #tpu.memory_space<vmem>>, vector<1x8x128xf32>
    %395 = vector.shape_cast %394 : vector<1x8x128xf32> to vector<8x128xf32>
    %c0_i32_114 = arith.constant 0 : i32
    %396 = arith.index_cast %c0_i32_114 : i32 to index
    %c0_115 = arith.constant 0 : index
    %c0_116 = arith.constant 0 : index
    %397 = vector.load %arg19[%396, %c0_115, %c0_116] : memref<8x8x512xf32, #tpu.memory_space<vmem>>, vector<1x8x512xf32>
    %398 = vector.shape_cast %397 : vector<1x8x512xf32> to vector<8x512xf32>
    %399 = arith.truncf %393 : vector<8x128xf32> to vector<8x128xbf16>
    %cst_117 = arith.constant dense<0.000000e+00> : vector<8x512xf32>
    %400 = tpu.matmul %399, %391, %cst_117 {dimension_numbers = #tpu.dot_dimension_numbers<[1], [0], [0], [1], [0, 0, 1, 1], [], []>} : vector<8x128xbf16>, vector<128x512xbf16>, vector<8x512xf32> -> vector<8x512xf32>
    %401 = arith.addf %398, %400 : vector<8x512xf32>
    %402 = vector.extract_strided_slice %401 {offsets = [0, 0], sizes = [8, 128], strides = [1, 1]} : vector<8x512xf32> to vector<8x128xf32>
    %403 = arith.negf %402 : vector<8x128xf32>
    %404 = math.exp %403 : vector<8x128xf32>
    %cst_118 = arith.constant 1.000000e+00 : f32
    %405 = vector.broadcast %cst_118 : f32 to vector<8x128xf32>
    %406 = arith.addf %405, %404 : vector<8x128xf32>
    %407 = arith.divf %405, %406 : vector<8x128xf32>
    %408 = vector.extract_strided_slice %401 {offsets = [0, 128], sizes = [8, 128], strides = [1, 1]} : vector<8x512xf32> to vector<8x128xf32>
    %409 = arith.negf %408 : vector<8x128xf32>
    %410 = math.exp %409 : vector<8x128xf32>
    %cst_119 = arith.constant 1.000000e+00 : f32
    %411 = vector.broadcast %cst_119 : f32 to vector<8x128xf32>
    %412 = arith.addf %411, %410 : vector<8x128xf32>
    %413 = arith.divf %411, %412 : vector<8x128xf32>
    %414 = vector.extract_strided_slice %401 {offsets = [0, 256], sizes = [8, 128], strides = [1, 1]} : vector<8x512xf32> to vector<8x128xf32>
    %415 = math.tanh %414 : vector<8x128xf32>
    %416 = vector.extract_strided_slice %401 {offsets = [0, 384], sizes = [8, 128], strides = [1, 1]} : vector<8x512xf32> to vector<8x128xf32>
    %417 = arith.negf %416 : vector<8x128xf32>
    %418 = math.exp %417 : vector<8x128xf32>
    %cst_120 = arith.constant 1.000000e+00 : f32
    %419 = vector.broadcast %cst_120 : f32 to vector<8x128xf32>
    %420 = arith.addf %419, %418 : vector<8x128xf32>
    %421 = arith.divf %419, %420 : vector<8x128xf32>
    %422 = arith.mulf %413, %395 : vector<8x128xf32>
    %423 = arith.mulf %407, %415 : vector<8x128xf32>
    %424 = arith.addf %422, %423 : vector<8x128xf32>
    %425 = math.tanh %424 : vector<8x128xf32>
    %426 = arith.mulf %421, %425 : vector<8x128xf32>
    %427 = arith.addi %4, %c0_i32_114 : i32
    %428 = vector.broadcast %427 : i32 to vector<8x1xi32>
    %429 = arith.cmpi sgt, %3, %428 : vector<8x1xi32>
    %430 = vector.shape_cast %429 : vector<8x1xi1> to vector<8x1xi1>
    %431 = vector.broadcast %430 : vector<8x1xi1> to vector<8x128xi1>
    %432 = arith.select %431, %426, %393 : vector<8x128xi1>, vector<8x128xf32>
    %433 = vector.shape_cast %429 : vector<8x1xi1> to vector<8x1xi1>
    %434 = vector.broadcast %433 : vector<8x1xi1> to vector<8x128xi1>
    %435 = arith.select %434, %424, %395 : vector<8x128xi1>, vector<8x128xf32>
    %436 = arith.index_cast %c0_i32_114 : i32 to index
    %c0_121 = arith.constant 0 : index
    %c0_122 = arith.constant 0 : index
    %437 = vector.load %arg18[%436, %c0_121, %c0_122] : memref<8x8x128xf32, #tpu.memory_space<vmem>>, vector<1x8x128xf32>
    %438 = vector.shape_cast %437 : vector<1x8x128xf32> to vector<8x128xf32>
    %439 = vector.shape_cast %432 : vector<8x128xf32> to vector<1x8x128xf32>
    tpu.vector_store %arg18[%436, %c0_121, %c0_122], %439 {strides = array<i32>} : memref<8x8x128xf32, #tpu.memory_space<vmem>>, vector<1x8x128xf32>,
    %c1_i32_123 = arith.constant 1 : i32
    %440 = arith.index_cast %c1_i32_123 : i32 to index
    %c0_124 = arith.constant 0 : index
    %c0_125 = arith.constant 0 : index
    %441 = vector.load %arg19[%440, %c0_124, %c0_125] : memref<8x8x512xf32, #tpu.memory_space<vmem>>, vector<1x8x512xf32>
    %442 = vector.shape_cast %441 : vector<1x8x512xf32> to vector<8x512xf32>
    %443 = arith.truncf %432 : vector<8x128xf32> to vector<8x128xbf16>
    %cst_126 = arith.constant dense<0.000000e+00> : vector<8x512xf32>
    %444 = tpu.matmul %443, %391, %cst_126 {dimension_numbers = #tpu.dot_dimension_numbers<[1], [0], [0], [1], [0, 0, 1, 1], [], []>} : vector<8x128xbf16>, vector<128x512xbf16>, vector<8x512xf32> -> vector<8x512xf32>
    %445 = arith.addf %442, %444 : vector<8x512xf32>
    %446 = vector.extract_strided_slice %445 {offsets = [0, 0], sizes = [8, 128], strides = [1, 1]} : vector<8x512xf32> to vector<8x128xf32>
    %447 = arith.negf %446 : vector<8x128xf32>
    %448 = math.exp %447 : vector<8x128xf32>
    %cst_127 = arith.constant 1.000000e+00 : f32
    %449 = vector.broadcast %cst_127 : f32 to vector<8x128xf32>
    %450 = arith.addf %449, %448 : vector<8x128xf32>
    %451 = arith.divf %449, %450 : vector<8x128xf32>
    %452 = vector.extract_strided_slice %445 {offsets = [0, 128], sizes = [8, 128], strides = [1, 1]} : vector<8x512xf32> to vector<8x128xf32>
    %453 = arith.negf %452 : vector<8x128xf32>
    %454 = math.exp %453 : vector<8x128xf32>
    %cst_128 = arith.constant 1.000000e+00 : f32
    %455 = vector.broadcast %cst_128 : f32 to vector<8x128xf32>
    %456 = arith.addf %455, %454 : vector<8x128xf32>
    %457 = arith.divf %455, %456 : vector<8x128xf32>
    %458 = vector.extract_strided_slice %445 {offsets = [0, 256], sizes = [8, 128], strides = [1, 1]} : vector<8x512xf32> to vector<8x128xf32>
    %459 = math.tanh %458 : vector<8x128xf32>
    %460 = vector.extract_strided_slice %445 {offsets = [0, 384], sizes = [8, 128], strides = [1, 1]} : vector<8x512xf32> to vector<8x128xf32>
    %461 = arith.negf %460 : vector<8x128xf32>
    %462 = math.exp %461 : vector<8x128xf32>
    %cst_129 = arith.constant 1.000000e+00 : f32
    %463 = vector.broadcast %cst_129 : f32 to vector<8x128xf32>
    %464 = arith.addf %463, %462 : vector<8x128xf32>
    %465 = arith.divf %463, %464 : vector<8x128xf32>
    %466 = arith.mulf %457, %435 : vector<8x128xf32>
    %467 = arith.mulf %451, %459 : vector<8x128xf32>
    %468 = arith.addf %466, %467 : vector<8x128xf32>
    %469 = math.tanh %468 : vector<8x128xf32>
    %470 = arith.mulf %465, %469 : vector<8x128xf32>
    %471 = arith.addi %4, %c1_i32_123 : i32
    %472 = vector.broadcast %471 : i32 to vector<8x1xi32>
    %473 = arith.cmpi sgt, %3, %472 : vector<8x1xi32>
    %474 = vector.shape_cast %473 : vector<8x1xi1> to vector<8x1xi1>
    %475 = vector.broadcast %474 : vector<8x1xi1> to vector<8x128xi1>
    %476 = arith.select %475, %470, %432 : vector<8x128xi1>, vector<8x128xf32>
    %477 = vector.shape_cast %473 : vector<8x1xi1> to vector<8x1xi1>
    %478 = vector.broadcast %477 : vector<8x1xi1> to vector<8x128xi1>
    %479 = arith.select %478, %468, %435 : vector<8x128xi1>, vector<8x128xf32>
    %480 = arith.index_cast %c1_i32_123 : i32 to index
    %c0_130 = arith.constant 0 : index
    %c0_131 = arith.constant 0 : index
    %481 = vector.load %arg18[%480, %c0_130, %c0_131] : memref<8x8x128xf32, #tpu.memory_space<vmem>>, vector<1x8x128xf32>
    %482 = vector.shape_cast %481 : vector<1x8x128xf32> to vector<8x128xf32>
    %483 = vector.shape_cast %476 : vector<8x128xf32> to vector<1x8x128xf32>
    tpu.vector_store %arg18[%480, %c0_130, %c0_131], %483 {strides = array<i32>} : memref<8x8x128xf32, #tpu.memory_space<vmem>>, vector<1x8x128xf32>,
    %c2_i32_132 = arith.constant 2 : i32
    %484 = arith.index_cast %c2_i32_132 : i32 to index
    %c0_133 = arith.constant 0 : index
    %c0_134 = arith.constant 0 : index
    %485 = vector.load %arg19[%484, %c0_133, %c0_134] : memref<8x8x512xf32, #tpu.memory_space<vmem>>, vector<1x8x512xf32>
    %486 = vector.shape_cast %485 : vector<1x8x512xf32> to vector<8x512xf32>
    %487 = arith.truncf %476 : vector<8x128xf32> to vector<8x128xbf16>
    %cst_135 = arith.constant dense<0.000000e+00> : vector<8x512xf32>
    %488 = tpu.matmul %487, %391, %cst_135 {dimension_numbers = #tpu.dot_dimension_numbers<[1], [0], [0], [1], [0, 0, 1, 1], [], []>} : vector<8x128xbf16>, vector<128x512xbf16>, vector<8x512xf32> -> vector<8x512xf32>
    %489 = arith.addf %486, %488 : vector<8x512xf32>
    %490 = vector.extract_strided_slice %489 {offsets = [0, 0], sizes = [8, 128], strides = [1, 1]} : vector<8x512xf32> to vector<8x128xf32>
    %491 = arith.negf %490 : vector<8x128xf32>
    %492 = math.exp %491 : vector<8x128xf32>
    %cst_136 = arith.constant 1.000000e+00 : f32
    %493 = vector.broadcast %cst_136 : f32 to vector<8x128xf32>
    %494 = arith.addf %493, %492 : vector<8x128xf32>
    %495 = arith.divf %493, %494 : vector<8x128xf32>
    %496 = vector.extract_strided_slice %489 {offsets = [0, 128], sizes = [8, 128], strides = [1, 1]} : vector<8x512xf32> to vector<8x128xf32>
    %497 = arith.negf %496 : vector<8x128xf32>
    %498 = math.exp %497 : vector<8x128xf32>
    %cst_137 = arith.constant 1.000000e+00 : f32
    %499 = vector.broadcast %cst_137 : f32 to vector<8x128xf32>
    %500 = arith.addf %499, %498 : vector<8x128xf32>
    %501 = arith.divf %499, %500 : vector<8x128xf32>
    %502 = vector.extract_strided_slice %489 {offsets = [0, 256], sizes = [8, 128], strides = [1, 1]} : vector<8x512xf32> to vector<8x128xf32>
    %503 = math.tanh %502 : vector<8x128xf32>
    %504 = vector.extract_strided_slice %489 {offsets = [0, 384], sizes = [8, 128], strides = [1, 1]} : vector<8x512xf32> to vector<8x128xf32>
    %505 = arith.negf %504 : vector<8x128xf32>
    %506 = math.exp %505 : vector<8x128xf32>
    %cst_138 = arith.constant 1.000000e+00 : f32
    %507 = vector.broadcast %cst_138 : f32 to vector<8x128xf32>
    %508 = arith.addf %507, %506 : vector<8x128xf32>
    %509 = arith.divf %507, %508 : vector<8x128xf32>
    %510 = arith.mulf %501, %479 : vector<8x128xf32>
    %511 = arith.mulf %495, %503 : vector<8x128xf32>
    %512 = arith.addf %510, %511 : vector<8x128xf32>
    %513 = math.tanh %512 : vector<8x128xf32>
    %514 = arith.mulf %509, %513 : vector<8x128xf32>
    %515 = arith.addi %4, %c2_i32_132 : i32
    %516 = vector.broadcast %515 : i32 to vector<8x1xi32>
    %517 = arith.cmpi sgt, %3, %516 : vector<8x1xi32>
    %518 = vector.shape_cast %517 : vector<8x1xi1> to vector<8x1xi1>
    %519 = vector.broadcast %518 : vector<8x1xi1> to vector<8x128xi1>
    %520 = arith.select %519, %514, %476 : vector<8x128xi1>, vector<8x128xf32>
    %521 = vector.shape_cast %517 : vector<8x1xi1> to vector<8x1xi1>
    %522 = vector.broadcast %521 : vector<8x1xi1> to vector<8x128xi1>
    %523 = arith.select %522, %512, %479 : vector<8x128xi1>, vector<8x128xf32>
    %524 = arith.index_cast %c2_i32_132 : i32 to index
    %c0_139 = arith.constant 0 : index
    %c0_140 = arith.constant 0 : index
    %525 = vector.load %arg18[%524, %c0_139, %c0_140] : memref<8x8x128xf32, #tpu.memory_space<vmem>>, vector<1x8x128xf32>
    %526 = vector.shape_cast %525 : vector<1x8x128xf32> to vector<8x128xf32>
    %527 = vector.shape_cast %520 : vector<8x128xf32> to vector<1x8x128xf32>
    tpu.vector_store %arg18[%524, %c0_139, %c0_140], %527 {strides = array<i32>} : memref<8x8x128xf32, #tpu.memory_space<vmem>>, vector<1x8x128xf32>,
    %c3_i32_141 = arith.constant 3 : i32
    %528 = arith.index_cast %c3_i32_141 : i32 to index
    %c0_142 = arith.constant 0 : index
    %c0_143 = arith.constant 0 : index
    %529 = vector.load %arg19[%528, %c0_142, %c0_143] : memref<8x8x512xf32, #tpu.memory_space<vmem>>, vector<1x8x512xf32>
    %530 = vector.shape_cast %529 : vector<1x8x512xf32> to vector<8x512xf32>
    %531 = arith.truncf %520 : vector<8x128xf32> to vector<8x128xbf16>
    %cst_144 = arith.constant dense<0.000000e+00> : vector<8x512xf32>
    %532 = tpu.matmul %531, %391, %cst_144 {dimension_numbers = #tpu.dot_dimension_numbers<[1], [0], [0], [1], [0, 0, 1, 1], [], []>} : vector<8x128xbf16>, vector<128x512xbf16>, vector<8x512xf32> -> vector<8x512xf32>
    %533 = arith.addf %530, %532 : vector<8x512xf32>
    %534 = vector.extract_strided_slice %533 {offsets = [0, 0], sizes = [8, 128], strides = [1, 1]} : vector<8x512xf32> to vector<8x128xf32>
    %535 = arith.negf %534 : vector<8x128xf32>
    %536 = math.exp %535 : vector<8x128xf32>
    %cst_145 = arith.constant 1.000000e+00 : f32
    %537 = vector.broadcast %cst_145 : f32 to vector<8x128xf32>
    %538 = arith.addf %537, %536 : vector<8x128xf32>
    %539 = arith.divf %537, %538 : vector<8x128xf32>
    %540 = vector.extract_strided_slice %533 {offsets = [0, 128], sizes = [8, 128], strides = [1, 1]} : vector<8x512xf32> to vector<8x128xf32>
    %541 = arith.negf %540 : vector<8x128xf32>
    %542 = math.exp %541 : vector<8x128xf32>
    %cst_146 = arith.constant 1.000000e+00 : f32
    %543 = vector.broadcast %cst_146 : f32 to vector<8x128xf32>
    %544 = arith.addf %543, %542 : vector<8x128xf32>
    %545 = arith.divf %543, %544 : vector<8x128xf32>
    %546 = vector.extract_strided_slice %533 {offsets = [0, 256], sizes = [8, 128], strides = [1, 1]} : vector<8x512xf32> to vector<8x128xf32>
    %547 = math.tanh %546 : vector<8x128xf32>
    %548 = vector.extract_strided_slice %533 {offsets = [0, 384], sizes = [8, 128], strides = [1, 1]} : vector<8x512xf32> to vector<8x128xf32>
    %549 = arith.negf %548 : vector<8x128xf32>
    %550 = math.exp %549 : vector<8x128xf32>
    %cst_147 = arith.constant 1.000000e+00 : f32
    %551 = vector.broadcast %cst_147 : f32 to vector<8x128xf32>
    %552 = arith.addf %551, %550 : vector<8x128xf32>
    %553 = arith.divf %551, %552 : vector<8x128xf32>
    %554 = arith.mulf %545, %523 : vector<8x128xf32>
    %555 = arith.mulf %539, %547 : vector<8x128xf32>
    %556 = arith.addf %554, %555 : vector<8x128xf32>
    %557 = math.tanh %556 : vector<8x128xf32>
    %558 = arith.mulf %553, %557 : vector<8x128xf32>
    %559 = arith.addi %4, %c3_i32_141 : i32
    %560 = vector.broadcast %559 : i32 to vector<8x1xi32>
    %561 = arith.cmpi sgt, %3, %560 : vector<8x1xi32>
    %562 = vector.shape_cast %561 : vector<8x1xi1> to vector<8x1xi1>
    %563 = vector.broadcast %562 : vector<8x1xi1> to vector<8x128xi1>
    %564 = arith.select %563, %558, %520 : vector<8x128xi1>, vector<8x128xf32>
    %565 = vector.shape_cast %561 : vector<8x1xi1> to vector<8x1xi1>
    %566 = vector.broadcast %565 : vector<8x1xi1> to vector<8x128xi1>
    %567 = arith.select %566, %556, %523 : vector<8x128xi1>, vector<8x128xf32>
    %568 = arith.index_cast %c3_i32_141 : i32 to index
    %c0_148 = arith.constant 0 : index
    %c0_149 = arith.constant 0 : index
    %569 = vector.load %arg18[%568, %c0_148, %c0_149] : memref<8x8x128xf32, #tpu.memory_space<vmem>>, vector<1x8x128xf32>
    %570 = vector.shape_cast %569 : vector<1x8x128xf32> to vector<8x128xf32>
    %571 = vector.shape_cast %564 : vector<8x128xf32> to vector<1x8x128xf32>
    tpu.vector_store %arg18[%568, %c0_148, %c0_149], %571 {strides = array<i32>} : memref<8x8x128xf32, #tpu.memory_space<vmem>>, vector<1x8x128xf32>,
    %c4_i32_150 = arith.constant 4 : i32
    %572 = arith.index_cast %c4_i32_150 : i32 to index
    %c0_151 = arith.constant 0 : index
    %c0_152 = arith.constant 0 : index
    %573 = vector.load %arg19[%572, %c0_151, %c0_152] : memref<8x8x512xf32, #tpu.memory_space<vmem>>, vector<1x8x512xf32>
    %574 = vector.shape_cast %573 : vector<1x8x512xf32> to vector<8x512xf32>
    %575 = arith.truncf %564 : vector<8x128xf32> to vector<8x128xbf16>
    %cst_153 = arith.constant dense<0.000000e+00> : vector<8x512xf32>
    %576 = tpu.matmul %575, %391, %cst_153 {dimension_numbers = #tpu.dot_dimension_numbers<[1], [0], [0], [1], [0, 0, 1, 1], [], []>} : vector<8x128xbf16>, vector<128x512xbf16>, vector<8x512xf32> -> vector<8x512xf32>
    %577 = arith.addf %574, %576 : vector<8x512xf32>
    %578 = vector.extract_strided_slice %577 {offsets = [0, 0], sizes = [8, 128], strides = [1, 1]} : vector<8x512xf32> to vector<8x128xf32>
    %579 = arith.negf %578 : vector<8x128xf32>
    %580 = math.exp %579 : vector<8x128xf32>
    %cst_154 = arith.constant 1.000000e+00 : f32
    %581 = vector.broadcast %cst_154 : f32 to vector<8x128xf32>
    %582 = arith.addf %581, %580 : vector<8x128xf32>
    %583 = arith.divf %581, %582 : vector<8x128xf32>
    %584 = vector.extract_strided_slice %577 {offsets = [0, 128], sizes = [8, 128], strides = [1, 1]} : vector<8x512xf32> to vector<8x128xf32>
    %585 = arith.negf %584 : vector<8x128xf32>
    %586 = math.exp %585 : vector<8x128xf32>
    %cst_155 = arith.constant 1.000000e+00 : f32
    %587 = vector.broadcast %cst_155 : f32 to vector<8x128xf32>
    %588 = arith.addf %587, %586 : vector<8x128xf32>
    %589 = arith.divf %587, %588 : vector<8x128xf32>
    %590 = vector.extract_strided_slice %577 {offsets = [0, 256], sizes = [8, 128], strides = [1, 1]} : vector<8x512xf32> to vector<8x128xf32>
    %591 = math.tanh %590 : vector<8x128xf32>
    %592 = vector.extract_strided_slice %577 {offsets = [0, 384], sizes = [8, 128], strides = [1, 1]} : vector<8x512xf32> to vector<8x128xf32>
    %593 = arith.negf %592 : vector<8x128xf32>
    %594 = math.exp %593 : vector<8x128xf32>
    %cst_156 = arith.constant 1.000000e+00 : f32
    %595 = vector.broadcast %cst_156 : f32 to vector<8x128xf32>
    %596 = arith.addf %595, %594 : vector<8x128xf32>
    %597 = arith.divf %595, %596 : vector<8x128xf32>
    %598 = arith.mulf %589, %567 : vector<8x128xf32>
    %599 = arith.mulf %583, %591 : vector<8x128xf32>
    %600 = arith.addf %598, %599 : vector<8x128xf32>
    %601 = math.tanh %600 : vector<8x128xf32>
    %602 = arith.mulf %597, %601 : vector<8x128xf32>
    %603 = arith.addi %4, %c4_i32_150 : i32
    %604 = vector.broadcast %603 : i32 to vector<8x1xi32>
    %605 = arith.cmpi sgt, %3, %604 : vector<8x1xi32>
    %606 = vector.shape_cast %605 : vector<8x1xi1> to vector<8x1xi1>
    %607 = vector.broadcast %606 : vector<8x1xi1> to vector<8x128xi1>
    %608 = arith.select %607, %602, %564 : vector<8x128xi1>, vector<8x128xf32>
    %609 = vector.shape_cast %605 : vector<8x1xi1> to vector<8x1xi1>
    %610 = vector.broadcast %609 : vector<8x1xi1> to vector<8x128xi1>
    %611 = arith.select %610, %600, %567 : vector<8x128xi1>, vector<8x128xf32>
    %612 = arith.index_cast %c4_i32_150 : i32 to index
    %c0_157 = arith.constant 0 : index
    %c0_158 = arith.constant 0 : index
    %613 = vector.load %arg18[%612, %c0_157, %c0_158] : memref<8x8x128xf32, #tpu.memory_space<vmem>>, vector<1x8x128xf32>
    %614 = vector.shape_cast %613 : vector<1x8x128xf32> to vector<8x128xf32>
    %615 = vector.shape_cast %608 : vector<8x128xf32> to vector<1x8x128xf32>
    tpu.vector_store %arg18[%612, %c0_157, %c0_158], %615 {strides = array<i32>} : memref<8x8x128xf32, #tpu.memory_space<vmem>>, vector<1x8x128xf32>,
    %c5_i32_159 = arith.constant 5 : i32
    %616 = arith.index_cast %c5_i32_159 : i32 to index
    %c0_160 = arith.constant 0 : index
    %c0_161 = arith.constant 0 : index
    %617 = vector.load %arg19[%616, %c0_160, %c0_161] : memref<8x8x512xf32, #tpu.memory_space<vmem>>, vector<1x8x512xf32>
    %618 = vector.shape_cast %617 : vector<1x8x512xf32> to vector<8x512xf32>
    %619 = arith.truncf %608 : vector<8x128xf32> to vector<8x128xbf16>
    %cst_162 = arith.constant dense<0.000000e+00> : vector<8x512xf32>
    %620 = tpu.matmul %619, %391, %cst_162 {dimension_numbers = #tpu.dot_dimension_numbers<[1], [0], [0], [1], [0, 0, 1, 1], [], []>} : vector<8x128xbf16>, vector<128x512xbf16>, vector<8x512xf32> -> vector<8x512xf32>
    %621 = arith.addf %618, %620 : vector<8x512xf32>
    %622 = vector.extract_strided_slice %621 {offsets = [0, 0], sizes = [8, 128], strides = [1, 1]} : vector<8x512xf32> to vector<8x128xf32>
    %623 = arith.negf %622 : vector<8x128xf32>
    %624 = math.exp %623 : vector<8x128xf32>
    %cst_163 = arith.constant 1.000000e+00 : f32
    %625 = vector.broadcast %cst_163 : f32 to vector<8x128xf32>
    %626 = arith.addf %625, %624 : vector<8x128xf32>
    %627 = arith.divf %625, %626 : vector<8x128xf32>
    %628 = vector.extract_strided_slice %621 {offsets = [0, 128], sizes = [8, 128], strides = [1, 1]} : vector<8x512xf32> to vector<8x128xf32>
    %629 = arith.negf %628 : vector<8x128xf32>
    %630 = math.exp %629 : vector<8x128xf32>
    %cst_164 = arith.constant 1.000000e+00 : f32
    %631 = vector.broadcast %cst_164 : f32 to vector<8x128xf32>
    %632 = arith.addf %631, %630 : vector<8x128xf32>
    %633 = arith.divf %631, %632 : vector<8x128xf32>
    %634 = vector.extract_strided_slice %621 {offsets = [0, 256], sizes = [8, 128], strides = [1, 1]} : vector<8x512xf32> to vector<8x128xf32>
    %635 = math.tanh %634 : vector<8x128xf32>
    %636 = vector.extract_strided_slice %621 {offsets = [0, 384], sizes = [8, 128], strides = [1, 1]} : vector<8x512xf32> to vector<8x128xf32>
    %637 = arith.negf %636 : vector<8x128xf32>
    %638 = math.exp %637 : vector<8x128xf32>
    %cst_165 = arith.constant 1.000000e+00 : f32
    %639 = vector.broadcast %cst_165 : f32 to vector<8x128xf32>
    %640 = arith.addf %639, %638 : vector<8x128xf32>
    %641 = arith.divf %639, %640 : vector<8x128xf32>
    %642 = arith.mulf %633, %611 : vector<8x128xf32>
    %643 = arith.mulf %627, %635 : vector<8x128xf32>
    %644 = arith.addf %642, %643 : vector<8x128xf32>
    %645 = math.tanh %644 : vector<8x128xf32>
    %646 = arith.mulf %641, %645 : vector<8x128xf32>
    %647 = arith.addi %4, %c5_i32_159 : i32
    %648 = vector.broadcast %647 : i32 to vector<8x1xi32>
    %649 = arith.cmpi sgt, %3, %648 : vector<8x1xi32>
    %650 = vector.shape_cast %649 : vector<8x1xi1> to vector<8x1xi1>
    %651 = vector.broadcast %650 : vector<8x1xi1> to vector<8x128xi1>
    %652 = arith.select %651, %646, %608 : vector<8x128xi1>, vector<8x128xf32>
    %653 = vector.shape_cast %649 : vector<8x1xi1> to vector<8x1xi1>
    %654 = vector.broadcast %653 : vector<8x1xi1> to vector<8x128xi1>
    %655 = arith.select %654, %644, %611 : vector<8x128xi1>, vector<8x128xf32>
    %656 = arith.index_cast %c5_i32_159 : i32 to index
    %c0_166 = arith.constant 0 : index
    %c0_167 = arith.constant 0 : index
    %657 = vector.load %arg18[%656, %c0_166, %c0_167] : memref<8x8x128xf32, #tpu.memory_space<vmem>>, vector<1x8x128xf32>
    %658 = vector.shape_cast %657 : vector<1x8x128xf32> to vector<8x128xf32>
    %659 = vector.shape_cast %652 : vector<8x128xf32> to vector<1x8x128xf32>
    tpu.vector_store %arg18[%656, %c0_166, %c0_167], %659 {strides = array<i32>} : memref<8x8x128xf32, #tpu.memory_space<vmem>>, vector<1x8x128xf32>,
    %c6_i32_168 = arith.constant 6 : i32
    %660 = arith.index_cast %c6_i32_168 : i32 to index
    %c0_169 = arith.constant 0 : index
    %c0_170 = arith.constant 0 : index
    %661 = vector.load %arg19[%660, %c0_169, %c0_170] : memref<8x8x512xf32, #tpu.memory_space<vmem>>, vector<1x8x512xf32>
    %662 = vector.shape_cast %661 : vector<1x8x512xf32> to vector<8x512xf32>
    %663 = arith.truncf %652 : vector<8x128xf32> to vector<8x128xbf16>
    %cst_171 = arith.constant dense<0.000000e+00> : vector<8x512xf32>
    %664 = tpu.matmul %663, %391, %cst_171 {dimension_numbers = #tpu.dot_dimension_numbers<[1], [0], [0], [1], [0, 0, 1, 1], [], []>} : vector<8x128xbf16>, vector<128x512xbf16>, vector<8x512xf32> -> vector<8x512xf32>
    %665 = arith.addf %662, %664 : vector<8x512xf32>
    %666 = vector.extract_strided_slice %665 {offsets = [0, 0], sizes = [8, 128], strides = [1, 1]} : vector<8x512xf32> to vector<8x128xf32>
    %667 = arith.negf %666 : vector<8x128xf32>
    %668 = math.exp %667 : vector<8x128xf32>
    %cst_172 = arith.constant 1.000000e+00 : f32
    %669 = vector.broadcast %cst_172 : f32 to vector<8x128xf32>
    %670 = arith.addf %669, %668 : vector<8x128xf32>
    %671 = arith.divf %669, %670 : vector<8x128xf32>
    %672 = vector.extract_strided_slice %665 {offsets = [0, 128], sizes = [8, 128], strides = [1, 1]} : vector<8x512xf32> to vector<8x128xf32>
    %673 = arith.negf %672 : vector<8x128xf32>
    %674 = math.exp %673 : vector<8x128xf32>
    %cst_173 = arith.constant 1.000000e+00 : f32
    %675 = vector.broadcast %cst_173 : f32 to vector<8x128xf32>
    %676 = arith.addf %675, %674 : vector<8x128xf32>
    %677 = arith.divf %675, %676 : vector<8x128xf32>
    %678 = vector.extract_strided_slice %665 {offsets = [0, 256], sizes = [8, 128], strides = [1, 1]} : vector<8x512xf32> to vector<8x128xf32>
    %679 = math.tanh %678 : vector<8x128xf32>
    %680 = vector.extract_strided_slice %665 {offsets = [0, 384], sizes = [8, 128], strides = [1, 1]} : vector<8x512xf32> to vector<8x128xf32>
    %681 = arith.negf %680 : vector<8x128xf32>
    %682 = math.exp %681 : vector<8x128xf32>
    %cst_174 = arith.constant 1.000000e+00 : f32
    %683 = vector.broadcast %cst_174 : f32 to vector<8x128xf32>
    %684 = arith.addf %683, %682 : vector<8x128xf32>
    %685 = arith.divf %683, %684 : vector<8x128xf32>
    %686 = arith.mulf %677, %655 : vector<8x128xf32>
    %687 = arith.mulf %671, %679 : vector<8x128xf32>
    %688 = arith.addf %686, %687 : vector<8x128xf32>
    %689 = math.tanh %688 : vector<8x128xf32>
    %690 = arith.mulf %685, %689 : vector<8x128xf32>
    %691 = arith.addi %4, %c6_i32_168 : i32
    %692 = vector.broadcast %691 : i32 to vector<8x1xi32>
    %693 = arith.cmpi sgt, %3, %692 : vector<8x1xi32>
    %694 = vector.shape_cast %693 : vector<8x1xi1> to vector<8x1xi1>
    %695 = vector.broadcast %694 : vector<8x1xi1> to vector<8x128xi1>
    %696 = arith.select %695, %690, %652 : vector<8x128xi1>, vector<8x128xf32>
    %697 = vector.shape_cast %693 : vector<8x1xi1> to vector<8x1xi1>
    %698 = vector.broadcast %697 : vector<8x1xi1> to vector<8x128xi1>
    %699 = arith.select %698, %688, %655 : vector<8x128xi1>, vector<8x128xf32>
    %700 = arith.index_cast %c6_i32_168 : i32 to index
    %c0_175 = arith.constant 0 : index
    %c0_176 = arith.constant 0 : index
    %701 = vector.load %arg18[%700, %c0_175, %c0_176] : memref<8x8x128xf32, #tpu.memory_space<vmem>>, vector<1x8x128xf32>
    %702 = vector.shape_cast %701 : vector<1x8x128xf32> to vector<8x128xf32>
    %703 = vector.shape_cast %696 : vector<8x128xf32> to vector<1x8x128xf32>
    tpu.vector_store %arg18[%700, %c0_175, %c0_176], %703 {strides = array<i32>} : memref<8x8x128xf32, #tpu.memory_space<vmem>>, vector<1x8x128xf32>,
    %c7_i32_177 = arith.constant 7 : i32
    %704 = arith.index_cast %c7_i32_177 : i32 to index
    %c0_178 = arith.constant 0 : index
    %c0_179 = arith.constant 0 : index
    %705 = vector.load %arg19[%704, %c0_178, %c0_179] : memref<8x8x512xf32, #tpu.memory_space<vmem>>, vector<1x8x512xf32>
    %706 = vector.shape_cast %705 : vector<1x8x512xf32> to vector<8x512xf32>
    %707 = arith.truncf %696 : vector<8x128xf32> to vector<8x128xbf16>
    %cst_180 = arith.constant dense<0.000000e+00> : vector<8x512xf32>
    %708 = tpu.matmul %707, %391, %cst_180 {dimension_numbers = #tpu.dot_dimension_numbers<[1], [0], [0], [1], [0, 0, 1, 1], [], []>} : vector<8x128xbf16>, vector<128x512xbf16>, vector<8x512xf32> -> vector<8x512xf32>
    %709 = arith.addf %706, %708 : vector<8x512xf32>
    %710 = vector.extract_strided_slice %709 {offsets = [0, 0], sizes = [8, 128], strides = [1, 1]} : vector<8x512xf32> to vector<8x128xf32>
    %711 = arith.negf %710 : vector<8x128xf32>
    %712 = math.exp %711 : vector<8x128xf32>
    %cst_181 = arith.constant 1.000000e+00 : f32
    %713 = vector.broadcast %cst_181 : f32 to vector<8x128xf32>
    %714 = arith.addf %713, %712 : vector<8x128xf32>
    %715 = arith.divf %713, %714 : vector<8x128xf32>
    %716 = vector.extract_strided_slice %709 {offsets = [0, 128], sizes = [8, 128], strides = [1, 1]} : vector<8x512xf32> to vector<8x128xf32>
    %717 = arith.negf %716 : vector<8x128xf32>
    %718 = math.exp %717 : vector<8x128xf32>
    %cst_182 = arith.constant 1.000000e+00 : f32
    %719 = vector.broadcast %cst_182 : f32 to vector<8x128xf32>
    %720 = arith.addf %719, %718 : vector<8x128xf32>
    %721 = arith.divf %719, %720 : vector<8x128xf32>
    %722 = vector.extract_strided_slice %709 {offsets = [0, 256], sizes = [8, 128], strides = [1, 1]} : vector<8x512xf32> to vector<8x128xf32>
    %723 = math.tanh %722 : vector<8x128xf32>
    %724 = vector.extract_strided_slice %709 {offsets = [0, 384], sizes = [8, 128], strides = [1, 1]} : vector<8x512xf32> to vector<8x128xf32>
    %725 = arith.negf %724 : vector<8x128xf32>
    %726 = math.exp %725 : vector<8x128xf32>
    %cst_183 = arith.constant 1.000000e+00 : f32
    %727 = vector.broadcast %cst_183 : f32 to vector<8x128xf32>
    %728 = arith.addf %727, %726 : vector<8x128xf32>
    %729 = arith.divf %727, %728 : vector<8x128xf32>
    %730 = arith.mulf %721, %699 : vector<8x128xf32>
    %731 = arith.mulf %715, %723 : vector<8x128xf32>
    %732 = arith.addf %730, %731 : vector<8x128xf32>
    %733 = math.tanh %732 : vector<8x128xf32>
    %734 = arith.mulf %729, %733 : vector<8x128xf32>
    %735 = arith.addi %4, %c7_i32_177 : i32
    %736 = vector.broadcast %735 : i32 to vector<8x1xi32>
    %737 = arith.cmpi sgt, %3, %736 : vector<8x1xi32>
    %738 = vector.shape_cast %737 : vector<8x1xi1> to vector<8x1xi1>
    %739 = vector.broadcast %738 : vector<8x1xi1> to vector<8x128xi1>
    %740 = arith.select %739, %734, %696 : vector<8x128xi1>, vector<8x128xf32>
    %741 = vector.shape_cast %737 : vector<8x1xi1> to vector<8x1xi1>
    %742 = vector.broadcast %741 : vector<8x1xi1> to vector<8x128xi1>
    %743 = arith.select %742, %732, %699 : vector<8x128xi1>, vector<8x128xf32>
    %744 = arith.index_cast %c7_i32_177 : i32 to index
    %c0_184 = arith.constant 0 : index
    %c0_185 = arith.constant 0 : index
    %745 = vector.load %arg18[%744, %c0_184, %c0_185] : memref<8x8x128xf32, #tpu.memory_space<vmem>>, vector<1x8x128xf32>
    %746 = vector.shape_cast %745 : vector<1x8x128xf32> to vector<8x128xf32>
    %747 = vector.shape_cast %740 : vector<8x128xf32> to vector<1x8x128xf32>
    tpu.vector_store %arg18[%744, %c0_184, %c0_185], %747 {strides = array<i32>} : memref<8x8x128xf32, #tpu.memory_space<vmem>>, vector<1x8x128xf32>,
    %c8_i32_186 = arith.constant 8 : i32
    %c1_187 = arith.constant 1 : index
    %c0_188 = arith.constant 0 : index
    %c0_189 = arith.constant 0 : index
    %748 = vector.load %arg16[%c1_187, %c0_188, %c0_189] : memref<2x8x128xf32, #tpu.memory_space<vmem>>, vector<1x8x128xf32>
    %749 = vector.shape_cast %748 : vector<1x8x128xf32> to vector<8x128xf32>
    %750 = vector.shape_cast %740 : vector<8x128xf32> to vector<1x8x128xf32>
    tpu.vector_store %arg16[%c1_187, %c0_188, %c0_189], %750 {strides = array<i32>} : memref<2x8x128xf32, #tpu.memory_space<vmem>>, vector<1x8x128xf32>,
    %c1_190 = arith.constant 1 : index
    %c0_191 = arith.constant 0 : index
    %c0_192 = arith.constant 0 : index
    %751 = vector.load %arg17[%c1_190, %c0_191, %c0_192] : memref<2x8x128xf32, #tpu.memory_space<vmem>>, vector<1x8x128xf32>
    %752 = vector.shape_cast %751 : vector<1x8x128xf32> to vector<8x128xf32>
    %753 = vector.shape_cast %743 : vector<8x128xf32> to vector<1x8x128xf32>
    tpu.vector_store %arg17[%c1_190, %c0_191, %c0_192], %753 {strides = array<i32>} : memref<2x8x128xf32, #tpu.memory_space<vmem>>, vector<1x8x128xf32>,
    %c1_i32_193 = arith.constant 1 : i32
    %754 = arith.cmpi eq, %arg1, %c1_i32_193 : i32
    %755 = arith.extui %754 : i1 to i32
    %c0_i32_194 = arith.constant 0 : i32
    %756 = arith.cmpi ne, %755, %c0_i32_194 : i32
    scf.if %756 {
      %c0_195 = arith.constant 0 : index
      %c0_196 = arith.constant 0 : index
      %c0_197 = arith.constant 0 : index
      %757 = vector.load %arg16[%c0_195, %c0_196, %c0_197] : memref<2x8x128xf32, #tpu.memory_space<vmem>>, vector<2x8x128xf32>
      %c0_198 = arith.constant 0 : index
      %c0_199 = arith.constant 0 : index
      %c0_200 = arith.constant 0 : index
      %758 = vector.load %arg14[%c0_198, %c0_199, %c0_200] : memref<2x8x128xf32, #tpu.memory_space<vmem>>, vector<2x8x128xf32>
      tpu.vector_store %arg14[%c0_198, %c0_199, %c0_200], %757 {strides = array<i32>} : memref<2x8x128xf32, #tpu.memory_space<vmem>>, vector<2x8x128xf32>,
      %c0_201 = arith.constant 0 : index
      %c0_202 = arith.constant 0 : index
      %c0_203 = arith.constant 0 : index
      %759 = vector.load %arg17[%c0_201, %c0_202, %c0_203] : memref<2x8x128xf32, #tpu.memory_space<vmem>>, vector<2x8x128xf32>
      %c0_204 = arith.constant 0 : index
      %c0_205 = arith.constant 0 : index
      %c0_206 = arith.constant 0 : index
      %760 = vector.load %arg15[%c0_204, %c0_205, %c0_206] : memref<2x8x128xf32, #tpu.memory_space<vmem>>, vector<2x8x128xf32>
      tpu.vector_store %arg15[%c0_204, %c0_205, %c0_206], %759 {strides = array<i32>} : memref<2x8x128xf32, #tpu.memory_space<vmem>>, vector<2x8x128xf32>,
      %c1_207 = arith.constant 1 : index
      %c0_208 = arith.constant 0 : index
      %c0_209 = arith.constant 0 : index
      %761 = vector.load %arg16[%c1_207, %c0_208, %c0_209] : memref<2x8x128xf32, #tpu.memory_space<vmem>>, vector<1x8x128xf32>
      %762 = vector.shape_cast %761 : vector<1x8x128xf32> to vector<8x128xf32>
      %763 = arith.truncf %762 : vector<8x128xf32> to vector<8x128xbf16>
      %c0_210 = arith.constant 0 : index
      %c0_211 = arith.constant 0 : index
      %764 = vector.load %arg11[%c0_210, %c0_211] : memref<128x128xbf16, #tpu.memory_space<vmem>>, vector<128x128xbf16>
      %cst_212 = arith.constant dense<0.000000e+00> : vector<8x128xf32>
      %765 = tpu.matmul %763, %764, %cst_212 {dimension_numbers = #tpu.dot_dimension_numbers<[1], [0], [0], [1], [0, 0, 1, 1], [], []>} : vector<8x128xbf16>, vector<128x128xbf16>, vector<8x128xf32> -> vector<8x128xf32>
      %c0_213 = arith.constant 0 : index
      %c0_214 = arith.constant 0 : index
      %766 = vector.load %arg12[%c0_213, %c0_214] : memref<1x128xf32, #tpu.memory_space<vmem>>, vector<1x128xf32>
      %767 = vector.broadcast %766 : vector<1x128xf32> to vector<8x128xf32>
      %768 = arith.addf %765, %767 : vector<8x128xf32>
      %769 = arith.negf %768 : vector<8x128xf32>
      %770 = math.exp %769 : vector<8x128xf32>
      %cst_215 = arith.constant 1.000000e+00 : f32
      %771 = vector.broadcast %cst_215 : f32 to vector<8x128xf32>
      %772 = arith.addf %771, %770 : vector<8x128xf32>
      %773 = arith.divf %771, %772 : vector<8x128xf32>
      %c0_216 = arith.constant 0 : index
      %c0_217 = arith.constant 0 : index
      %774 = vector.load %arg13[%c0_216, %c0_217] : memref<8x128xf32, #tpu.memory_space<vmem>>, vector<8x128xf32>
      tpu.vector_store %arg13[%c0_216, %c0_217], %773 {strides = array<i32>} : memref<8x128xf32, #tpu.memory_space<vmem>>, vector<8x128xf32>,
    } else {
    }
    return
  }
  func.func @transform_0(%arg0: i32, %arg1: i32) -> (i32, i32) {
    %c0_i32 = arith.constant 0 : i32
    %c0_i32_0 = arith.constant 0 : i32
    return %arg0, %c0_i32 : i32, i32
  }
  func.func @transform_1(%arg0: i32, %arg1: i32) -> (i32, i32, i32) {
    %c0_i32 = arith.constant 0 : i32
    %c0_i32_0 = arith.constant 0 : i32
    return %arg1, %arg0, %c0_i32 : i32, i32, i32
  }
  func.func @transform_2(%arg0: i32, %arg1: i32) -> (i32, i32) {
    %c0_i32 = arith.constant 0 : i32
    %c0_i32_0 = arith.constant 0 : i32
    %c0_i32_1 = arith.constant 0 : i32
    return %c0_i32, %c0_i32_0 : i32, i32
  }
  func.func @transform_3(%arg0: i32, %arg1: i32) -> (i32, i32) {
    %c0_i32 = arith.constant 0 : i32
    %c0_i32_0 = arith.constant 0 : i32
    %c0_i32_1 = arith.constant 0 : i32
    return %c0_i32, %c0_i32_0 : i32, i32
  }
  func.func @transform_4(%arg0: i32, %arg1: i32) -> (i32, i32, i32) {
    %c0_i32 = arith.constant 0 : i32
    %c0_i32_0 = arith.constant 0 : i32
    %c0_i32_1 = arith.constant 0 : i32
    %c0_i32_2 = arith.constant 0 : i32
    return %c0_i32, %c0_i32_0, %c0_i32_1 : i32, i32, i32
  }
  func.func @transform_5(%arg0: i32, %arg1: i32) -> (i32, i32, i32) {
    %c0_i32 = arith.constant 0 : i32
    %c0_i32_0 = arith.constant 0 : i32
    %c0_i32_1 = arith.constant 0 : i32
    %c0_i32_2 = arith.constant 0 : i32
    return %c0_i32, %c0_i32_0, %c0_i32_1 : i32, i32, i32
  }
  func.func @transform_6(%arg0: i32, %arg1: i32) -> (i32, i32, i32) {
    %c0_i32 = arith.constant 0 : i32
    %c0_i32_0 = arith.constant 0 : i32
    %c0_i32_1 = arith.constant 0 : i32
    %c0_i32_2 = arith.constant 0 : i32
    return %c0_i32, %c0_i32_0, %c0_i32_1 : i32, i32, i32
  }
  func.func @transform_7(%arg0: i32, %arg1: i32) -> (i32, i32, i32) {
    %c0_i32 = arith.constant 0 : i32
    %c0_i32_0 = arith.constant 0 : i32
    %c0_i32_1 = arith.constant 0 : i32
    return %c0_i32, %arg0, %c0_i32_0 : i32, i32, i32
  }
  func.func @transform_8(%arg0: i32, %arg1: i32) -> (i32, i32, i32) {
    %c0_i32 = arith.constant 0 : i32
    %c0_i32_0 = arith.constant 0 : i32
    %c0_i32_1 = arith.constant 0 : i32
    return %c0_i32, %arg0, %c0_i32_0 : i32, i32, i32
  }
  func.func @transform_9(%arg0: i32, %arg1: i32) -> (i32, i32) {
    %c0_i32 = arith.constant 0 : i32
    %c0_i32_0 = arith.constant 0 : i32
    %c0_i32_1 = arith.constant 0 : i32
    return %c0_i32, %c0_i32_0 : i32, i32
  }
  func.func @transform_10(%arg0: i32, %arg1: i32) -> (i32, i32) {
    %c0_i32 = arith.constant 0 : i32
    %c0_i32_0 = arith.constant 0 : i32
    %c0_i32_1 = arith.constant 0 : i32
    return %c0_i32, %c0_i32_0 : i32, i32
  }
  func.func @transform_11(%arg0: i32, %arg1: i32) -> (i32, i32) {
    %c0_i32 = arith.constant 0 : i32
    %c0_i32_0 = arith.constant 0 : i32
    return %arg0, %c0_i32 : i32, i32
  }
  func.func @transform_12(%arg0: i32, %arg1: i32) -> (i32, i32, i32) {
    %c0_i32 = arith.constant 0 : i32
    %c0_i32_0 = arith.constant 0 : i32
    %c0_i32_1 = arith.constant 0 : i32
    return %c0_i32, %arg0, %c0_i32_0 : i32, i32, i32
  }
  func.func @transform_13(%arg0: i32, %arg1: i32) -> (i32, i32, i32) {
    %c0_i32 = arith.constant 0 : i32
    %c0_i32_0 = arith.constant 0 : i32
    %c0_i32_1 = arith.constant 0 : i32
    return %c0_i32, %arg0, %c0_i32_0 : i32, i32, i32
  }
}

</mosaic_0001>

<llo_original>
// kernel: tpu_custom_call.1
$region0: #{tpu_custom_call.1}
  #allocation0 [shape = 'u32[]', space=smem, size = 0x4, offset = 0x4, fixed_abs, tag = 'smem constant byte address 0x4 - core index']
  #allocation1 [shape = 'u32[144,128]{1,0:T(1,128)}', space=vmem, size = 0x12000, scoped, tag = 'internal scratch']
  #allocation2 [shape = 'f32[2,8,128]{2,1,0:T(8,128)}', space=vmem, size = 0x2000, scoped, tag = 'scratch operand']
  #allocation3 [shape = 'f32[2,8,128]{2,1,0:T(8,128)}', space=vmem, size = 0x2000, scoped, tag = 'scratch operand']
  #allocation4 [shape = 'f32[8,8,128]{2,1,0:T(8,128)}', space=vmem, size = 0x8000, scoped, tag = 'scratch operand']
  #allocation5 [shape = 'f32[8,8,512]{2,1,0:T(8,128)}', space=vmem, size = 0x20000, scoped, tag = 'scratch operand']
  %s0 = inlined_call_operand.vmem [shape: s32[8,1], index: 0, kind: input, shape index: {}]
  %s1 = inlined_call_operand.hbm [shape: bf16[16,8,64], index: 1, kind: input, shape index: {}]
  %s2 = inlined_call_operand.hbm [shape: bf16[64,512], index: 2, kind: input, shape index: {}]
  %s3 = inlined_call_operand.hbm [shape: f32[1,512], index: 3, kind: input, shape index: {}]
  %s4 = inlined_call_operand.hbm [shape: bf16[1,128,512], index: 4, kind: input, shape index: {}]
  %s5 = inlined_call_operand.hbm [shape: f32[1,1,512], index: 5, kind: input, shape index: {}]
  %s6 = inlined_call_operand.hbm [shape: bf16[2,128,512], index: 6, kind: input, shape index: {}]
  %s7 = inlined_call_operand.vmem [shape: f32[2,8,128], index: 7, kind: input, shape index: {}]
  %s8 = inlined_call_operand.vmem [shape: f32[2,8,128], index: 8, kind: input, shape index: {}]
  %s9 = inlined_call_operand.hbm [shape: bf16[128,128], index: 9, kind: input, shape index: {}]
  %s10 = inlined_call_operand.vmem [shape: f32[1,128], index: 10, kind: input, shape index: {}]
  %s11 = inlined_call_operand.hbm [shape: f32[8,128], index: 11, kind: output, shape index: {0}]
  %s12 = inlined_call_operand.hbm [shape: f32[2,8,128], index: 12, kind: output, shape index: {1}]
  %s13 = inlined_call_operand.hbm [shape: f32[2,8,128], index: 13, kind: output, shape index: {2}]
  %14 = xla_tuple %s11, %s12, %s13
  %s15 = sld [smem:[#allocation0]]
  $region129: #{tpu_custom_call.1} parent=0
    _
  %s17 = ssub.s32 1, %s15
  %s18 = scalar_select 0, %s17, %s15
  $region1: #{tpu_custom_call.1} parent=0
    #allocation6 [shape = 'u8[32768]{0}', space=vmem, size = 0x8000, scoped, tag = 'input window, operand 1']
    #allocation7 [shape = 's32[2]{0}', space=sflag, size = 0x8, scoped, tag = 'scoped memory for tpu_custom_call.1']
    #allocation8 [shape = 's32[2]{0}', space=sflag, size = 0x8, scoped, tag = 'scoped memory for tpu_custom_call.1']
    #allocation9 [shape = 'u8[65536]{0}', space=vmem, size = 0x10000, scoped, tag = 'input window, operand 2, single buffered']
    #allocation10 [shape = 's32[1]{0}', space=sflag, size = 0x4, scoped, tag = 'scoped memory for tpu_custom_call.1']
    #allocation11 [shape = 'u8[2048]{0}', space=vmem, size = 0x800, scoped, tag = 'input window, operand 3, single buffered']
    #allocation12 [shape = 'u8[131072]{0}', space=vmem, size = 0x20000, scoped, tag = 'input window, operand 4, single buffered']
    #allocation13 [shape = 's32[1]{0}', space=sflag, size = 0x4, scoped, tag = 'scoped memory for tpu_custom_call.1']
    #allocation14 [shape = 'u8[2048]{0}', space=vmem, size = 0x800, scoped, tag = 'input window, operand 5, single buffered']
    #allocation15 [shape = 'u8[262144]{0}', space=vmem, size = 0x40000, scoped, tag = 'input window, operand 6, single buffered']
    #allocation16 [shape = 's32[1]{0}', space=sflag, size = 0x4, scoped, tag = 'scoped memory for tpu_custom_call.1']
    #allocation17 [shape = 'u8[32768]{0}', space=vmem, size = 0x8000, scoped, tag = 'input window, operand 9, single buffered']
    #allocation18 [shape = 'u8[4096]{0}', space=vmem, size = 0x1000, scoped, tag = 'output window, operand 0, single buffered']
    #allocation19 [shape = 'u8[8192]{0}', space=vmem, size = 0x2000, scoped, tag = 'output window, operand 1, single buffered']
    #allocation20 [shape = 's32[1]{0}', space=sflag, size = 0x4, scoped, tag = 'scoped memory for tpu_custom_call.1']
    #allocation21 [shape = 'u8[8192]{0}', space=vmem, size = 0x2000, scoped, tag = 'output window, operand 2, single buffered']
    %19 = vsyncpa [#allocation7], 0
    %s20 = scalar_lea.sflag [#allocation7], 1
    %21 = vsyncpa %s20, 0
    %22 = vsyncpa [#allocation10], 0
    %23 = vsyncpa [#allocation13], 0
    %24 = vsyncpa [#allocation16], 0
    %25 = vsyncpa [#allocation8], 0
    %26 = vsyncpa [#allocation20], 0
    loop: start=0, step=1, limit=4
    $region2: #{tpu_custom_call.1} parent=1 // loop_pre_header
      _
    $region3: #{tpu_custom_call.1} parent=1 // loop_header
      %s28 = sphi 0, %s32
      %p29 = scmp.ge.s32.totalorder %s28, 4
      %s35 = sphi 0, %s47
      %s36 = sphi 0, %s43
      %s37 = sphi 0, %s35
      %s38 = sphi 0, %s36
      %s39 = sphi 0, %s37
      %s40 = sphi 0, %s38
      %s50 = sphi 0, %s52
      %s53 = sphi 0, %s50
      %s54 = sphi 0, %s53
      %s70 = sphi 0, %s54
      %s78 = sphi 0, %s80
      %s81 = sphi 0, %s78
      %s82 = sphi 0, %s81
      %s98 = sphi 0, %s82
      %s102 = sphi 0, %s102
      %s104 = sphi 0, %s102
      %s105 = sphi 0, %s104
      %s119 = sphi 0, %s105
      %s123 = sphi 0, %s123
      %s125 = sphi 0, %s123
      %s126 = sphi 0, %s125
      %s140 = sphi 0, %s126
      %s144 = sphi 0, %s144
      %s146 = sphi 0, %s144
      %s147 = sphi 0, %s146
      %s161 = sphi 0, %s147
      %s165 = sphi 0, %s165
      %s167 = sphi 0, %s165
      %s168 = sphi 0, %s167
      %s182 = sphi 0, %s168
      %s186 = sphi 0, %s186
      %s188 = sphi 0, %s186
      %s189 = sphi 0, %s188
      %s203 = sphi 0, %s189
      %s209 = sphi 0, %s211
      %s212 = sphi 0, %s209
      %s213 = sphi 0, %s212
      %s229 = sphi 0, %s213
      %s235 = sphi 0, %s237
      %s238 = sphi 0, %s235
      %s239 = sphi 0, %s238
      %s255 = sphi 0, %s239
      %s259 = sphi 0, %s259
      %s261 = sphi 0, %s259
      %s262 = sphi 0, %s261
      %s276 = sphi 0, %s262
      %s280 = sphi 0, %s280
      %s282 = sphi 0, %s280
      %s283 = sphi 0, %s282
      %s297 = sphi 0, %s283
      %s303 = sphi 0, %s305
      %s306 = sphi 0, %s303
      %s307 = sphi 0, %s306
      %s323 = sphi 0, %s307
      %s329 = sphi 0, %s331
      %s332 = sphi 0, %s329
      %s333 = sphi 0, %s332
      %s349 = sphi 0, %s333
      %s355 = sphi 0, %s357
      %s358 = sphi 0, %s355
      %s359 = sphi 0, %s358
      %s375 = sphi 0, %s359
    $region4: #{tpu_custom_call.1} parent=1 // loop_header_branch
      %31 = sbr.rel (%p29) target = $region8
    $region5: #{tpu_custom_call.1} parent=1 // loop_body
      %s33 = ssub.s32 %s28, 1
      %s34 = ssub.s32 %s28, 2
      %s41 = sadd.s32 1, %s36
      %p42 = scmp.ge.s32.totalorder %s41, 2
      %s43 = scalar_select %p42, 0, %s41
      %s44 = sadd.s32 1, %s35
      %s45 = scalar_select %p42, %s44, %s35
      %p46 = scmp.ge.s32.totalorder %s45, 1
      %s47 = scalar_select %p46, 0, %s45
      %s48 = ssub.s32 %s35, %s47
      %p49 = scmp.eq.s32.totalorder %s48, 0
      %s51 = sadd.s32 %s50, 1
      %s52 = scalar_select %p49, %s50, %s51
      %p55 = pneg %p49
      %p56 = scmp.eq.s32.totalorder %s28, 1
      %p57 = por %p55, %p56
      %p58 = scmp.ne.s32.totalorder %s50, %s53
      %p59 = scmp.eq.s32.totalorder %s28, 0
      %p60 = por %p58, %p59
      %p61 = scmp.ne.s32.totalorder %s50, %s53
      %p62 = scmp.eq.s32.totalorder %s33, 1
      %p63 = por %p61, %p62
      %p64 = scmp.ne.s32.totalorder %s53, %s54
      %p65 = scmp.eq.s32.totalorder %s33, 0
      %p66 = por %p64, %p65
      %p67 = scmp.ne.s32.totalorder %s53, %s54
      %p68 = scmp.eq.s32.totalorder %s34, 1
      %p69 = por %p67, %p68
      %p71 = scmp.ne.s32.totalorder %s54, %s70
      %p72 = scmp.eq.s32.totalorder %s34, 0
      %p73 = por %p71, %p72
      %s74 = ssub.s32 %s36, %s43
      %s75 = ssub.s32 %s35, %s47
      %s76 = sor.u32 %s74, %s75
      %p77 = scmp.eq.s32.totalorder %s76, 0
      %s79 = sadd.s32 %s78, 1
      %s80 = scalar_select %p77, %s78, %s79
      %p83 = pneg %p77
      %p84 = scmp.eq.s32.totalorder %s28, 1
      %p85 = por %p83, %p84
      %p86 = scmp.ne.s32.totalorder %s78, %s81
      %p87 = scmp.eq.s32.totalorder %s28, 0
      %p88 = por %p86, %p87
      %p89 = scmp.ne.s32.totalorder %s78, %s81
      %p90 = scmp.eq.s32.totalorder %s33, 1
      %p91 = por %p89, %p90
      %p92 = scmp.ne.s32.totalorder %s81, %s82
      %p93 = scmp.eq.s32.totalorder %s33, 0
      %p94 = por %p92, %p93
      %p95 = scmp.ne.s32.totalorder %s81, %s82
      %p96 = scmp.eq.s32.totalorder %s34, 1
      %p97 = por %p95, %p96
      %p99 = scmp.ne.s32.totalorder %s82, %s98
      %p100 = scmp.eq.s32.totalorder %s34, 0
      %p101 = por %p99, %p100
      %s103 = sadd.s32 %s102, 1
      %p106 = scmp.eq.s32.totalorder %s28, 1
      %p107 = scmp.ne.s32.totalorder %s102, %s104
      %p108 = scmp.eq.s32.totalorder %s28, 0
      %p109 = por %p107, %p108
      %p110 = scmp.ne.s32.totalorder %s102, %s104
      %p111 = scmp.eq.s32.totalorder %s33, 1
      %p112 = por %p110, %p111
      %p113 = scmp.ne.s32.totalorder %s104, %s105
      %p114 = scmp.eq.s32.totalorder %s33, 0
      %p115 = por %p113, %p114
      %p116 = scmp.ne.s32.totalorder %s104, %s105
      %p117 = scmp.eq.s32.totalorder %s34, 1
      %p118 = por %p116, %p117
      %p120 = scmp.ne.s32.totalorder %s105, %s119
      %p121 = scmp.eq.s32.totalorder %s34, 0
      %p122 = por %p120, %p121
      %s124 = sadd.s32 %s123, 1
      %p127 = scmp.eq.s32.totalorder %s28, 1
      %p128 = scmp.ne.s32.totalorder %s123, %s125
      %p129 = scmp.eq.s32.totalorder %s28, 0
      %p130 = por %p128, %p129
      %p131 = scmp.ne.s32.totalorder %s123, %s125
      %p132 = scmp.eq.s32.totalorder %s33, 1
      %p133 = por %p131, %p132
      %p134 = scmp.ne.s32.totalorder %s125, %s126
      %p135 = scmp.eq.s32.totalorder %s33, 0
      %p136 = por %p134, %p135
      %p137 = scmp.ne.s32.totalorder %s125, %s126
      %p138 = scmp.eq.s32.totalorder %s34, 1
      %p139 = por %p137, %p138
      %p141 = scmp.ne.s32.totalorder %s126, %s140
      %p142 = scmp.eq.s32.totalorder %s34, 0
      %p143 = por %p141, %p142
      %s145 = sadd.s32 %s144, 1
      %p148 = scmp.eq.s32.totalorder %s28, 1
      %p149 = scmp.ne.s32.totalorder %s144, %s146
      %p150 = scmp.eq.s32.totalorder %s28, 0
      %p151 = por %p149, %p150
      %p152 = scmp.ne.s32.totalorder %s144, %s146
      %p153 = scmp.eq.s32.totalorder %s33, 1
      %p154 = por %p152, %p153
      %p155 = scmp.ne.s32.totalorder %s146, %s147
      %p156 = scmp.eq.s32.totalorder %s33, 0
      %p157 = por %p155, %p156
      %p158 = scmp.ne.s32.totalorder %s146, %s147
      %p159 = scmp.eq.s32.totalorder %s34, 1
      %p160 = por %p158, %p159
      %p162 = scmp.ne.s32.totalorder %s147, %s161
      %p163 = scmp.eq.s32.totalorder %s34, 0
      %p164 = por %p162, %p163
      %s166 = sadd.s32 %s165, 1
      %p169 = scmp.eq.s32.totalorder %s28, 1
      %p170 = scmp.ne.s32.totalorder %s165, %s167
      %p171 = scmp.eq.s32.totalorder %s28, 0
      %p172 = por %p170, %p171
      %p173 = scmp.ne.s32.totalorder %s165, %s167
      %p174 = scmp.eq.s32.totalorder %s33, 1
      %p175 = por %p173, %p174
      %p176 = scmp.ne.s32.totalorder %s167, %s168
      %p177 = scmp.eq.s32.totalorder %s33, 0
      %p178 = por %p176, %p177
      %p179 = scmp.ne.s32.totalorder %s167, %s168
      %p180 = scmp.eq.s32.totalorder %s34, 1
      %p181 = por %p179, %p180
      %p183 = scmp.ne.s32.totalorder %s168, %s182
      %p184 = scmp.eq.s32.totalorder %s34, 0
      %p185 = por %p183, %p184
      %s187 = sadd.s32 %s186, 1
      %p190 = scmp.eq.s32.totalorder %s28, 1
      %p191 = scmp.ne.s32.totalorder %s186, %s188
      %p192 = scmp.eq.s32.totalorder %s28, 0
      %p193 = por %p191, %p192
      %p194 = scmp.ne.s32.totalorder %s186, %s188
      %p195 = scmp.eq.s32.totalorder %s33, 1
      %p196 = por %p194, %p195
      %p197 = scmp.ne.s32.totalorder %s188, %s189
      %p198 = scmp.eq.s32.totalorder %s33, 0
      %p199 = por %p197, %p198
      %p200 = scmp.ne.s32.totalorder %s188, %s189
      %p201 = scmp.eq.s32.totalorder %s34, 1
      %p202 = por %p200, %p201
      %p204 = scmp.ne.s32.totalorder %s189, %s203
      %p205 = scmp.eq.s32.totalorder %s34, 0
      %p206 = por %p204, %p205
      %s207 = ssub.s32 %s35, %s47
      %p208 = scmp.eq.s32.totalorder %s207, 0
      %s210 = sadd.s32 %s209, 1
      %s211 = scalar_select %p208, %s209, %s210
      %p214 = pneg %p208
      %p215 = scmp.eq.s32.totalorder %s28, 1
      %p216 = por %p214, %p215
      %p217 = scmp.ne.s32.totalorder %s209, %s212
      %p218 = scmp.eq.s32.totalorder %s28, 0
      %p219 = por %p217, %p218
      %p220 = scmp.ne.s32.totalorder %s209, %s212
      %p221 = scmp.eq.s32.totalorder %s33, 1
      %p222 = por %p220, %p221
      %p223 = scmp.ne.s32.totalorder %s212, %s213
      %p224 = scmp.eq.s32.totalorder %s33, 0
      %p225 = por %p223, %p224
      %p226 = scmp.ne.s32.totalorder %s212, %s213
      %p227 = scmp.eq.s32.totalorder %s34, 1
      %p228 = por %p226, %p227
      %p230 = scmp.ne.s32.totalorder %s213, %s229
      %p231 = scmp.eq.s32.totalorder %s34, 0
      %p232 = por %p230, %p231
      %s233 = ssub.s32 %s35, %s47
      %p234 = scmp.eq.s32.totalorder %s233, 0
      %s236 = sadd.s32 %s235, 1
      %s237 = scalar_select %p234, %s235, %s236
      %p240 = pneg %p234
      %p241 = scmp.eq.s32.totalorder %s28, 1
      %p242 = por %p240, %p241
      %p243 = scmp.ne.s32.totalorder %s235, %s238
      %p244 = scmp.eq.s32.totalorder %s28, 0
      %p245 = por %p243, %p244
      %p246 = scmp.ne.s32.totalorder %s235, %s238
      %p247 = scmp.eq.s32.totalorder %s33, 1
      %p248 = por %p246, %p247
      %p249 = scmp.ne.s32.totalorder %s238, %s239
      %p250 = scmp.eq.s32.totalorder %s33, 0
      %p251 = por %p249, %p250
      %p252 = scmp.ne.s32.totalorder %s238, %s239
      %p253 = scmp.eq.s32.totalorder %s34, 1
      %p254 = por %p252, %p253
      %p256 = scmp.ne.s32.totalorder %s239, %s255
      %p257 = scmp.eq.s32.totalorder %s34, 0
      %p258 = por %p256, %p257
      %s260 = sadd.s32 %s259, 1
      %p263 = scmp.eq.s32.totalorder %s28, 1
      %p264 = scmp.ne.s32.totalorder %s259, %s261
      %p265 = scmp.eq.s32.totalorder %s28, 0
      %p266 = por %p264, %p265
      %p267 = scmp.ne.s32.totalorder %s259, %s261
      %p268 = scmp.eq.s32.totalorder %s33, 1
      %p269 = por %p267, %p268
      %p270 = scmp.ne.s32.totalorder %s261, %s262
      %p271 = scmp.eq.s32.totalorder %s33, 0
      %p272 = por %p270, %p271
      %p273 = scmp.ne.s32.totalorder %s261, %s262
      %p274 = scmp.eq.s32.totalorder %s34, 1
      %p275 = por %p273, %p274
      %p277 = scmp.ne.s32.totalorder %s262, %s276
      %p278 = scmp.eq.s32.totalorder %s34, 0
      %p279 = por %p277, %p278
      %s281 = sadd.s32 %s280, 1
      %p284 = scmp.eq.s32.totalorder %s28, 1
      %p285 = scmp.ne.s32.totalorder %s280, %s282
      %p286 = scmp.eq.s32.totalorder %s28, 0
      %p287 = por %p285, %p286
      %p288 = scmp.ne.s32.totalorder %s280, %s282
      %p289 = scmp.eq.s32.totalorder %s33, 1
      %p290 = por %p288, %p289
      %p291 = scmp.ne.s32.totalorder %s282, %s283
      %p292 = scmp.eq.s32.totalorder %s33, 0
      %p293 = por %p291, %p292
      %p294 = scmp.ne.s32.totalorder %s282, %s283
      %p295 = scmp.eq.s32.totalorder %s34, 1
      %p296 = por %p294, %p295
      %p298 = scmp.ne.s32.totalorder %s283, %s297
      %p299 = scmp.eq.s32.totalorder %s34, 0
      %p300 = por %p298, %p299
      %s301 = ssub.s32 %s35, %s47
      %p302 = scmp.eq.s32.totalorder %s301, 0
      %s304 = sadd.s32 %s303, 1
      %s305 = scalar_select %p302, %s303, %s304
      %p308 = pneg %p302
      %p309 = scmp.eq.s32.totalorder %s28, 1
      %p310 = por %p308, %p309
      %p311 = scmp.ne.s32.totalorder %s303, %s306
      %p312 = scmp.eq.s32.totalorder %s28, 0
      %p313 = por %p311, %p312
      %p314 = scmp.ne.s32.totalorder %s303, %s306
      %p315 = scmp.eq.s32.totalorder %s33, 1
      %p316 = por %p314, %p315
      %p317 = scmp.ne.s32.totalorder %s306, %s307
      %p318 = scmp.eq.s32.totalorder %s33, 0
      %p319 = por %p317, %p318
      %p320 = scmp.ne.s32.totalorder %s306, %s307
      %p321 = scmp.eq.s32.totalorder %s34, 1
      %p322 = por %p320, %p321
      %p324 = scmp.ne.s32.totalorder %s307, %s323
      %p325 = scmp.eq.s32.totalorder %s34, 0
      %p326 = por %p324, %p325
      %s327 = ssub.s32 %s35, %s47
      %p328 = scmp.eq.s32.totalorder %s327, 0
      %s330 = sadd.s32 %s329, 1
      %s331 = scalar_select %p328, %s329, %s330
      %p334 = pneg %p328
      %p335 = scmp.eq.s32.totalorder %s28, 1
      %p336 = por %p334, %p335
      %p337 = scmp.ne.s32.totalorder %s329, %s332
      %p338 = scmp.eq.s32.totalorder %s28, 0
      %p339 = por %p337, %p338
      %p340 = scmp.ne.s32.totalorder %s329, %s332
      %p341 = scmp.eq.s32.totalorder %s33, 1
      %p342 = por %p340, %p341
      %p343 = scmp.ne.s32.totalorder %s332, %s333
      %p344 = scmp.eq.s32.totalorder %s33, 0
      %p345 = por %p343, %p344
      %p346 = scmp.ne.s32.totalorder %s332, %s333
      %p347 = scmp.eq.s32.totalorder %s34, 1
      %p348 = por %p346, %p347
      %p350 = scmp.ne.s32.totalorder %s333, %s349
      %p351 = scmp.eq.s32.totalorder %s34, 0
      %p352 = por %p350, %p351
      %s353 = ssub.s32 %s35, %s47
      %p354 = scmp.eq.s32.totalorder %s353, 0
      %s356 = sadd.s32 %s355, 1
      %s357 = scalar_select %p354, %s355, %s356
      %p360 = pneg %p354
      %p361 = scmp.eq.s32.totalorder %s28, 1
      %p362 = por %p360, %p361
      %p363 = scmp.ne.s32.totalorder %s355, %s358
      %p364 = scmp.eq.s32.totalorder %s28, 0
      %p365 = por %p363, %p364
      %p366 = scmp.ne.s32.totalorder %s355, %s358
      %p367 = scmp.eq.s32.totalorder %s33, 1
      %p368 = por %p366, %p367
      %p369 = scmp.ne.s32.totalorder %s358, %s359
      %p370 = scmp.eq.s32.totalorder %s33, 0
      %p371 = por %p369, %p370
      %p372 = scmp.ne.s32.totalorder %s358, %s359
      %p373 = scmp.eq.s32.totalorder %s34, 1
      %p374 = por %p372, %p373
      %p376 = scmp.ne.s32.totalorder %s359, %s375
      %p377 = scmp.eq.s32.totalorder %s34, 0
      %p378 = por %p376, %p377
      %p379 = scmp.le.s32.totalorder 1, %s28
      %p380 = scmp.lt.s32.totalorder %s28, 3
      %p381 = pnand %p379, %p380
      %p382 = pneg %p381
      // Predicated region
      $region9: #{tpu_custom_call.1} parent=5 // pred_check
        _
      $region10: #{tpu_custom_call.1} parent=5 // pred_check_branch
        %384 = sbr.rel (%p381) target = $region12
      $region11: #{tpu_custom_call.1} parent=5 // pred_region
        %s385 = ssub.s32 %s28, 1
        // Predicated region
        $region13: #{tpu_custom_call.1} parent=11 // pred_check
          %p386 = pneg %p66
        $region14: #{tpu_custom_call.1} parent=11 // pred_check_branch
          %388 = sbr.rel (%p386) target = $region16
        $region15: #{tpu_custom_call.1} parent=11 // pred_region
          %p389 = scmp.lt.s32.totalorder %s37, 0
          %s390 = scalar_select %p389, %s37, 0
          %s391 = smul.addr %s390, 8
          %s392 = scalar_lea.vmem %s0, %s391
        $region16: #{tpu_custom_call.1} parent=11 // pred_fallthru
          _
        // Predicated region
        $region17: #{tpu_custom_call.1} parent=11 // pred_check
          %p393 = pneg %p115
        $region18: #{tpu_custom_call.1} parent=11 // pred_check_branch
          %395 = sbr.rel (%p393) target = $region20
        $region19: #{tpu_custom_call.1} parent=11 // pred_region
          %s397 = ssub.s32 2048, 2048
          %398 = vsyncadd [#allocation10], %s397
          %s399 = sshll.u32 [#allocation9], 4
          %s400 = int_to_ptr.vmem [resolvable:$true] %s399
          %405 = dma.hbm_to_vmem [thread:$0]  %s2, 2048, %s400, [#allocation10], 256, 256, 16
        $region20: #{tpu_custom_call.1} parent=11 // pred_fallthru
          _
        // Predicated region
        $region21: #{tpu_custom_call.1} parent=11 // pred_check
          %p406 = pneg %p136
        $region22: #{tpu_custom_call.1} parent=11 // pred_check_branch
          %408 = sbr.rel (%p406) target = $region24
        $region23: #{tpu_custom_call.1} parent=11 // pred_region
          %s410 = ssub.s32 64, 64
          %411 = vsyncadd [#allocation10], %s410
          %s413 = sshll.u32 [#allocation11], 4
          %s414 = int_to_ptr.vmem [resolvable:$true] %s413
          %416 = dma.hbm_to_vmem [thread:$0]  %s3, 64, %s414, [#allocation10]
        $region24: #{tpu_custom_call.1} parent=11 // pred_fallthru
          _
        // Predicated region
        $region25: #{tpu_custom_call.1} parent=11 // pred_check
          %p417 = pneg %p157
        $region26: #{tpu_custom_call.1} parent=11 // pred_check_branch
          %419 = sbr.rel (%p417) target = $region28
        $region27: #{tpu_custom_call.1} parent=11 // pred_region
          %s421 = ssub.s32 4096, 4096
          %422 = vsyncadd [#allocation13], %s421
          %s423 = sshll.u32 [#allocation12], 4
          %s424 = int_to_ptr.vmem [resolvable:$true] %s423
          %429 = dma.hbm_to_vmem [thread:$0]  %s4, 4096, %s424, [#allocation13], 256, 256, 16
        $region28: #{tpu_custom_call.1} parent=11 // pred_fallthru
          _
        // Predicated region
        $region29: #{tpu_custom_call.1} parent=11 // pred_check
          %p430 = pneg %p178
        $region30: #{tpu_custom_call.1} parent=11 // pred_check_branch
          %432 = sbr.rel (%p430) target = $region32
        $region31: #{tpu_custom_call.1} parent=11 // pred_region
          %s434 = ssub.s32 64, 64
          %435 = vsyncadd [#allocation13], %s434
          %s437 = sshll.u32 [#allocation14], 4
          %s438 = int_to_ptr.vmem [resolvable:$true] %s437
          %440 = dma.hbm_to_vmem [thread:$0]  %s5, 64, %s438, [#allocation13]
        $region32: #{tpu_custom_call.1} parent=11 // pred_fallthru
          _
        // Predicated region
        $region33: #{tpu_custom_call.1} parent=11 // pred_check
          %p441 = pneg %p199
        $region34: #{tpu_custom_call.1} parent=11 // pred_check_branch
          %443 = sbr.rel (%p441) target = $region36
        $region35: #{tpu_custom_call.1} parent=11 // pred_region
          %s445 = ssub.s32 8192, 8192
          %446 = vsyncadd [#allocation16], %s445
          %s447 = sshll.u32 [#allocation15], 4
          %s448 = int_to_ptr.vmem [resolvable:$true] %s447
          %453 = dma.hbm_to_vmem [thread:$0]  %s6, 8192, %s448, [#allocation16], 256, 256, 16
        $region36: #{tpu_custom_call.1} parent=11 // pred_fallthru
          _
        // Predicated region
        $region37: #{tpu_custom_call.1} parent=11 // pred_check
          %p454 = pneg %p225
        $region38: #{tpu_custom_call.1} parent=11 // pred_check_branch
          %456 = sbr.rel (%p454) target = $region40
        $region39: #{tpu_custom_call.1} parent=11 // pred_region
          %p457 = scmp.lt.s32.totalorder %s37, 0
          %s458 = scalar_select %p457, %s37, 0
          %s459 = smul.addr %s458, 8
          %s460 = scalar_lea.vmem %s7, %s459
        $region40: #{tpu_custom_call.1} parent=11 // pred_fallthru
          _
        // Predicated region
        $region41: #{tpu_custom_call.1} parent=11 // pred_check
          %p461 = pneg %p251
        $region42: #{tpu_custom_call.1} parent=11 // pred_check_branch
          %463 = sbr.rel (%p461) target = $region44
        $region43: #{tpu_custom_call.1} parent=11 // pred_region
          %p464 = scmp.lt.s32.totalorder %s37, 0
          %s465 = scalar_select %p464, %s37, 0
          %s466 = smul.addr %s465, 8
          %s467 = scalar_lea.vmem %s8, %s466
        $region44: #{tpu_custom_call.1} parent=11 // pred_fallthru
          _
        // Predicated region
        $region45: #{tpu_custom_call.1} parent=11 // pred_check
          %p468 = pneg %p272
        $region46: #{tpu_custom_call.1} parent=11 // pred_check_branch
          %470 = sbr.rel (%p468) target = $region48
        $region47: #{tpu_custom_call.1} parent=11 // pred_region
          %s472 = ssub.s32 1024, 1024
          %473 = vsyncadd [#allocation16], %s472
          %s474 = sshll.u32 [#allocation17], 4
          %s475 = int_to_ptr.vmem [resolvable:$true] %s474
          %480 = dma.hbm_to_vmem [thread:$0]  %s9, 1024, %s475, [#allocation16], 64, 64, 4
        $region48: #{tpu_custom_call.1} parent=11 // pred_fallthru
          _
        // Predicated region
        $region49: #{tpu_custom_call.1} parent=11 // pred_check
          %p481 = pneg %p293
        $region50: #{tpu_custom_call.1} parent=11 // pred_check_branch
          %483 = sbr.rel (%p481) target = $region52
        $region51: #{tpu_custom_call.1} parent=11 // pred_region
          _
        $region52: #{tpu_custom_call.1} parent=11 // pred_fallthru
          _
      $region12: #{tpu_custom_call.1} parent=5 // pred_fallthru
        _
      %p484 = scmp.lt.s32.totalorder %s28, 2
      // Predicated region
      $region53: #{tpu_custom_call.1} parent=5 // pred_check
        %p485 = pneg %p484
      $region54: #{tpu_custom_call.1} parent=5 // pred_check_branch
        %487 = sbr.rel (%p485) target = $region56
      $region55: #{tpu_custom_call.1} parent=5 // pred_region
        // Predicated region
        $region57: #{tpu_custom_call.1} parent=55 // pred_check
          %p488 = pneg %p88
        $region58: #{tpu_custom_call.1} parent=55 // pred_check_branch
          %490 = sbr.rel (%p488) target = $region60
        $region59: #{tpu_custom_call.1} parent=55 // pred_region
          %s491 = sand.u32 %s78, 1
          %s492 = scalar_lea.sflag [#allocation7], %s491
          %s493 = sand.u32 %s78, 1
          %s494 = smul.addr %s493, 32
          %s495 = scalar_lea.vmem [#allocation6], %s494
          %s496 = smul.u32 8, %s36
          %s498 = ssub.s32 512, 512
          %499 = vsyncadd %s492, %s498
          %s500 = sadd.s32 %s35, %s496
          %s501 = smul.addr %s500, 64
          %s502 = scalar_lea.hbm %s1, %s501
          %s503 = sshll.u32 %s495, 4
          %s504 = int_to_ptr.vmem [resolvable:$true] %s503
          %509 = dma.hbm_to_vmem [thread:$0]  %s502, 512, %s504, %s492, 64, 64, 4
        $region60: #{tpu_custom_call.1} parent=55 // pred_fallthru
          _
      $region56: #{tpu_custom_call.1} parent=5 // pred_fallthru
        _
      %p510 = scmp.le.s32.totalorder 1, %s28
      %p511 = scmp.lt.s32.totalorder %s28, 3
      %p512 = pnand %p510, %p511
      %p513 = pneg %p512
      // Predicated region
      $region61: #{tpu_custom_call.1} parent=5 // pred_check
        _
      $region62: #{tpu_custom_call.1} parent=5 // pred_check_branch
        %515 = sbr.rel (%p512) target = $region64
      $region63: #{tpu_custom_call.1} parent=5 // pred_region
        %s516 = ssub.s32 %s28, 1
        %s517 = sand.u32 %s81, 1
        %s518 = scalar_lea.sflag [#allocation7], %s517
        %s519 = sand.u32 %s81, 1
        %s520 = smul.addr %s519, 32
        %s521 = scalar_lea.vmem [#allocation6], %s520
        // Predicated region
        $region65: #{tpu_custom_call.1} parent=63 // pred_check
          %p522 = pneg %p94
        $region66: #{tpu_custom_call.1} parent=63 // pred_check_branch
          %524 = sbr.rel (%p522) target = $region68
        $region67: #{tpu_custom_call.1} parent=63 // pred_region
          %525 = dma.done %s518, 512
        $region68: #{tpu_custom_call.1} parent=63 // pred_fallthru
          _
        // Predicated region
        $region69: #{tpu_custom_call.1} parent=63 // pred_check
          %p526 = pneg %p115
        $region70: #{tpu_custom_call.1} parent=63 // pred_check_branch
          %528 = sbr.rel (%p526) target = $region72
        $region71: #{tpu_custom_call.1} parent=63 // pred_region
          %529 = dma.done [#allocation10], 2048
        $region72: #{tpu_custom_call.1} parent=63 // pred_fallthru
          _
        // Predicated region
        $region73: #{tpu_custom_call.1} parent=63 // pred_check
          %p530 = pneg %p136
        $region74: #{tpu_custom_call.1} parent=63 // pred_check_branch
          %532 = sbr.rel (%p530) target = $region76
        $region75: #{tpu_custom_call.1} parent=63 // pred_region
          %533 = dma.done [#allocation10], 64
        $region76: #{tpu_custom_call.1} parent=63 // pred_fallthru
          _
        // Predicated region
        $region77: #{tpu_custom_call.1} parent=63 // pred_check
          %p534 = pneg %p157
        $region78: #{tpu_custom_call.1} parent=63 // pred_check_branch
          %536 = sbr.rel (%p534) target = $region80
        $region79: #{tpu_custom_call.1} parent=63 // pred_region
          %537 = dma.done [#allocation13], 4096
        $region80: #{tpu_custom_call.1} parent=63 // pred_fallthru
          _
        // Predicated region
        $region81: #{tpu_custom_call.1} parent=63 // pred_check
          %p538 = pneg %p178
        $region82: #{tpu_custom_call.1} parent=63 // pred_check_branch
          %540 = sbr.rel (%p538) target = $region84
        $region83: #{tpu_custom_call.1} parent=63 // pred_region
          %541 = dma.done [#allocation13], 64
        $region84: #{tpu_custom_call.1} parent=63 // pred_fallthru
          _
        // Predicated region
        $region85: #{tpu_custom_call.1} parent=63 // pred_check
          %p542 = pneg %p199
        $region86: #{tpu_custom_call.1} parent=63 // pred_check_branch
          %544 = sbr.rel (%p542) target = $region88
        $region87: #{tpu_custom_call.1} parent=63 // pred_region
          %545 = dma.done [#allocation16], 8192
        $region88: #{tpu_custom_call.1} parent=63 // pred_fallthru
          _
        // Predicated region
        $region89: #{tpu_custom_call.1} parent=63 // pred_check
          %p546 = pneg %p272
        $region90: #{tpu_custom_call.1} parent=63 // pred_check_branch
          %548 = sbr.rel (%p546) target = $region92
        $region91: #{tpu_custom_call.1} parent=63 // pred_region
          %549 = dma.done [#allocation16], 1024
        $region92: #{tpu_custom_call.1} parent=63 // pred_fallthru
          _
        %p550 = scmp.lt.s32.totalorder %s37, 0
        %s551 = scalar_select %p550, %s37, 0
        %s552 = smul.addr %s551, 8
        %s553 = scalar_lea.vmem %s0, %s552
        %p554 = pneg %p66
        %p555 = pneg %p63
        %s556 = sand.u32 %s81, 1
        %s557 = scalar_lea.sflag [#allocation7], %s556
        %s558 = sand.u32 %s81, 1
        %s559 = smul.addr %s558, 32
        %s560 = scalar_lea.vmem [#allocation6], %s559
        %p561 = pneg %p94
        %p562 = pneg %p91
        %p563 = pneg %p115
        %p564 = pneg %p112
        %p565 = pneg %p136
        %p566 = pneg %p133
        %p567 = pneg %p157
        %p568 = pneg %p154
        %p569 = pneg %p178
        %p570 = pneg %p175
        %p571 = pneg %p199
        %p572 = pneg %p196
        %p573 = scmp.lt.s32.totalorder %s37, 0
        %s574 = scalar_select %p573, %s37, 0
        %s575 = smul.addr %s574, 8
        %s576 = scalar_lea.vmem %s7, %s575
        %p577 = pneg %p225
        %p578 = pneg %p222
        %p579 = scmp.lt.s32.totalorder %s37, 0
        %s580 = scalar_select %p579, %s37, 0
        %s581 = smul.addr %s580, 8
        %s582 = scalar_lea.vmem %s8, %s581
        %p583 = pneg %p251
        %p584 = pneg %p248
        %p585 = pneg %p272
        %p586 = pneg %p269
        %p587 = pneg %p293
        %p588 = pneg %p290
        %p589 = pneg %p319
        %p590 = pneg %p316
        %p591 = pneg %p345
        %p592 = pneg %p342
        %p593 = pneg %p371
        %p594 = pneg %p368
        %p595 = scmp.lt.s32.totalorder %s37, 0
        %s596 = scalar_select %p595, %s37, 0
        %s597 = smul.addr %s596, 8
        %s598 = scalar_lea.vmem %s0, %s597
        %s599 = smul.u32 8, %s38
        %p600 = scmp.lt.s32.totalorder %s37, 0
        %s601 = scalar_select %p600, %s37, 0
        %s602 = smul.addr %s601, 8
        %s603 = scalar_lea.vmem %s7, %s602
        %p604 = scmp.lt.s32.totalorder %s37, 0
        %s605 = scalar_select %p604, %s37, 0
        %s606 = smul.addr %s605, 8
        %s607 = scalar_lea.vmem %s8, %s606
        %p609 = scmp.eq.s32.totalorder %s38, 0
        // Predicated region
        $region93: #{tpu_custom_call.1} parent=63 // pred_check
          %p610 = pneg %p609
        $region94: #{tpu_custom_call.1} parent=63 // pred_check_branch
          %612 = sbr.rel (%p610) target = $region96
        $region95: #{tpu_custom_call.1} parent=63 // pred_region
          %v613 = vld [vmem:[%s603] sm:$0xff]
          %v614 = vld [vmem:[%s603 + $0x8] sm:$0xff]
          %615 = vst [vmem:[#allocation2] sm:$0xff] %v613
          %616 = vst [vmem:[#allocation2 + $0x8] sm:$0xff] %v614
          %v617 = vld [vmem:[%s607] sm:$0xff]
          %v618 = vld [vmem:[%s607 + $0x8] sm:$0xff]
          %619 = vst [vmem:[#allocation3] sm:$0xff] %v617
          %620 = vst [vmem:[#allocation3 + $0x8] sm:$0xff] %v618
        $region96: #{tpu_custom_call.1} parent=63 // pred_fallthru
          _
        %v621 = vld [vmem:[%s598] sm:$0xff]
        %s622 = smul.u32 %s38, 8
        %v623 = vld [vmem:[%s521] sm:$0xf]
        %v624 = vld [vmem:[%s521 + $0x4] sm:$0xf]
        %v625 = vld [vmem:[%s521 + $0x8] sm:$0xf]
        %v626 = vld [vmem:[%s521 + $0xc] sm:$0xf]
        %v627 = vld [vmem:[%s521 + $0x10] sm:$0xf]
        %v628 = vld [vmem:[%s521 + $0x14] sm:$0xf]
        %v629 = vld [vmem:[%s521 + $0x18] sm:$0xf]
        %v630 = vld [vmem:[%s521 + $0x1c] sm:$0xf]
        %v631 = vld [vmem:[#allocation9] sm:$0xff]
        %v632 = vld [vmem:[#allocation9 + $0x8] sm:$0xff]
        %v633 = vld [vmem:[#allocation9 + $0x10] sm:$0xff]
        %v634 = vld [vmem:[#allocation9 + $0x18] sm:$0xff]
        %v635 = vld [vmem:[#allocation9 + $0x20] sm:$0xff]
        %v636 = vld [vmem:[#allocation9 + $0x28] sm:$0xff]
        %v637 = vld [vmem:[#allocation9 + $0x30] sm:$0xff]
        %v638 = vld [vmem:[#allocation9 + $0x38] sm:$0xff]
        %v639 = vld [vmem:[#allocation9 + $0x40] sm:$0xff]
        %v640 = vld [vmem:[#allocation9 + $0x48] sm:$0xff]
        %v641 = vld [vmem:[#allocation9 + $0x50] sm:$0xff]
        %v642 = vld [vmem:[#allocation9 + $0x58] sm:$0xff]
        %v643 = vld [vmem:[#allocation9 + $0x60] sm:$0xff]
        %v644 = vld [vmem:[#allocation9 + $0x68] sm:$0xff]
        %v645 = vld [vmem:[#allocation9 + $0x70] sm:$0xff]
        %v646 = vld [vmem:[#allocation9 + $0x78] sm:$0xff]
        %v647 = vld [vmem:[#allocation11] sm:$0xf]
        %v649 = vlaneseq
        %v650 = vshrl.u32 %v649, 7
        %v651 = vsub.s32 0, %v650
        %v652 = vrot.slane %v647, %v651
        %v653 = vlaneseq
        %v654 = vshrl.u32 %v653, 7
        %v655 = vsub.s32 1, %v654
        %v656 = vrot.slane %v647, %v655
        %v657 = vlaneseq
        %v658 = vshrl.u32 %v657, 7
        %v659 = vsub.s32 2, %v658
        %v660 = vrot.slane %v647, %v659
        %v661 = vlaneseq
        %v662 = vshrl.u32 %v661, 7
        %v663 = vsub.s32 3, %v662
        %v664 = vrot.slane %v647, %v663
        %v677 = vunpack.c.l.b16 %v623
        %v678 = vunpack.c.l.b16 %v624
        %v679 = vunpack.c.l.b16 %v625
        %v680 = vunpack.c.l.b16 %v626
        %v681 = vunpack.c.l.b16 %v627
        %v682 = vunpack.c.l.b16 %v628
        %v683 = vunpack.c.l.b16 %v629
        %v684 = vunpack.c.l.b16 %v630
        %v685 = vpack.c.b16 %v678, %v677
        %v686 = vpack.c.b16 %v680, %v679
        %v687 = vpack.c.b16 %v682, %v681
        %v688 = vpack.c.b16 %v684, %v683
        %v705 = vunpack.c.l.b16 %v631
        %v706 = vunpack.c.h.b16 %v631
        %v707 = vunpack.c.l.b16 %v632
        %v708 = vunpack.c.h.b16 %v632
        %v709 = vunpack.c.l.b16 %v633
        %v710 = vunpack.c.h.b16 %v633
        %v711 = vunpack.c.l.b16 %v634
        %v712 = vunpack.c.h.b16 %v634
        %v713 = vunpack.c.l.b16 %v635
        %v714 = vunpack.c.h.b16 %v635
        %v715 = vunpack.c.l.b16 %v636
        %v716 = vunpack.c.h.b16 %v636
        %v717 = vunpack.c.l.b16 %v637
        %v718 = vunpack.c.h.b16 %v637
        %v719 = vunpack.c.l.b16 %v638
        %v720 = vunpack.c.h.b16 %v638
        %v721 = vunpack.c.l.b16 %v639
        %v722 = vunpack.c.h.b16 %v639
        %v723 = vunpack.c.l.b16 %v640
        %v724 = vunpack.c.h.b16 %v640
        %v725 = vunpack.c.l.b16 %v641
        %v726 = vunpack.c.h.b16 %v641
        %v727 = vunpack.c.l.b16 %v642
        %v728 = vunpack.c.h.b16 %v642
        %v729 = vunpack.c.l.b16 %v643
        %v730 = vunpack.c.h.b16 %v643
        %v731 = vunpack.c.l.b16 %v644
        %v732 = vunpack.c.h.b16 %v644
        %v733 = vunpack.c.l.b16 %v645
        %v734 = vunpack.c.h.b16 %v645
        %v735 = vunpack.c.l.b16 %v646
        %v736 = vunpack.c.h.b16 %v646
        %v737 = vpack.c.b16 %v709, %v705
        %v738 = vpack.c.b16 %v710, %v706
        %v739 = vpack.c.b16 %v711, %v707
        %v740 = vpack.c.b16 %v712, %v708
        %v741 = vpack.c.b16 %v717, %v713
        %v742 = vpack.c.b16 %v718, %v714
        %v743 = vpack.c.b16 %v719, %v715
        %v744 = vpack.c.b16 %v720, %v716
        %v745 = vpack.c.b16 %v725, %v721
        %v746 = vpack.c.b16 %v726, %v722
        %v747 = vpack.c.b16 %v727, %v723
        %v748 = vpack.c.b16 %v728, %v724
        %v749 = vpack.c.b16 %v733, %v729
        %v750 = vpack.c.b16 %v734, %v730
        %v751 = vpack.c.b16 %v735, %v731
        %v752 = vpack.c.b16 %v736, %v732
        %vm769 = vcmask 523264
        %v771 = vsel %vm769, %v685, 0
        %v774 = vsel %vm769, %v686, 0
        %v777 = vsel %vm769, %v687, 0
        %v780 = vsel %vm769, %v688, 0
        %782 = vmatprep.subr.bf16.mxu0 %v738
        %783 = vmatpush1.bf16.msra.mxu0 %v737
        %784 = vmatprep.subr.bf16.mxu0 %v742
        %785 = vmatpush1.bf16.msra.mxu0 %v741
        %786 = vmatprep.subr.bf16.mxu0 %v746
        %787 = vmatpush1.bf16.msra.mxu0 %v745
        %788 = vmatprep.subr.bf16.mxu0 %v750
        %789 = vmatpush1.bf16.msra.mxu0 %v749
        %790 = vmatprep.subr.bf16.mxu0 0
        %791 = vmatpush1.bf16.msra.mxu0 0
        %792 = vmatprep.subr.bf16.mxu0 0
        %793 = vmatpush1.bf16.msra.mxu0 0
        %794 = vmatprep.subr.bf16.mxu0 0
        %795 = vmatpush1.bf16.msra.mxu0 0
        %796 = vmatprep.subr.bf16.mxu0 0
        %797 = vmatpush1.bf16.msra.mxu0 0
        %798 = vmatprep.subr.bf16.mxu0 0
        %799 = vmatpush1.bf16.msra.mxu0 0
        %800 = vmatprep.subr.bf16.mxu0 0
        %801 = vmatpush1.bf16.msra.mxu0 0
        %802 = vmatprep.subr.bf16.mxu0 0
        %803 = vmatpush1.bf16.msra.mxu0 0
        %804 = vmatprep.subr.bf16.mxu0 0
        %805 = vmatpush1.bf16.msra.mxu0 0
        %806 = vmatprep.subr.bf16.mxu0 0
        %807 = vmatpush1.bf16.msra.mxu0 0
        %808 = vmatprep.subr.bf16.mxu0 0
        %809 = vmatpush1.bf16.msra.mxu0 0
        %810 = vmatprep.subr.bf16.mxu0 0
        %811 = vmatpush1.bf16.msra.mxu0 0
        %812 = vmatprep.subr.bf16.mxu0 0
        %813 = vmatpush1.bf16.msra.mxu0 0
        %814 = vmatprep.mubr.bf16.mxu0 0
        %815 = vmatmul.mubr.bf16.gmra.mrb[0].mxu0 %v771
        %v816 = vpop.f32.mrb[0].mxu0
        %v817 = vadd.f32 %v652, %v816
        %v818 = vpop.f32.mrb[0].mxu0
        %v819 = vadd.f32 %v656, %v818
        %v820 = vpop.f32.mrb[0].mxu0
        %v821 = vadd.f32 %v652, %v820
        %v822 = vpop.f32.mrb[0].mxu0
        %v823 = vadd.f32 %v656, %v822
        %824 = vmatprep.mubr.bf16.mxu0 0
        %825 = vmatmul.mubr.bf16.gmra.mrb[0].mxu0 %v774
        %v826 = vpop.f32.mrb[0].mxu0
        %v827 = vadd.f32 %v652, %v826
        %v828 = vpop.f32.mrb[0].mxu0
        %v829 = vadd.f32 %v656, %v828
        %v830 = vpop.f32.mrb[0].mxu0
        %v831 = vadd.f32 %v652, %v830
        %v832 = vpop.f32.mrb[0].mxu0
        %v833 = vadd.f32 %v656, %v832
        %834 = vmatprep.mubr.bf16.mxu0 0
        %835 = vmatmul.mubr.bf16.gmra.mrb[0].mxu0 %v777
        %v836 = vpop.f32.mrb[0].mxu0
        %v837 = vadd.f32 %v652, %v836
        %v838 = vpop.f32.mrb[0].mxu0
        %v839 = vadd.f32 %v656, %v838
        %v840 = vpop.f32.mrb[0].mxu0
        %v841 = vadd.f32 %v652, %v840
        %v842 = vpop.f32.mrb[0].mxu0
        %v843 = vadd.f32 %v656, %v842
        %844 = vmatprep.mubr.bf16.mxu0 0
        %845 = vmatmul.mubr.bf16.gmra.mrb[0].mxu0 %v780
        %v846 = vpop.f32.mrb[0].mxu0
        %v847 = vadd.f32 %v652, %v846
        %v848 = vpop.f32.mrb[0].mxu0
        %v849 = vadd.f32 %v656, %v848
        %v850 = vpop.f32.mrb[0].mxu0
        %v851 = vadd.f32 %v652, %v850
        %v852 = vpop.f32.mrb[0].mxu0
        %v853 = vadd.f32 %v656, %v852
        %854 = vdwg.mxu0
        %855 = vmatprep.subr.bf16.mxu0 %v740
        %856 = vmatpush1.bf16.msra.mxu0 %v739
        %857 = vmatprep.subr.bf16.mxu0 %v744
        %858 = vmatpush1.bf16.msra.mxu0 %v743
        %859 = vmatprep.subr.bf16.mxu0 %v748
        %860 = vmatpush1.bf16.msra.mxu0 %v747
        %861 = vmatprep.subr.bf16.mxu0 %v752
        %862 = vmatpush1.bf16.msra.mxu0 %v751
        %863 = vmatprep.subr.bf16.mxu0 0
        %864 = vmatpush1.bf16.msra.mxu0 0
        %865 = vmatprep.subr.bf16.mxu0 0
        %866 = vmatpush1.bf16.msra.mxu0 0
        %867 = vmatprep.subr.bf16.mxu0 0
        %868 = vmatpush1.bf16.msra.mxu0 0
        %869 = vmatprep.subr.bf16.mxu0 0
        %870 = vmatpush1.bf16.msra.mxu0 0
        %871 = vmatprep.subr.bf16.mxu0 0
        %872 = vmatpush1.bf16.msra.mxu0 0
        %873 = vmatprep.subr.bf16.mxu0 0
        %874 = vmatpush1.bf16.msra.mxu0 0
        %875 = vmatprep.subr.bf16.mxu0 0
        %876 = vmatpush1.bf16.msra.mxu0 0
        %877 = vmatprep.subr.bf16.mxu0 0
        %878 = vmatpush1.bf16.msra.mxu0 0
        %879 = vmatprep.subr.bf16.mxu0 0
        %880 = vmatpush1.bf16.msra.mxu0 0
        %881 = vmatprep.subr.bf16.mxu0 0
        %882 = vmatpush1.bf16.msra.mxu0 0
        %883 = vmatprep.subr.bf16.mxu0 0
        %884 = vmatpush1.bf16.msra.mxu0 0
        %885 = vmatprep.subr.bf16.mxu0 0
        %886 = vmatpush1.bf16.msra.mxu0 0
        %887 = vmatprep.mubr.bf16.mxu0 0
        %888 = vmatmul.mubr.bf16.gmra.mrb[0].mxu0 %v771
        %v889 = vpop.f32.mrb[0].mxu0
        %v890 = vadd.f32 %v660, %v889
        %v891 = vpop.f32.mrb[0].mxu0
        %v892 = vadd.f32 %v664, %v891
        %v893 = vpop.f32.mrb[0].mxu0
        %v894 = vadd.f32 %v660, %v893
        %v895 = vpop.f32.mrb[0].mxu0
        %v896 = vadd.f32 %v664, %v895
        %897 = vmatprep.mubr.bf16.mxu0 0
        %898 = vmatmul.mubr.bf16.gmra.mrb[0].mxu0 %v774
        %v899 = vpop.f32.mrb[0].mxu0
        %v900 = vadd.f32 %v660, %v899
        %v901 = vpop.f32.mrb[0].mxu0
        %v902 = vadd.f32 %v664, %v901
        %v903 = vpop.f32.mrb[0].mxu0
        %v904 = vadd.f32 %v660, %v903
        %v905 = vpop.f32.mrb[0].mxu0
        %v906 = vadd.f32 %v664, %v905
        %907 = vmatprep.mubr.bf16.mxu0 0
        %908 = vmatmul.mubr.bf16.gmra.mrb[0].mxu0 %v777
        %v909 = vpop.f32.mrb[0].mxu0
        %v910 = vadd.f32 %v660, %v909
        %v911 = vpop.f32.mrb[0].mxu0
        %v912 = vadd.f32 %v664, %v911
        %v913 = vpop.f32.mrb[0].mxu0
        %v914 = vadd.f32 %v660, %v913
        %v915 = vpop.f32.mrb[0].mxu0
        %v916 = vadd.f32 %v664, %v915
        %917 = vmatprep.mubr.bf16.mxu0 0
        %918 = vmatmul.mubr.bf16.gmra.mrb[0].mxu0 %v780
        %v919 = vpop.f32.mrb[0].mxu0
        %v920 = vadd.f32 %v660, %v919
        %v921 = vpop.f32.mrb[0].mxu0
        %v922 = vadd.f32 %v664, %v921
        %v923 = vpop.f32.mrb[0].mxu0
        %v924 = vadd.f32 %v660, %v923
        %v925 = vpop.f32.mrb[0].mxu0
        %v926 = vadd.f32 %v664, %v925
        %927 = vdwg.mxu0
        %928 = vst [vmem:[#allocation5] sm:$0xff] %v817
        %929 = vst [vmem:[#allocation5 + $0x8] sm:$0xff] %v819
        %930 = vst [vmem:[#allocation5 + $0x10] sm:$0xff] %v890
        %931 = vst [vmem:[#allocation5 + $0x18] sm:$0xff] %v892
        %932 = vst [vmem:[#allocation5 + $0x20] sm:$0xff] %v821
        %933 = vst [vmem:[#allocation5 + $0x28] sm:$0xff] %v823
        %934 = vst [vmem:[#allocation5 + $0x30] sm:$0xff] %v894
        %935 = vst [vmem:[#allocation5 + $0x38] sm:$0xff] %v896
        %936 = vst [vmem:[#allocation5 + $0x40] sm:$0xff] %v827
        %937 = vst [vmem:[#allocation5 + $0x48] sm:$0xff] %v829
        %938 = vst [vmem:[#allocation5 + $0x50] sm:$0xff] %v900
        %939 = vst [vmem:[#allocation5 + $0x58] sm:$0xff] %v902
        %940 = vst [vmem:[#allocation5 + $0x60] sm:$0xff] %v831
        %941 = vst [vmem:[#allocation5 + $0x68] sm:$0xff] %v833
        %942 = vst [vmem:[#allocation5 + $0x70] sm:$0xff] %v904
        %943 = vst [vmem:[#allocation5 + $0x78] sm:$0xff] %v906
        %944 = vst [vmem:[#allocation5 + $0x80] sm:$0xff] %v837
        %945 = vst [vmem:[#allocation5 + $0x88] sm:$0xff] %v839
        %946 = vst [vmem:[#allocation5 + $0x90] sm:$0xff] %v910
        %947 = vst [vmem:[#allocation5 + $0x98] sm:$0xff] %v912
        %948 = vst [vmem:[#allocation5 + $0xa0] sm:$0xff] %v841
        %949 = vst [vmem:[#allocation5 + $0xa8] sm:$0xff] %v843
        %950 = vst [vmem:[#allocation5 + $0xb0] sm:$0xff] %v914
        %951 = vst [vmem:[#allocation5 + $0xb8] sm:$0xff] %v916
        %952 = vst [vmem:[#allocation5 + $0xc0] sm:$0xff] %v847
        %953 = vst [vmem:[#allocation5 + $0xc8] sm:$0xff] %v849
        %954 = vst [vmem:[#allocation5 + $0xd0] sm:$0xff] %v920
        %955 = vst [vmem:[#allocation5 + $0xd8] sm:$0xff] %v922
        %956 = vst [vmem:[#allocation5 + $0xe0] sm:$0xff] %v851
        %957 = vst [vmem:[#allocation5 + $0xe8] sm:$0xff] %v853
        %958 = vst [vmem:[#allocation5 + $0xf0] sm:$0xff] %v924
        %959 = vst [vmem:[#allocation5 + $0xf8] sm:$0xff] %v926
        %v960 = vld [vmem:[#allocation15] sm:$0xff]
        %v961 = vld [vmem:[#allocation15 + $0x8] sm:$0xff]
        %v962 = vld [vmem:[#allocation15 + $0x10] sm:$0xff]
        %v963 = vld [vmem:[#allocation15 + $0x18] sm:$0xff]
        %v964 = vld [vmem:[#allocation15 + $0x20] sm:$0xff]
        %v965 = vld [vmem:[#allocation15 + $0x28] sm:$0xff]
        %v966 = vld [vmem:[#allocation15 + $0x30] sm:$0xff]
        %v967 = vld [vmem:[#allocation15 + $0x38] sm:$0xff]
        %v968 = vld [vmem:[#allocation15 + $0x40] sm:$0xff]
        %v969 = vld [vmem:[#allocation15 + $0x48] sm:$0xff]
        %v970 = vld [vmem:[#allocation15 + $0x50] sm:$0xff]
        %v971 = vld [vmem:[#allocation15 + $0x58] sm:$0xff]
        %v972 = vld [vmem:[#allocation15 + $0x60] sm:$0xff]
        %v973 = vld [vmem:[#allocation15 + $0x68] sm:$0xff]
        %v974 = vld [vmem:[#allocation15 + $0x70] sm:$0xff]
        %v975 = vld [vmem:[#allocation15 + $0x78] sm:$0xff]
        %v976 = vld [vmem:[#allocation15 + $0x80] sm:$0xff]
        %v977 = vld [vmem:[#allocation15 + $0x88] sm:$0xff]
        %v978 = vld [vmem:[#allocation15 + $0x90] sm:$0xff]
        %v979 = vld [vmem:[#allocation15 + $0x98] sm:$0xff]
        %v980 = vld [vmem:[#allocation15 + $0xa0] sm:$0xff]
        %v981 = vld [vmem:[#allocation15 + $0xa8] sm:$0xff]
        %v982 = vld [vmem:[#allocation15 + $0xb0] sm:$0xff]
        %v983 = vld [vmem:[#allocation15 + $0xb8] sm:$0xff]
        %v984 = vld [vmem:[#allocation15 + $0xc0] sm:$0xff]
        %v985 = vld [vmem:[#allocation15 + $0xc8] sm:$0xff]
        %v986 = vld [vmem:[#allocation15 + $0xd0] sm:$0xff]
        %v987 = vld [vmem:[#allocation15 + $0xd8] sm:$0xff]
        %v988 = vld [vmem:[#allocation15 + $0xe0] sm:$0xff]
        %v989 = vld [vmem:[#allocation15 + $0xe8] sm:$0xff]
        %v990 = vld [vmem:[#allocation15 + $0xf0] sm:$0xff]
        %v991 = vld [vmem:[#allocation15 + $0xf8] sm:$0xff]
        %v992 = vld [vmem:[#allocation2] sm:$0xff]
        %v993 = vld [vmem:[#allocation3] sm:$0xff]
        %v994 = vld [vmem:[#allocation5] sm:$0xff]
        %v995 = vld [vmem:[#allocation5 + $0x8] sm:$0xff]
        %v996 = vld [vmem:[#allocation5 + $0x10] sm:$0xff]
        %v997 = vld [vmem:[#allocation5 + $0x18] sm:$0xff]
        %v998 = vpack.c.bf16 %v992, %v992
        %v1031 = vunpack.c.l.b16 %v960
        %v1032 = vunpack.c.h.b16 %v960
        %v1033 = vunpack.c.l.b16 %v961
        %v1034 = vunpack.c.h.b16 %v961
        %v1035 = vunpack.c.l.b16 %v962
        %v1036 = vunpack.c.h.b16 %v962
        %v1037 = vunpack.c.l.b16 %v963
        %v1038 = vunpack.c.h.b16 %v963
        %v1039 = vunpack.c.l.b16 %v964
        %v1040 = vunpack.c.h.b16 %v964
        %v1041 = vunpack.c.l.b16 %v965
        %v1042 = vunpack.c.h.b16 %v965
        %v1043 = vunpack.c.l.b16 %v966
        %v1044 = vunpack.c.h.b16 %v966
        %v1045 = vunpack.c.l.b16 %v967
        %v1046 = vunpack.c.h.b16 %v967
        %v1047 = vunpack.c.l.b16 %v968
        %v1048 = vunpack.c.h.b16 %v968
        %v1049 = vunpack.c.l.b16 %v969
        %v1050 = vunpack.c.h.b16 %v969
        %v1051 = vunpack.c.l.b16 %v970
        %v1052 = vunpack.c.h.b16 %v970
        %v1053 = vunpack.c.l.b16 %v971
        %v1054 = vunpack.c.h.b16 %v971
        %v1055 = vunpack.c.l.b16 %v972
        %v1056 = vunpack.c.h.b16 %v972
        %v1057 = vunpack.c.l.b16 %v973
        %v1058 = vunpack.c.h.b16 %v973
        %v1059 = vunpack.c.l.b16 %v974
        %v1060 = vunpack.c.h.b16 %v974
        %v1061 = vunpack.c.l.b16 %v975
        %v1062 = vunpack.c.h.b16 %v975
        %v1063 = vunpack.c.l.b16 %v976
        %v1064 = vunpack.c.h.b16 %v976
        %v1065 = vunpack.c.l.b16 %v977
        %v1066 = vunpack.c.h.b16 %v977
        %v1067 = vunpack.c.l.b16 %v978
        %v1068 = vunpack.c.h.b16 %v978
        %v1069 = vunpack.c.l.b16 %v979
        %v1070 = vunpack.c.h.b16 %v979
        %v1071 = vunpack.c.l.b16 %v980
        %v1072 = vunpack.c.h.b16 %v980
        %v1073 = vunpack.c.l.b16 %v981
        %v1074 = vunpack.c.h.b16 %v981
        %v1075 = vunpack.c.l.b16 %v982
        %v1076 = vunpack.c.h.b16 %v982
        %v1077 = vunpack.c.l.b16 %v983
        %v1078 = vunpack.c.h.b16 %v983
        %v1079 = vunpack.c.l.b16 %v984
        %v1080 = vunpack.c.h.b16 %v984
        %v1081 = vunpack.c.l.b16 %v985
        %v1082 = vunpack.c.h.b16 %v985
        %v1083 = vunpack.c.l.b16 %v986
        %v1084 = vunpack.c.h.b16 %v986
        %v1085 = vunpack.c.l.b16 %v987
        %v1086 = vunpack.c.h.b16 %v987
        %v1087 = vunpack.c.l.b16 %v988
        %v1088 = vunpack.c.h.b16 %v988
        %v1089 = vunpack.c.l.b16 %v989
        %v1090 = vunpack.c.h.b16 %v989
        %v1091 = vunpack.c.l.b16 %v990
        %v1092 = vunpack.c.h.b16 %v990
        %v1093 = vunpack.c.l.b16 %v991
        %v1094 = vunpack.c.h.b16 %v991
        %v1095 = vpack.c.b16 %v1035, %v1031
        %v1096 = vpack.c.b16 %v1036, %v1032
        %v1097 = vpack.c.b16 %v1037, %v1033
        %v1098 = vpack.c.b16 %v1038, %v1034
        %v1099 = vpack.c.b16 %v1043, %v1039
        %v1100 = vpack.c.b16 %v1044, %v1040
        %v1101 = vpack.c.b16 %v1045, %v1041
        %v1102 = vpack.c.b16 %v1046, %v1042
        %v1103 = vpack.c.b16 %v1051, %v1047
        %v1104 = vpack.c.b16 %v1052, %v1048
        %v1105 = vpack.c.b16 %v1053, %v1049
        %v1106 = vpack.c.b16 %v1054, %v1050
        %v1107 = vpack.c.b16 %v1059, %v1055
        %v1108 = vpack.c.b16 %v1060, %v1056
        %v1109 = vpack.c.b16 %v1061, %v1057
        %v1110 = vpack.c.b16 %v1062, %v1058
        %v1111 = vpack.c.b16 %v1067, %v1063
        %v1112 = vpack.c.b16 %v1068, %v1064
        %v1113 = vpack.c.b16 %v1069, %v1065
        %v1114 = vpack.c.b16 %v1070, %v1066
        %v1115 = vpack.c.b16 %v1075, %v1071
        %v1116 = vpack.c.b16 %v1076, %v1072
        %v1117 = vpack.c.b16 %v1077, %v1073
        %v1118 = vpack.c.b16 %v1078, %v1074
        %v1119 = vpack.c.b16 %v1083, %v1079
        %v1120 = vpack.c.b16 %v1084, %v1080
        %v1121 = vpack.c.b16 %v1085, %v1081
        %v1122 = vpack.c.b16 %v1086, %v1082
        %v1123 = vpack.c.b16 %v1091, %v1087
        %v1124 = vpack.c.b16 %v1092, %v1088
        %v1125 = vpack.c.b16 %v1093, %v1089
        %v1126 = vpack.c.b16 %v1094, %v1090
        %1159 = vmatprep.subr.bf16.mxu0 %v1096
        %1160 = vmatpush1.bf16.msra.mxu0 %v1095
        %1161 = vmatprep.subr.bf16.mxu0 %v1100
        %1162 = vmatpush1.bf16.msra.mxu0 %v1099
        %1163 = vmatprep.subr.bf16.mxu0 %v1104
        %1164 = vmatpush1.bf16.msra.mxu0 %v1103
        %1165 = vmatprep.subr.bf16.mxu0 %v1108
        %1166 = vmatpush1.bf16.msra.mxu0 %v1107
        %1167 = vmatprep.subr.bf16.mxu0 %v1112
        %1168 = vmatpush1.bf16.msra.mxu0 %v1111
        %1169 = vmatprep.subr.bf16.mxu0 %v1116
        %1170 = vmatpush1.bf16.msra.mxu0 %v1115
        %1171 = vmatprep.subr.bf16.mxu0 %v1120
        %1172 = vmatpush1.bf16.msra.mxu0 %v1119
        %1173 = vmatprep.subr.bf16.mxu0 %v1124
        %1174 = vmatpush1.bf16.msra.mxu0 %v1123
        %1175 = vmatprep.subr.bf16.mxu0 0
        %1176 = vmatpush1.bf16.msra.mxu0 0
        %1177 = vmatprep.subr.bf16.mxu0 0
        %1178 = vmatpush1.bf16.msra.mxu0 0
        %1179 = vmatprep.subr.bf16.mxu0 0
        %1180 = vmatpush1.bf16.msra.mxu0 0
        %1181 = vmatprep.subr.bf16.mxu0 0
        %1182 = vmatpush1.bf16.msra.mxu0 0
        %1183 = vmatprep.subr.bf16.mxu0 0
        %1184 = vmatpush1.bf16.msra.mxu0 0
        %1185 = vmatprep.subr.bf16.mxu0 0
        %1186 = vmatpush1.bf16.msra.mxu0 0
        %1187 = vmatprep.subr.bf16.mxu0 0
        %1188 = vmatpush1.bf16.msra.mxu0 0
        %1189 = vmatprep.subr.bf16.mxu0 0
        %1190 = vmatpush1.bf16.msra.mxu0 0
        %1191 = vmatprep.mubr.bf16.mxu0 0
        %1192 = vmatmul.mubr.bf16.gmra.mrb[0].mxu0 %v998
        %v1193 = vpop.f32.mrb[0].mxu0
        %v1194 = vadd.f32 0.0, %v1193
        %v1195 = vpop.f32.mrb[0].mxu0
        %v1196 = vadd.f32 0.0, %v1195
        %v1197 = vpop.f32.mrb[0].mxu0
        %v1198 = vpop.f32.mrb[0].mxu0
        %1199 = vdwg.mxu0
        %1200 = vmatprep.subr.bf16.mxu0 %v1098
        %1201 = vmatpush1.bf16.msra.mxu0 %v1097
        %1202 = vmatprep.subr.bf16.mxu0 %v1102
        %1203 = vmatpush1.bf16.msra.mxu0 %v1101
        %1204 = vmatprep.subr.bf16.mxu0 %v1106
        %1205 = vmatpush1.bf16.msra.mxu0 %v1105
        %1206 = vmatprep.subr.bf16.mxu0 %v1110
        %1207 = vmatpush1.bf16.msra.mxu0 %v1109
        %1208 = vmatprep.subr.bf16.mxu0 %v1114
        %1209 = vmatpush1.bf16.msra.mxu0 %v1113
        %1210 = vmatprep.subr.bf16.mxu0 %v1118
        %1211 = vmatpush1.bf16.msra.mxu0 %v1117
        %1212 = vmatprep.subr.bf16.mxu0 %v1122
        %1213 = vmatpush1.bf16.msra.mxu0 %v1121
        %1214 = vmatprep.subr.bf16.mxu0 %v1126
        %1215 = vmatpush1.bf16.msra.mxu0 %v1125
        %1216 = vmatprep.subr.bf16.mxu0 0
        %1217 = vmatpush1.bf16.msra.mxu0 0
        %1218 = vmatprep.subr.bf16.mxu0 0
        %1219 = vmatpush1.bf16.msra.mxu0 0
        %1220 = vmatprep.subr.bf16.mxu0 0
        %1221 = vmatpush1.bf16.msra.mxu0 0
        %1222 = vmatprep.subr.bf16.mxu0 0
        %1223 = vmatpush1.bf16.msra.mxu0 0
        %1224 = vmatprep.subr.bf16.mxu0 0
        %1225 = vmatpush1.bf16.msra.mxu0 0
        %1226 = vmatprep.subr.bf16.mxu0 0
        %1227 = vmatpush1.bf16.msra.mxu0 0
        %1228 = vmatprep.subr.bf16.mxu0 0
        %1229 = vmatpush1.bf16.msra.mxu0 0
        %1230 = vmatprep.subr.bf16.mxu0 0
        %1231 = vmatpush1.bf16.msra.mxu0 0
        %1232 = vmatprep.mubr.bf16.mxu0 0
        %1233 = vmatmul.mubr.bf16.gmra.mrb[0].mxu0 %v998
        %v1234 = vpop.f32.mrb[0].mxu0
        %v1235 = vadd.f32 0.0, %v1234
        %v1236 = vpop.f32.mrb[0].mxu0
        %v1237 = vadd.f32 0.0, %v1236
        %v1238 = vpop.f32.mrb[0].mxu0
        %v1239 = vpop.f32.mrb[0].mxu0
        %1240 = vdwg.mxu0
        %v1241 = vadd.f32 %v994, %v1194
        %v1242 = vadd.f32 %v995, %v1196
        %v1243 = vadd.f32 %v996, %v1235
        %v1244 = vadd.f32 %v997, %v1237
        %v1245 = vxor.u32 %v1241, 2147483648
        %v1246 = vmul.f32 %v1245, 1.442695
        %v1247 = vpow.pop %v1246
        %v1248 = vadd.f32 %v1247, 1.0
        %v1249 = vrcp.pop %v1248
        %v1250 = vmul.f32 1.0, %v1249
        %v1251 = vxor.u32 %v1242, 2147483648
        %v1252 = vmul.f32 %v1251, 1.442695
        %v1253 = vpow.pop %v1252
        %v1254 = vadd.f32 %v1253, 1.0
        %v1255 = vrcp.pop %v1254
        %v1256 = vmul.f32 1.0, %v1255
        %v1257 = vtanh.pop %v1243
        %v1258 = vxor.u32 %v1244, 2147483648
        %v1259 = vmul.f32 %v1258, 1.442695
        %v1260 = vpow.pop %v1259
        %v1261 = vadd.f32 %v1260, 1.0
        %v1262 = vrcp.pop %v1261
        %v1263 = vmul.f32 1.0, %v1262
        %v1264 = vmul.f32 %v1256, %v993
        %v1265 = vmul.f32 %v1250, %v1257
        %v1266 = vadd.f32 %v1264, %v1265
        %v1267 = vtanh.pop %v1266
        %v1268 = vmul.f32 %v1263, %v1267
        %v1269 = vstv %s622
        %vm1270 = vcmp.gt.s32.totalorder %v621, %v1269
        %v1271 = vsel %vm1270, 1, 0
        %1272 = vset.pattern.permute.xlu0 0
        %1273 = vperm.xlu0 %1272, %v1271
        %v1274 = vpop.permute.xlu0 %1273
        %vm1275 = vcmp.eq.s32.totalorder %v1274, 1
        %v1276 = vsel %vm1275, %v1268, %v992
        %v1277 = vsel %vm1275, %v1266, %v993
        %1278 = vst [vmem:[#allocation4] sm:$0xff] %v1276
        %s1279 = scalar_lea.vmem [#allocation5], 32
        %v1280 = vld [vmem:[%s1279] sm:$0xff]
        %v1281 = vld [vmem:[%s1279 + $0x8] sm:$0xff]
        %v1282 = vld [vmem:[%s1279 + $0x10] sm:$0xff]
        %v1283 = vld [vmem:[%s1279 + $0x18] sm:$0xff]
        %v1284 = vpack.c.bf16 %v1276, %v1276
        %1285 = vmatprep.subr.bf16.mxu0 %v1096
        %1286 = vmatpush1.bf16.msra.mxu0 %v1095
        %1287 = vmatprep.subr.bf16.mxu0 %v1100
        %1288 = vmatpush1.bf16.msra.mxu0 %v1099
        %1289 = vmatprep.subr.bf16.mxu0 %v1104
        %1290 = vmatpush1.bf16.msra.mxu0 %v1103
        %1291 = vmatprep.subr.bf16.mxu0 %v1108
        %1292 = vmatpush1.bf16.msra.mxu0 %v1107
        %1293 = vmatprep.subr.bf16.mxu0 %v1112
        %1294 = vmatpush1.bf16.msra.mxu0 %v1111
        %1295 = vmatprep.subr.bf16.mxu0 %v1116
        %1296 = vmatpush1.bf16.msra.mxu0 %v1115
        %1297 = vmatprep.subr.bf16.mxu0 %v1120
        %1298 = vmatpush1.bf16.msra.mxu0 %v1119
        %1299 = vmatprep.subr.bf16.mxu0 %v1124
        %1300 = vmatpush1.bf16.msra.mxu0 %v1123
        %1301 = vmatprep.subr.bf16.mxu0 0
        %1302 = vmatpush1.bf16.msra.mxu0 0
        %1303 = vmatprep.subr.bf16.mxu0 0
        %1304 = vmatpush1.bf16.msra.mxu0 0
        %1305 = vmatprep.subr.bf16.mxu0 0
        %1306 = vmatpush1.bf16.msra.mxu0 0
        %1307 = vmatprep.subr.bf16.mxu0 0
        %1308 = vmatpush1.bf16.msra.mxu0 0
        %1309 = vmatprep.subr.bf16.mxu0 0
        %1310 = vmatpush1.bf16.msra.mxu0 0
        %1311 = vmatprep.subr.bf16.mxu0 0
        %1312 = vmatpush1.bf16.msra.mxu0 0
        %1313 = vmatprep.subr.bf16.mxu0 0
        %1314 = vmatpush1.bf16.msra.mxu0 0
        %1315 = vmatprep.subr.bf16.mxu0 0
        %1316 = vmatpush1.bf16.msra.mxu0 0
        %1317 = vmatprep.mubr.bf16.mxu0 0
        %1318 = vmatmul.mubr.bf16.gmra.mrb[0].mxu0 %v1284
        %v1319 = vpop.f32.mrb[0].mxu0
        %v1320 = vadd.f32 0.0, %v1319
        %v1321 = vpop.f32.mrb[0].mxu0
        %v1322 = vadd.f32 0.0, %v1321
        %v1323 = vpop.f32.mrb[0].mxu0
        %v1324 = vpop.f32.mrb[0].mxu0
        %1325 = vdwg.mxu0
        %1326 = vmatprep.subr.bf16.mxu0 %v1098
        %1327 = vmatpush1.bf16.msra.mxu0 %v1097
        %1328 = vmatprep.subr.bf16.mxu0 %v1102
        %1329 = vmatpush1.bf16.msra.mxu0 %v1101
        %1330 = vmatprep.subr.bf16.mxu0 %v1106
        %1331 = vmatpush1.bf16.msra.mxu0 %v1105
        %1332 = vmatprep.subr.bf16.mxu0 %v1110
        %1333 = vmatpush1.bf16.msra.mxu0 %v1109
        %1334 = vmatprep.subr.bf16.mxu0 %v1114
        %1335 = vmatpush1.bf16.msra.mxu0 %v1113
        %1336 = vmatprep.subr.bf16.mxu0 %v1118
        %1337 = vmatpush1.bf16.msra.mxu0 %v1117
        %1338 = vmatprep.subr.bf16.mxu0 %v1122
        %1339 = vmatpush1.bf16.msra.mxu0 %v1121
        %1340 = vmatprep.subr.bf16.mxu0 %v1126
        %1341 = vmatpush1.bf16.msra.mxu0 %v1125
        %1342 = vmatprep.subr.bf16.mxu0 0
        %1343 = vmatpush1.bf16.msra.mxu0 0
        %1344 = vmatprep.subr.bf16.mxu0 0
        %1345 = vmatpush1.bf16.msra.mxu0 0
        %1346 = vmatprep.subr.bf16.mxu0 0
        %1347 = vmatpush1.bf16.msra.mxu0 0
        %1348 = vmatprep.subr.bf16.mxu0 0
        %1349 = vmatpush1.bf16.msra.mxu0 0
        %1350 = vmatprep.subr.bf16.mxu0 0
        %1351 = vmatpush1.bf16.msra.mxu0 0
        %1352 = vmatprep.subr.bf16.mxu0 0
        %1353 = vmatpush1.bf16.msra.mxu0 0
        %1354 = vmatprep.subr.bf16.mxu0 0
        %1355 = vmatpush1.bf16.msra.mxu0 0
        %1356 = vmatprep.subr.bf16.mxu0 0
        %1357 = vmatpush1.bf16.msra.mxu0 0
        %1358 = vmatprep.mubr.bf16.mxu0 0
        %1359 = vmatmul.mubr.bf16.gmra.mrb[0].mxu0 %v1284
        %v1360 = vpop.f32.mrb[0].mxu0
        %v1361 = vadd.f32 0.0, %v1360
        %v1362 = vpop.f32.mrb[0].mxu0
        %v1363 = vadd.f32 0.0, %v1362
        %v1364 = vpop.f32.mrb[0].mxu0
        %v1365 = vpop.f32.mrb[0].mxu0
        %1366 = vdwg.mxu0
        %v1367 = vadd.f32 %v1280, %v1320
        %v1368 = vadd.f32 %v1281, %v1322
        %v1369 = vadd.f32 %v1282, %v1361
        %v1370 = vadd.f32 %v1283, %v1363
        %v1371 = vxor.u32 %v1367, 2147483648
        %v1372 = vmul.f32 %v1371, 1.442695
        %v1373 = vpow.pop %v1372
        %v1374 = vadd.f32 %v1373, 1.0
        %v1375 = vrcp.pop %v1374
        %v1376 = vmul.f32 1.0, %v1375
        %v1377 = vxor.u32 %v1368, 2147483648
        %v1378 = vmul.f32 %v1377, 1.442695
        %v1379 = vpow.pop %v1378
        %v1380 = vadd.f32 %v1379, 1.0
        %v1381 = vrcp.pop %v1380
        %v1382 = vmul.f32 1.0, %v1381
        %v1383 = vtanh.pop %v1369
        %v1384 = vxor.u32 %v1370, 2147483648
        %v1385 = vmul.f32 %v1384, 1.442695
        %v1386 = vpow.pop %v1385
        %v1387 = vadd.f32 %v1386, 1.0
        %v1388 = vrcp.pop %v1387
        %v1389 = vmul.f32 1.0, %v1388
        %v1390 = vmul.f32 %v1382, %v1277
        %v1391 = vmul.f32 %v1376, %v1383
        %v1392 = vadd.f32 %v1390, %v1391
        %v1393 = vtanh.pop %v1392
        %v1394 = vmul.f32 %v1389, %v1393
        %s1395 = sadd.s32 %s622, 1
        %v1396 = vstv %s1395
        %vm1397 = vcmp.gt.s32.totalorder %v621, %v1396
        %v1398 = vsel %vm1397, 1, 0
        %1399 = vset.pattern.permute.xlu0 0
        %1400 = vperm.xlu0 %1399, %v1398
        %v1401 = vpop.permute.xlu0 %1400
        %vm1402 = vcmp.eq.s32.totalorder %v1401, 1
        %v1403 = vsel %vm1402, %v1394, %v1276
        %v1404 = vsel %vm1402, %v1392, %v1277
        %s1405 = scalar_lea.vmem [#allocation4], 8
        %1406 = vst [vmem:[%s1405] sm:$0xff] %v1403
        %s1407 = scalar_lea.vmem [#allocation5], 64
        %v1408 = vld [vmem:[%s1407] sm:$0xff]
        %v1409 = vld [vmem:[%s1407 + $0x8] sm:$0xff]
        %v1410 = vld [vmem:[%s1407 + $0x10] sm:$0xff]
        %v1411 = vld [vmem:[%s1407 + $0x18] sm:$0xff]
        %v1412 = vpack.c.bf16 %v1403, %v1403
        %1413 = vmatprep.subr.bf16.mxu0 %v1096
        %1414 = vmatpush1.bf16.msra.mxu0 %v1095
        %1415 = vmatprep.subr.bf16.mxu0 %v1100
        %1416 = vmatpush1.bf16.msra.mxu0 %v1099
        %1417 = vmatprep.subr.bf16.mxu0 %v1104
        %1418 = vmatpush1.bf16.msra.mxu0 %v1103
        %1419 = vmatprep.subr.bf16.mxu0 %v1108
        %1420 = vmatpush1.bf16.msra.mxu0 %v1107
        %1421 = vmatprep.subr.bf16.mxu0 %v1112
        %1422 = vmatpush1.bf16.msra.mxu0 %v1111
        %1423 = vmatprep.subr.bf16.mxu0 %v1116
        %1424 = vmatpush1.bf16.msra.mxu0 %v1115
        %1425 = vmatprep.subr.bf16.mxu0 %v1120
        %1426 = vmatpush1.bf16.msra.mxu0 %v1119
        %1427 = vmatprep.subr.bf16.mxu0 %v1124
        %1428 = vmatpush1.bf16.msra.mxu0 %v1123
        %1429 = vmatprep.subr.bf16.mxu0 0
        %1430 = vmatpush1.bf16.msra.mxu0 0
        %1431 = vmatprep.subr.bf16.mxu0 0
        %1432 = vmatpush1.bf16.msra.mxu0 0
        %1433 = vmatprep.subr.bf16.mxu0 0
        %1434 = vmatpush1.bf16.msra.mxu0 0
        %1435 = vmatprep.subr.bf16.mxu0 0
        %1436 = vmatpush1.bf16.msra.mxu0 0
        %1437 = vmatprep.subr.bf16.mxu0 0
        %1438 = vmatpush1.bf16.msra.mxu0 0
        %1439 = vmatprep.subr.bf16.mxu0 0
        %1440 = vmatpush1.bf16.msra.mxu0 0
        %1441 = vmatprep.subr.bf16.mxu0 0
        %1442 = vmatpush1.bf16.msra.mxu0 0
        %1443 = vmatprep.subr.bf16.mxu0 0
        %1444 = vmatpush1.bf16.msra.mxu0 0
        %1445 = vmatprep.mubr.bf16.mxu0 0
        %1446 = vmatmul.mubr.bf16.gmra.mrb[0].mxu0 %v1412
        %v1447 = vpop.f32.mrb[0].mxu0
        %v1448 = vadd.f32 0.0, %v1447
        %v1449 = vpop.f32.mrb[0].mxu0
        %v1450 = vadd.f32 0.0, %v1449
        %v1451 = vpop.f32.mrb[0].mxu0
        %v1452 = vpop.f32.mrb[0].mxu0
        %1453 = vdwg.mxu0
        %1454 = vmatprep.subr.bf16.mxu0 %v1098
        %1455 = vmatpush1.bf16.msra.mxu0 %v1097
        %1456 = vmatprep.subr.bf16.mxu0 %v1102
        %1457 = vmatpush1.bf16.msra.mxu0 %v1101
        %1458 = vmatprep.subr.bf16.mxu0 %v1106
        %1459 = vmatpush1.bf16.msra.mxu0 %v1105
        %1460 = vmatprep.subr.bf16.mxu0 %v1110
        %1461 = vmatpush1.bf16.msra.mxu0 %v1109
        %1462 = vmatprep.subr.bf16.mxu0 %v1114
        %1463 = vmatpush1.bf16.msra.mxu0 %v1113
        %1464 = vmatprep.subr.bf16.mxu0 %v1118
        %1465 = vmatpush1.bf16.msra.mxu0 %v1117
        %1466 = vmatprep.subr.bf16.mxu0 %v1122
        %1467 = vmatpush1.bf16.msra.mxu0 %v1121
        %1468 = vmatprep.subr.bf16.mxu0 %v1126
        %1469 = vmatpush1.bf16.msra.mxu0 %v1125
        %1470 = vmatprep.subr.bf16.mxu0 0
        %1471 = vmatpush1.bf16.msra.mxu0 0
        %1472 = vmatprep.subr.bf16.mxu0 0
        %1473 = vmatpush1.bf16.msra.mxu0 0
        %1474 = vmatprep.subr.bf16.mxu0 0
        %1475 = vmatpush1.bf16.msra.mxu0 0
        %1476 = vmatprep.subr.bf16.mxu0 0
        %1477 = vmatpush1.bf16.msra.mxu0 0
        %1478 = vmatprep.subr.bf16.mxu0 0
        %1479 = vmatpush1.bf16.msra.mxu0 0
        %1480 = vmatprep.subr.bf16.mxu0 0
        %1481 = vmatpush1.bf16.msra.mxu0 0
        %1482 = vmatprep.subr.bf16.mxu0 0
        %1483 = vmatpush1.bf16.msra.mxu0 0
        %1484 = vmatprep.subr.bf16.mxu0 0
        %1485 = vmatpush1.bf16.msra.mxu0 0
        %1486 = vmatprep.mubr.bf16.mxu0 0
        %1487 = vmatmul.mubr.bf16.gmra.mrb[0].mxu0 %v1412
        %v1488 = vpop.f32.mrb[0].mxu0
        %v1489 = vadd.f32 0.0, %v1488
        %v1490 = vpop.f32.mrb[0].mxu0
        %v1491 = vadd.f32 0.0, %v1490
        %v1492 = vpop.f32.mrb[0].mxu0
        %v1493 = vpop.f32.mrb[0].mxu0
        %1494 = vdwg.mxu0
        %v1495 = vadd.f32 %v1408, %v1448
        %v1496 = vadd.f32 %v1409, %v1450
        %v1497 = vadd.f32 %v1410, %v1489
        %v1498 = vadd.f32 %v1411, %v1491
        %v1499 = vxor.u32 %v1495, 2147483648
        %v1500 = vmul.f32 %v1499, 1.442695
        %v1501 = vpow.pop %v1500
        %v1502 = vadd.f32 %v1501, 1.0
        %v1503 = vrcp.pop %v1502
        %v1504 = vmul.f32 1.0, %v1503
        %v1505 = vxor.u32 %v1496, 2147483648
        %v1506 = vmul.f32 %v1505, 1.442695
        %v1507 = vpow.pop %v1506
        %v1508 = vadd.f32 %v1507, 1.0
        %v1509 = vrcp.pop %v1508
        %v1510 = vmul.f32 1.0, %v1509
        %v1511 = vtanh.pop %v1497
        %v1512 = vxor.u32 %v1498, 2147483648
        %v1513 = vmul.f32 %v1512, 1.442695
        %v1514 = vpow.pop %v1513
        %v1515 = vadd.f32 %v1514, 1.0
        %v1516 = vrcp.pop %v1515
        %v1517 = vmul.f32 1.0, %v1516
        %v1518 = vmul.f32 %v1510, %v1404
        %v1519 = vmul.f32 %v1504, %v1511
        %v1520 = vadd.f32 %v1518, %v1519
        %v1521 = vtanh.pop %v1520
        %v1522 = vmul.f32 %v1517, %v1521
        %s1523 = sadd.s32 %s622, 2
        %v1524 = vstv %s1523
        %vm1525 = vcmp.gt.s32.totalorder %v621, %v1524
        %v1526 = vsel %vm1525, 1, 0
        %1527 = vset.pattern.permute.xlu0 0
        %1528 = vperm.xlu0 %1527, %v1526
        %v1529 = vpop.permute.xlu0 %1528
        %vm1530 = vcmp.eq.s32.totalorder %v1529, 1
        %v1531 = vsel %vm1530, %v1522, %v1403
        %v1532 = vsel %vm1530, %v1520, %v1404
        %s1533 = scalar_lea.vmem [#allocation4], 16
        %1534 = vst [vmem:[%s1533] sm:$0xff] %v1531
        %s1535 = scalar_lea.vmem [#allocation5], 96
        %v1536 = vld [vmem:[%s1535] sm:$0xff]
        %v1537 = vld [vmem:[%s1535 + $0x8] sm:$0xff]
        %v1538 = vld [vmem:[%s1535 + $0x10] sm:$0xff]
        %v1539 = vld [vmem:[%s1535 + $0x18] sm:$0xff]
        %v1540 = vpack.c.bf16 %v1531, %v1531
        %1541 = vmatprep.subr.bf16.mxu0 %v1096
        %1542 = vmatpush1.bf16.msra.mxu0 %v1095
        %1543 = vmatprep.subr.bf16.mxu0 %v1100
        %1544 = vmatpush1.bf16.msra.mxu0 %v1099
        %1545 = vmatprep.subr.bf16.mxu0 %v1104
        %1546 = vmatpush1.bf16.msra.mxu0 %v1103
        %1547 = vmatprep.subr.bf16.mxu0 %v1108
        %1548 = vmatpush1.bf16.msra.mxu0 %v1107
        %1549 = vmatprep.subr.bf16.mxu0 %v1112
        %1550 = vmatpush1.bf16.msra.mxu0 %v1111
        %1551 = vmatprep.subr.bf16.mxu0 %v1116
        %1552 = vmatpush1.bf16.msra.mxu0 %v1115
        %1553 = vmatprep.subr.bf16.mxu0 %v1120
        %1554 = vmatpush1.bf16.msra.mxu0 %v1119
        %1555 = vmatprep.subr.bf16.mxu0 %v1124
        %1556 = vmatpush1.bf16.msra.mxu0 %v1123
        %1557 = vmatprep.subr.bf16.mxu0 0
        %1558 = vmatpush1.bf16.msra.mxu0 0
        %1559 = vmatprep.subr.bf16.mxu0 0
        %1560 = vmatpush1.bf16.msra.mxu0 0
        %1561 = vmatprep.subr.bf16.mxu0 0
        %1562 = vmatpush1.bf16.msra.mxu0 0
        %1563 = vmatprep.subr.bf16.mxu0 0
        %1564 = vmatpush1.bf16.msra.mxu0 0
        %1565 = vmatprep.subr.bf16.mxu0 0
        %1566 = vmatpush1.bf16.msra.mxu0 0
        %1567 = vmatprep.subr.bf16.mxu0 0
        %1568 = vmatpush1.bf16.msra.mxu0 0
        %1569 = vmatprep.subr.bf16.mxu0 0
        %1570 = vmatpush1.bf16.msra.mxu0 0
        %1571 = vmatprep.subr.bf16.mxu0 0
        %1572 = vmatpush1.bf16.msra.mxu0 0
        %1573 = vmatprep.mubr.bf16.mxu0 0
        %1574 = vmatmul.mubr.bf16.gmra.mrb[0].mxu0 %v1540
        %v1575 = vpop.f32.mrb[0].mxu0
        %v1576 = vadd.f32 0.0, %v1575
        %v1577 = vpop.f32.mrb[0].mxu0
        %v1578 = vadd.f32 0.0, %v1577
        %v1579 = vpop.f32.mrb[0].mxu0
        %v1580 = vpop.f32.mrb[0].mxu0
        %1581 = vdwg.mxu0
        %1582 = vmatprep.subr.bf16.mxu0 %v1098
        %1583 = vmatpush1.bf16.msra.mxu0 %v1097
        %1584 = vmatprep.subr.bf16.mxu0 %v1102
        %1585 = vmatpush1.bf16.msra.mxu0 %v1101
        %1586 = vmatprep.subr.bf16.mxu0 %v1106
        %1587 = vmatpush1.bf16.msra.mxu0 %v1105
        %1588 = vmatprep.subr.bf16.mxu0 %v1110
        %1589 = vmatpush1.bf16.msra.mxu0 %v1109
        %1590 = vmatprep.subr.bf16.mxu0 %v1114
        %1591 = vmatpush1.bf16.msra.mxu0 %v1113
        %1592 = vmatprep.subr.bf16.mxu0 %v1118
        %1593 = vmatpush1.bf16.msra.mxu0 %v1117
        %1594 = vmatprep.subr.bf16.mxu0 %v1122
        %1595 = vmatpush1.bf16.msra.mxu0 %v1121
        %1596 = vmatprep.subr.bf16.mxu0 %v1126
        %1597 = vmatpush1.bf16.msra.mxu0 %v1125
        %1598 = vmatprep.subr.bf16.mxu0 0
        %1599 = vmatpush1.bf16.msra.mxu0 0
        %1600 = vmatprep.subr.bf16.mxu0 0
        %1601 = vmatpush1.bf16.msra.mxu0 0
        %1602 = vmatprep.subr.bf16.mxu0 0
        %1603 = vmatpush1.bf16.msra.mxu0 0
        %1604 = vmatprep.subr.bf16.mxu0 0
        %1605 = vmatpush1.bf16.msra.mxu0 0
        %1606 = vmatprep.subr.bf16.mxu0 0
        %1607 = vmatpush1.bf16.msra.mxu0 0
        %1608 = vmatprep.subr.bf16.mxu0 0
        %1609 = vmatpush1.bf16.msra.mxu0 0
        %1610 = vmatprep.subr.bf16.mxu0 0
        %1611 = vmatpush1.bf16.msra.mxu0 0
        %1612 = vmatprep.subr.bf16.mxu0 0
        %1613 = vmatpush1.bf16.msra.mxu0 0
        %1614 = vmatprep.mubr.bf16.mxu0 0
        %1615 = vmatmul.mubr.bf16.gmra.mrb[0].mxu0 %v1540
        %v1616 = vpop.f32.mrb[0].mxu0
        %v1617 = vadd.f32 0.0, %v1616
        %v1618 = vpop.f32.mrb[0].mxu0
        %v1619 = vadd.f32 0.0, %v1618
        %v1620 = vpop.f32.mrb[0].mxu0
        %v1621 = vpop.f32.mrb[0].mxu0
        %1622 = vdwg.mxu0
        %v1623 = vadd.f32 %v1536, %v1576
        %v1624 = vadd.f32 %v1537, %v1578
        %v1625 = vadd.f32 %v1538, %v1617
        %v1626 = vadd.f32 %v1539, %v1619
        %v1627 = vxor.u32 %v1623, 2147483648
        %v1628 = vmul.f32 %v1627, 1.442695
        %v1629 = vpow.pop %v1628
        %v1630 = vadd.f32 %v1629, 1.0
        %v1631 = vrcp.pop %v1630
        %v1632 = vmul.f32 1.0, %v1631
        %v1633 = vxor.u32 %v1624, 2147483648
        %v1634 = vmul.f32 %v1633, 1.442695
        %v1635 = vpow.pop %v1634
        %v1636 = vadd.f32 %v1635, 1.0
        %v1637 = vrcp.pop %v1636
        %v1638 = vmul.f32 1.0, %v1637
        %v1639 = vtanh.pop %v1625
        %v1640 = vxor.u32 %v1626, 2147483648
        %v1641 = vmul.f32 %v1640, 1.442695
        %v1642 = vpow.pop %v1641
        %v1643 = vadd.f32 %v1642, 1.0
        %v1644 = vrcp.pop %v1643
        %v1645 = vmul.f32 1.0, %v1644
        %v1646 = vmul.f32 %v1638, %v1532
        %v1647 = vmul.f32 %v1632, %v1639
        %v1648 = vadd.f32 %v1646, %v1647
        %v1649 = vtanh.pop %v1648
        %v1650 = vmul.f32 %v1645, %v1649
        %s1651 = sadd.s32 %s622, 3
        %v1652 = vstv %s1651
        %vm1653 = vcmp.gt.s32.totalorder %v621, %v1652
        %v1654 = vsel %vm1653, 1, 0
        %1655 = vset.pattern.permute.xlu0 0
        %1656 = vperm.xlu0 %1655, %v1654
        %v1657 = vpop.permute.xlu0 %1656
        %vm1658 = vcmp.eq.s32.totalorder %v1657, 1
        %v1659 = vsel %vm1658, %v1650, %v1531
        %v1660 = vsel %vm1658, %v1648, %v1532
        %s1661 = scalar_lea.vmem [#allocation4], 24
        %1662 = vst [vmem:[%s1661] sm:$0xff] %v1659
        %s1663 = scalar_lea.vmem [#allocation5], 128
        %v1664 = vld [vmem:[%s1663] sm:$0xff]
        %v1665 = vld [vmem:[%s1663 + $0x8] sm:$0xff]
        %v1666 = vld [vmem:[%s1663 + $0x10] sm:$0xff]
        %v1667 = vld [vmem:[%s1663 + $0x18] sm:$0xff]
        %v1668 = vpack.c.bf16 %v1659, %v1659
        %1669 = vmatprep.subr.bf16.mxu0 %v1096
        %1670 = vmatpush1.bf16.msra.mxu0 %v1095
        %1671 = vmatprep.subr.bf16.mxu0 %v1100
        %1672 = vmatpush1.bf16.msra.mxu0 %v1099
        %1673 = vmatprep.subr.bf16.mxu0 %v1104
        %1674 = vmatpush1.bf16.msra.mxu0 %v1103
        %1675 = vmatprep.subr.bf16.mxu0 %v1108
        %1676 = vmatpush1.bf16.msra.mxu0 %v1107
        %1677 = vmatprep.subr.bf16.mxu0 %v1112
        %1678 = vmatpush1.bf16.msra.mxu0 %v1111
        %1679 = vmatprep.subr.bf16.mxu0 %v1116
        %1680 = vmatpush1.bf16.msra.mxu0 %v1115
        %1681 = vmatprep.subr.bf16.mxu0 %v1120
        %1682 = vmatpush1.bf16.msra.mxu0 %v1119
        %1683 = vmatprep.subr.bf16.mxu0 %v1124
        %1684 = vmatpush1.bf16.msra.mxu0 %v1123
        %1685 = vmatprep.subr.bf16.mxu0 0
        %1686 = vmatpush1.bf16.msra.mxu0 0
        %1687 = vmatprep.subr.bf16.mxu0 0
        %1688 = vmatpush1.bf16.msra.mxu0 0
        %1689 = vmatprep.subr.bf16.mxu0 0
        %1690 = vmatpush1.bf16.msra.mxu0 0
        %1691 = vmatprep.subr.bf16.mxu0 0
        %1692 = vmatpush1.bf16.msra.mxu0 0
        %1693 = vmatprep.subr.bf16.mxu0 0
        %1694 = vmatpush1.bf16.msra.mxu0 0
        %1695 = vmatprep.subr.bf16.mxu0 0
        %1696 = vmatpush1.bf16.msra.mxu0 0
        %1697 = vmatprep.subr.bf16.mxu0 0
        %1698 = vmatpush1.bf16.msra.mxu0 0
        %1699 = vmatprep.subr.bf16.mxu0 0
        %1700 = vmatpush1.bf16.msra.mxu0 0
        %1701 = vmatprep.mubr.bf16.mxu0 0
        %1702 = vmatmul.mubr.bf16.gmra.mrb[0].mxu0 %v1668
        %v1703 = vpop.f32.mrb[0].mxu0
        %v1704 = vadd.f32 0.0, %v1703
        %v1705 = vpop.f32.mrb[0].mxu0
        %v1706 = vadd.f32 0.0, %v1705
        %v1707 = vpop.f32.mrb[0].mxu0
        %v1708 = vpop.f32.mrb[0].mxu0
        %1709 = vdwg.mxu0
        %1710 = vmatprep.subr.bf16.mxu0 %v1098
        %1711 = vmatpush1.bf16.msra.mxu0 %v1097
        %1712 = vmatprep.subr.bf16.mxu0 %v1102
        %1713 = vmatpush1.bf16.msra.mxu0 %v1101
        %1714 = vmatprep.subr.bf16.mxu0 %v1106
        %1715 = vmatpush1.bf16.msra.mxu0 %v1105
        %1716 = vmatprep.subr.bf16.mxu0 %v1110
        %1717 = vmatpush1.bf16.msra.mxu0 %v1109
        %1718 = vmatprep.subr.bf16.mxu0 %v1114
        %1719 = vmatpush1.bf16.msra.mxu0 %v1113
        %1720 = vmatprep.subr.bf16.mxu0 %v1118
        %1721 = vmatpush1.bf16.msra.mxu0 %v1117
        %1722 = vmatprep.subr.bf16.mxu0 %v1122
        %1723 = vmatpush1.bf16.msra.mxu0 %v1121
        %1724 = vmatprep.subr.bf16.mxu0 %v1126
        %1725 = vmatpush1.bf16.msra.mxu0 %v1125
        %1726 = vmatprep.subr.bf16.mxu0 0
        %1727 = vmatpush1.bf16.msra.mxu0 0
        %1728 = vmatprep.subr.bf16.mxu0 0
        %1729 = vmatpush1.bf16.msra.mxu0 0
        %1730 = vmatprep.subr.bf16.mxu0 0
        %1731 = vmatpush1.bf16.msra.mxu0 0
        %1732 = vmatprep.subr.bf16.mxu0 0
        %1733 = vmatpush1.bf16.msra.mxu0 0
        %1734 = vmatprep.subr.bf16.mxu0 0
        %1735 = vmatpush1.bf16.msra.mxu0 0
        %1736 = vmatprep.subr.bf16.mxu0 0
        %1737 = vmatpush1.bf16.msra.mxu0 0
        %1738 = vmatprep.subr.bf16.mxu0 0
        %1739 = vmatpush1.bf16.msra.mxu0 0
        %1740 = vmatprep.subr.bf16.mxu0 0
        %1741 = vmatpush1.bf16.msra.mxu0 0
        %1742 = vmatprep.mubr.bf16.mxu0 0
        %1743 = vmatmul.mubr.bf16.gmra.mrb[0].mxu0 %v1668
        %v1744 = vpop.f32.mrb[0].mxu0
        %v1745 = vadd.f32 0.0, %v1744
        %v1746 = vpop.f32.mrb[0].mxu0
        %v1747 = vadd.f32 0.0, %v1746
        %v1748 = vpop.f32.mrb[0].mxu0
        %v1749 = vpop.f32.mrb[0].mxu0
        %1750 = vdwg.mxu0
        %v1751 = vadd.f32 %v1664, %v1704
        %v1752 = vadd.f32 %v1665, %v1706
        %v1753 = vadd.f32 %v1666, %v1745
        %v1754 = vadd.f32 %v1667, %v1747
        %v1755 = vxor.u32 %v1751, 2147483648
        %v1756 = vmul.f32 %v1755, 1.442695
        %v1757 = vpow.pop %v1756
        %v1758 = vadd.f32 %v1757, 1.0
        %v1759 = vrcp.pop %v1758
        %v1760 = vmul.f32 1.0, %v1759
        %v1761 = vxor.u32 %v1752, 2147483648
        %v1762 = vmul.f32 %v1761, 1.442695
        %v1763 = vpow.pop %v1762
        %v1764 = vadd.f32 %v1763, 1.0
        %v1765 = vrcp.pop %v1764
        %v1766 = vmul.f32 1.0, %v1765
        %v1767 = vtanh.pop %v1753
        %v1768 = vxor.u32 %v1754, 2147483648
        %v1769 = vmul.f32 %v1768, 1.442695
        %v1770 = vpow.pop %v1769
        %v1771 = vadd.f32 %v1770, 1.0
        %v1772 = vrcp.pop %v1771
        %v1773 = vmul.f32 1.0, %v1772
        %v1774 = vmul.f32 %v1766, %v1660
        %v1775 = vmul.f32 %v1760, %v1767
        %v1776 = vadd.f32 %v1774, %v1775
        %v1777 = vtanh.pop %v1776
        %v1778 = vmul.f32 %v1773, %v1777
        %s1779 = sadd.s32 %s622, 4
        %v1780 = vstv %s1779
        %vm1781 = vcmp.gt.s32.totalorder %v621, %v1780
        %v1782 = vsel %vm1781, 1, 0
        %1783 = vset.pattern.permute.xlu0 0
        %1784 = vperm.xlu0 %1783, %v1782
        %v1785 = vpop.permute.xlu0 %1784
        %vm1786 = vcmp.eq.s32.totalorder %v1785, 1
        %v1787 = vsel %vm1786, %v1778, %v1659
        %v1788 = vsel %vm1786, %v1776, %v1660
        %s1789 = scalar_lea.vmem [#allocation4], 32
        %1790 = vst [vmem:[%s1789] sm:$0xff] %v1787
        %s1791 = scalar_lea.vmem [#allocation5], 160
        %v1792 = vld [vmem:[%s1791] sm:$0xff]
        %v1793 = vld [vmem:[%s1791 + $0x8] sm:$0xff]
        %v1794 = vld [vmem:[%s1791 + $0x10] sm:$0xff]
        %v1795 = vld [vmem:[%s1791 + $0x18] sm:$0xff]
        %v1796 = vpack.c.bf16 %v1787, %v1787
        %1797 = vmatprep.subr.bf16.mxu0 %v1096
        %1798 = vmatpush1.bf16.msra.mxu0 %v1095
        %1799 = vmatprep.subr.bf16.mxu0 %v1100
        %1800 = vmatpush1.bf16.msra.mxu0 %v1099
        %1801 = vmatprep.subr.bf16.mxu0 %v1104
        %1802 = vmatpush1.bf16.msra.mxu0 %v1103
        %1803 = vmatprep.subr.bf16.mxu0 %v1108
        %1804 = vmatpush1.bf16.msra.mxu0 %v1107
        %1805 = vmatprep.subr.bf16.mxu0 %v1112
        %1806 = vmatpush1.bf16.msra.mxu0 %v1111
        %1807 = vmatprep.subr.bf16.mxu0 %v1116
        %1808 = vmatpush1.bf16.msra.mxu0 %v1115
        %1809 = vmatprep.subr.bf16.mxu0 %v1120
        %1810 = vmatpush1.bf16.msra.mxu0 %v1119
        %1811 = vmatprep.subr.bf16.mxu0 %v1124
        %1812 = vmatpush1.bf16.msra.mxu0 %v1123
        %1813 = vmatprep.subr.bf16.mxu0 0
        %1814 = vmatpush1.bf16.msra.mxu0 0
        %1815 = vmatprep.subr.bf16.mxu0 0
        %1816 = vmatpush1.bf16.msra.mxu0 0
        %1817 = vmatprep.subr.bf16.mxu0 0
        %1818 = vmatpush1.bf16.msra.mxu0 0
        %1819 = vmatprep.subr.bf16.mxu0 0
        %1820 = vmatpush1.bf16.msra.mxu0 0
        %1821 = vmatprep.subr.bf16.mxu0 0
        %1822 = vmatpush1.bf16.msra.mxu0 0
        %1823 = vmatprep.subr.bf16.mxu0 0
        %1824 = vmatpush1.bf16.msra.mxu0 0
        %1825 = vmatprep.subr.bf16.mxu0 0
        %1826 = vmatpush1.bf16.msra.mxu0 0
        %1827 = vmatprep.subr.bf16.mxu0 0
        %1828 = vmatpush1.bf16.msra.mxu0 0
        %1829 = vmatprep.mubr.bf16.mxu0 0
        %1830 = vmatmul.mubr.bf16.gmra.mrb[0].mxu0 %v1796
        %v1831 = vpop.f32.mrb[0].mxu0
        %v1832 = vadd.f32 0.0, %v1831
        %v1833 = vpop.f32.mrb[0].mxu0
        %v1834 = vadd.f32 0.0, %v1833
        %v1835 = vpop.f32.mrb[0].mxu0
        %v1836 = vpop.f32.mrb[0].mxu0
        %1837 = vdwg.mxu0
        %1838 = vmatprep.subr.bf16.mxu0 %v1098
        %1839 = vmatpush1.bf16.msra.mxu0 %v1097
        %1840 = vmatprep.subr.bf16.mxu0 %v1102
        %1841 = vmatpush1.bf16.msra.mxu0 %v1101
        %1842 = vmatprep.subr.bf16.mxu0 %v1106
        %1843 = vmatpush1.bf16.msra.mxu0 %v1105
        %1844 = vmatprep.subr.bf16.mxu0 %v1110
        %1845 = vmatpush1.bf16.msra.mxu0 %v1109
        %1846 = vmatprep.subr.bf16.mxu0 %v1114
        %1847 = vmatpush1.bf16.msra.mxu0 %v1113
        %1848 = vmatprep.subr.bf16.mxu0 %v1118
        %1849 = vmatpush1.bf16.msra.mxu0 %v1117
        %1850 = vmatprep.subr.bf16.mxu0 %v1122
        %1851 = vmatpush1.bf16.msra.mxu0 %v1121
        %1852 = vmatprep.subr.bf16.mxu0 %v1126
        %1853 = vmatpush1.bf16.msra.mxu0 %v1125
        %1854 = vmatprep.subr.bf16.mxu0 0
        %1855 = vmatpush1.bf16.msra.mxu0 0
        %1856 = vmatprep.subr.bf16.mxu0 0
        %1857 = vmatpush1.bf16.msra.mxu0 0
        %1858 = vmatprep.subr.bf16.mxu0 0
        %1859 = vmatpush1.bf16.msra.mxu0 0
        %1860 = vmatprep.subr.bf16.mxu0 0
        %1861 = vmatpush1.bf16.msra.mxu0 0
        %1862 = vmatprep.subr.bf16.mxu0 0
        %1863 = vmatpush1.bf16.msra.mxu0 0
        %1864 = vmatprep.subr.bf16.mxu0 0
        %1865 = vmatpush1.bf16.msra.mxu0 0
        %1866 = vmatprep.subr.bf16.mxu0 0
        %1867 = vmatpush1.bf16.msra.mxu0 0
        %1868 = vmatprep.subr.bf16.mxu0 0
        %1869 = vmatpush1.bf16.msra.mxu0 0
        %1870 = vmatprep.mubr.bf16.mxu0 0
        %1871 = vmatmul.mubr.bf16.gmra.mrb[0].mxu0 %v1796
        %v1872 = vpop.f32.mrb[0].mxu0
        %v1873 = vadd.f32 0.0, %v1872
        %v1874 = vpop.f32.mrb[0].mxu0
        %v1875 = vadd.f32 0.0, %v1874
        %v1876 = vpop.f32.mrb[0].mxu0
        %v1877 = vpop.f32.mrb[0].mxu0
        %1878 = vdwg.mxu0
        %v1879 = vadd.f32 %v1792, %v1832
        %v1880 = vadd.f32 %v1793, %v1834
        %v1881 = vadd.f32 %v1794, %v1873
        %v1882 = vadd.f32 %v1795, %v1875
        %v1883 = vxor.u32 %v1879, 2147483648
        %v1884 = vmul.f32 %v1883, 1.442695
        %v1885 = vpow.pop %v1884
        %v1886 = vadd.f32 %v1885, 1.0
        %v1887 = vrcp.pop %v1886
        %v1888 = vmul.f32 1.0, %v1887
        %v1889 = vxor.u32 %v1880, 2147483648
        %v1890 = vmul.f32 %v1889, 1.442695
        %v1891 = vpow.pop %v1890
        %v1892 = vadd.f32 %v1891, 1.0
        %v1893 = vrcp.pop %v1892
        %v1894 = vmul.f32 1.0, %v1893
        %v1895 = vtanh.pop %v1881
        %v1896 = vxor.u32 %v1882, 2147483648
        %v1897 = vmul.f32 %v1896, 1.442695
        %v1898 = vpow.pop %v1897
        %v1899 = vadd.f32 %v1898, 1.0
        %v1900 = vrcp.pop %v1899
        %v1901 = vmul.f32 1.0, %v1900
        %v1902 = vmul.f32 %v1894, %v1788
        %v1903 = vmul.f32 %v1888, %v1895
        %v1904 = vadd.f32 %v1902, %v1903
        %v1905 = vtanh.pop %v1904
        %v1906 = vmul.f32 %v1901, %v1905
        %s1907 = sadd.s32 %s622, 5
        %v1908 = vstv %s1907
        %vm1909 = vcmp.gt.s32.totalorder %v621, %v1908
        %v1910 = vsel %vm1909, 1, 0
        %1911 = vset.pattern.permute.xlu0 0
        %1912 = vperm.xlu0 %1911, %v1910
        %v1913 = vpop.permute.xlu0 %1912
        %vm1914 = vcmp.eq.s32.totalorder %v1913, 1
        %v1915 = vsel %vm1914, %v1906, %v1787
        %v1916 = vsel %vm1914, %v1904, %v1788
        %s1917 = scalar_lea.vmem [#allocation4], 40
        %1918 = vst [vmem:[%s1917] sm:$0xff] %v1915
        %s1919 = scalar_lea.vmem [#allocation5], 192
        %v1920 = vld [vmem:[%s1919] sm:$0xff]
        %v1921 = vld [vmem:[%s1919 + $0x8] sm:$0xff]
        %v1922 = vld [vmem:[%s1919 + $0x10] sm:$0xff]
        %v1923 = vld [vmem:[%s1919 + $0x18] sm:$0xff]
        %v1924 = vpack.c.bf16 %v1915, %v1915
        %1925 = vmatprep.subr.bf16.mxu0 %v1096
        %1926 = vmatpush1.bf16.msra.mxu0 %v1095
        %1927 = vmatprep.subr.bf16.mxu0 %v1100
        %1928 = vmatpush1.bf16.msra.mxu0 %v1099
        %1929 = vmatprep.subr.bf16.mxu0 %v1104
        %1930 = vmatpush1.bf16.msra.mxu0 %v1103
        %1931 = vmatprep.subr.bf16.mxu0 %v1108
        %1932 = vmatpush1.bf16.msra.mxu0 %v1107
        %1933 = vmatprep.subr.bf16.mxu0 %v1112
        %1934 = vmatpush1.bf16.msra.mxu0 %v1111
        %1935 = vmatprep.subr.bf16.mxu0 %v1116
        %1936 = vmatpush1.bf16.msra.mxu0 %v1115
        %1937 = vmatprep.subr.bf16.mxu0 %v1120
        %1938 = vmatpush1.bf16.msra.mxu0 %v1119
        %1939 = vmatprep.subr.bf16.mxu0 %v1124
        %1940 = vmatpush1.bf16.msra.mxu0 %v1123
        %1941 = vmatprep.subr.bf16.mxu0 0
        %1942 = vmatpush1.bf16.msra.mxu0 0
        %1943 = vmatprep.subr.bf16.mxu0 0
        %1944 = vmatpush1.bf16.msra.mxu0 0
        %1945 = vmatprep.subr.bf16.mxu0 0
        %1946 = vmatpush1.bf16.msra.mxu0 0
        %1947 = vmatprep.subr.bf16.mxu0 0
        %1948 = vmatpush1.bf16.msra.mxu0 0
        %1949 = vmatprep.subr.bf16.mxu0 0
        %1950 = vmatpush1.bf16.msra.mxu0 0
        %1951 = vmatprep.subr.bf16.mxu0 0
        %1952 = vmatpush1.bf16.msra.mxu0 0
        %1953 = vmatprep.subr.bf16.mxu0 0
        %1954 = vmatpush1.bf16.msra.mxu0 0
        %1955 = vmatprep.subr.bf16.mxu0 0
        %1956 = vmatpush1.bf16.msra.mxu0 0
        %1957 = vmatprep.mubr.bf16.mxu0 0
        %1958 = vmatmul.mubr.bf16.gmra.mrb[0].mxu0 %v1924
        %v1959 = vpop.f32.mrb[0].mxu0
        %v1960 = vadd.f32 0.0, %v1959
        %v1961 = vpop.f32.mrb[0].mxu0
        %v1962 = vadd.f32 0.0, %v1961
        %v1963 = vpop.f32.mrb[0].mxu0
        %v1964 = vpop.f32.mrb[0].mxu0
        %1965 = vdwg.mxu0
        %1966 = vmatprep.subr.bf16.mxu0 %v1098
        %1967 = vmatpush1.bf16.msra.mxu0 %v1097
        %1968 = vmatprep.subr.bf16.mxu0 %v1102
        %1969 = vmatpush1.bf16.msra.mxu0 %v1101
        %1970 = vmatprep.subr.bf16.mxu0 %v1106
        %1971 = vmatpush1.bf16.msra.mxu0 %v1105
        %1972 = vmatprep.subr.bf16.mxu0 %v1110
        %1973 = vmatpush1.bf16.msra.mxu0 %v1109
        %1974 = vmatprep.subr.bf16.mxu0 %v1114
        %1975 = vmatpush1.bf16.msra.mxu0 %v1113
        %1976 = vmatprep.subr.bf16.mxu0 %v1118
        %1977 = vmatpush1.bf16.msra.mxu0 %v1117
        %1978 = vmatprep.subr.bf16.mxu0 %v1122
        %1979 = vmatpush1.bf16.msra.mxu0 %v1121
        %1980 = vmatprep.subr.bf16.mxu0 %v1126
        %1981 = vmatpush1.bf16.msra.mxu0 %v1125
        %1982 = vmatprep.subr.bf16.mxu0 0
        %1983 = vmatpush1.bf16.msra.mxu0 0
        %1984 = vmatprep.subr.bf16.mxu0 0
        %1985 = vmatpush1.bf16.msra.mxu0 0
        %1986 = vmatprep.subr.bf16.mxu0 0
        %1987 = vmatpush1.bf16.msra.mxu0 0
        %1988 = vmatprep.subr.bf16.mxu0 0
        %1989 = vmatpush1.bf16.msra.mxu0 0
        %1990 = vmatprep.subr.bf16.mxu0 0
        %1991 = vmatpush1.bf16.msra.mxu0 0
        %1992 = vmatprep.subr.bf16.mxu0 0
        %1993 = vmatpush1.bf16.msra.mxu0 0
        %1994 = vmatprep.subr.bf16.mxu0 0
        %1995 = vmatpush1.bf16.msra.mxu0 0
        %1996 = vmatprep.subr.bf16.mxu0 0
        %1997 = vmatpush1.bf16.msra.mxu0 0
        %1998 = vmatprep.mubr.bf16.mxu0 0
        %1999 = vmatmul.mubr.bf16.gmra.mrb[0].mxu0 %v1924
        %v2000 = vpop.f32.mrb[0].mxu0
        %v2001 = vadd.f32 0.0, %v2000
        %v2002 = vpop.f32.mrb[0].mxu0
        %v2003 = vadd.f32 0.0, %v2002
        %v2004 = vpop.f32.mrb[0].mxu0
        %v2005 = vpop.f32.mrb[0].mxu0
        %2006 = vdwg.mxu0
        %v2007 = vadd.f32 %v1920, %v1960
        %v2008 = vadd.f32 %v1921, %v1962
        %v2009 = vadd.f32 %v1922, %v2001
        %v2010 = vadd.f32 %v1923, %v2003
        %v2011 = vxor.u32 %v2007, 2147483648
        %v2012 = vmul.f32 %v2011, 1.442695
        %v2013 = vpow.pop %v2012
        %v2014 = vadd.f32 %v2013, 1.0
        %v2015 = vrcp.pop %v2014
        %v2016 = vmul.f32 1.0, %v2015
        %v2017 = vxor.u32 %v2008, 2147483648
        %v2018 = vmul.f32 %v2017, 1.442695
        %v2019 = vpow.pop %v2018
        %v2020 = vadd.f32 %v2019, 1.0
        %v2021 = vrcp.pop %v2020
        %v2022 = vmul.f32 1.0, %v2021
        %v2023 = vtanh.pop %v2009
        %v2024 = vxor.u32 %v2010, 2147483648
        %v2025 = vmul.f32 %v2024, 1.442695
        %v2026 = vpow.pop %v2025
        %v2027 = vadd.f32 %v2026, 1.0
        %v2028 = vrcp.pop %v2027
        %v2029 = vmul.f32 1.0, %v2028
        %v2030 = vmul.f32 %v2022, %v1916
        %v2031 = vmul.f32 %v2016, %v2023
        %v2032 = vadd.f32 %v2030, %v2031
        %v2033 = vtanh.pop %v2032
        %v2034 = vmul.f32 %v2029, %v2033
        %s2035 = sadd.s32 %s622, 6
        %v2036 = vstv %s2035
        %vm2037 = vcmp.gt.s32.totalorder %v621, %v2036
        %v2038 = vsel %vm2037, 1, 0
        %2039 = vset.pattern.permute.xlu0 0
        %2040 = vperm.xlu0 %2039, %v2038
        %v2041 = vpop.permute.xlu0 %2040
        %vm2042 = vcmp.eq.s32.totalorder %v2041, 1
        %v2043 = vsel %vm2042, %v2034, %v1915
        %v2044 = vsel %vm2042, %v2032, %v1916
        %s2045 = scalar_lea.vmem [#allocation4], 48
        %2046 = vst [vmem:[%s2045] sm:$0xff] %v2043
        %s2047 = scalar_lea.vmem [#allocation5], 224
        %v2048 = vld [vmem:[%s2047] sm:$0xff]
        %v2049 = vld [vmem:[%s2047 + $0x8] sm:$0xff]
        %v2050 = vld [vmem:[%s2047 + $0x10] sm:$0xff]
        %v2051 = vld [vmem:[%s2047 + $0x18] sm:$0xff]
        %v2052 = vpack.c.bf16 %v2043, %v2043
        %2053 = vmatprep.subr.bf16.mxu0 %v1096
        %2054 = vmatpush1.bf16.msra.mxu0 %v1095
        %2055 = vmatprep.subr.bf16.mxu0 %v1100
        %2056 = vmatpush1.bf16.msra.mxu0 %v1099
        %2057 = vmatprep.subr.bf16.mxu0 %v1104
        %2058 = vmatpush1.bf16.msra.mxu0 %v1103
        %2059 = vmatprep.subr.bf16.mxu0 %v1108
        %2060 = vmatpush1.bf16.msra.mxu0 %v1107
        %2061 = vmatprep.subr.bf16.mxu0 %v1112
        %2062 = vmatpush1.bf16.msra.mxu0 %v1111
        %2063 = vmatprep.subr.bf16.mxu0 %v1116
        %2064 = vmatpush1.bf16.msra.mxu0 %v1115
        %2065 = vmatprep.subr.bf16.mxu0 %v1120
        %2066 = vmatpush1.bf16.msra.mxu0 %v1119
        %2067 = vmatprep.subr.bf16.mxu0 %v1124
        %2068 = vmatpush1.bf16.msra.mxu0 %v1123
        %2069 = vmatprep.subr.bf16.mxu0 0
        %2070 = vmatpush1.bf16.msra.mxu0 0
        %2071 = vmatprep.subr.bf16.mxu0 0
        %2072 = vmatpush1.bf16.msra.mxu0 0
        %2073 = vmatprep.subr.bf16.mxu0 0
        %2074 = vmatpush1.bf16.msra.mxu0 0
        %2075 = vmatprep.subr.bf16.mxu0 0
        %2076 = vmatpush1.bf16.msra.mxu0 0
        %2077 = vmatprep.subr.bf16.mxu0 0
        %2078 = vmatpush1.bf16.msra.mxu0 0
        %2079 = vmatprep.subr.bf16.mxu0 0
        %2080 = vmatpush1.bf16.msra.mxu0 0
        %2081 = vmatprep.subr.bf16.mxu0 0
        %2082 = vmatpush1.bf16.msra.mxu0 0
        %2083 = vmatprep.subr.bf16.mxu0 0
        %2084 = vmatpush1.bf16.msra.mxu0 0
        %2085 = vmatprep.mubr.bf16.mxu0 0
        %2086 = vmatmul.mubr.bf16.gmra.mrb[0].mxu0 %v2052
        %v2087 = vpop.f32.mrb[0].mxu0
        %v2088 = vadd.f32 0.0, %v2087
        %v2089 = vpop.f32.mrb[0].mxu0
        %v2090 = vadd.f32 0.0, %v2089
        %v2091 = vpop.f32.mrb[0].mxu0
        %v2092 = vpop.f32.mrb[0].mxu0
        %2093 = vdwg.mxu0
        %2094 = vmatprep.subr.bf16.mxu0 %v1098
        %2095 = vmatpush1.bf16.msra.mxu0 %v1097
        %2096 = vmatprep.subr.bf16.mxu0 %v1102
        %2097 = vmatpush1.bf16.msra.mxu0 %v1101
        %2098 = vmatprep.subr.bf16.mxu0 %v1106
        %2099 = vmatpush1.bf16.msra.mxu0 %v1105
        %2100 = vmatprep.subr.bf16.mxu0 %v1110
        %2101 = vmatpush1.bf16.msra.mxu0 %v1109
        %2102 = vmatprep.subr.bf16.mxu0 %v1114
        %2103 = vmatpush1.bf16.msra.mxu0 %v1113
        %2104 = vmatprep.subr.bf16.mxu0 %v1118
        %2105 = vmatpush1.bf16.msra.mxu0 %v1117
        %2106 = vmatprep.subr.bf16.mxu0 %v1122
        %2107 = vmatpush1.bf16.msra.mxu0 %v1121
        %2108 = vmatprep.subr.bf16.mxu0 %v1126
        %2109 = vmatpush1.bf16.msra.mxu0 %v1125
        %2110 = vmatprep.subr.bf16.mxu0 0
        %2111 = vmatpush1.bf16.msra.mxu0 0
        %2112 = vmatprep.subr.bf16.mxu0 0
        %2113 = vmatpush1.bf16.msra.mxu0 0
        %2114 = vmatprep.subr.bf16.mxu0 0
        %2115 = vmatpush1.bf16.msra.mxu0 0
        %2116 = vmatprep.subr.bf16.mxu0 0
        %2117 = vmatpush1.bf16.msra.mxu0 0
        %2118 = vmatprep.subr.bf16.mxu0 0
        %2119 = vmatpush1.bf16.msra.mxu0 0
        %2120 = vmatprep.subr.bf16.mxu0 0
        %2121 = vmatpush1.bf16.msra.mxu0 0
        %2122 = vmatprep.subr.bf16.mxu0 0
        %2123 = vmatpush1.bf16.msra.mxu0 0
        %2124 = vmatprep.subr.bf16.mxu0 0
        %2125 = vmatpush1.bf16.msra.mxu0 0
        %2126 = vmatprep.mubr.bf16.mxu0 0
        %2127 = vmatmul.mubr.bf16.gmra.mrb[0].mxu0 %v2052
        %v2128 = vpop.f32.mrb[0].mxu0
        %v2129 = vadd.f32 0.0, %v2128
        %v2130 = vpop.f32.mrb[0].mxu0
        %v2131 = vadd.f32 0.0, %v2130
        %v2132 = vpop.f32.mrb[0].mxu0
        %v2133 = vpop.f32.mrb[0].mxu0
        %2134 = vdwg.mxu0
        %v2135 = vadd.f32 %v2048, %v2088
        %v2136 = vadd.f32 %v2049, %v2090
        %v2137 = vadd.f32 %v2050, %v2129
        %v2138 = vadd.f32 %v2051, %v2131
        %v2139 = vxor.u32 %v2135, 2147483648
        %v2140 = vmul.f32 %v2139, 1.442695
        %v2141 = vpow.pop %v2140
        %v2142 = vadd.f32 %v2141, 1.0
        %v2143 = vrcp.pop %v2142
        %v2144 = vmul.f32 1.0, %v2143
        %v2145 = vxor.u32 %v2136, 2147483648
        %v2146 = vmul.f32 %v2145, 1.442695
        %v2147 = vpow.pop %v2146
        %v2148 = vadd.f32 %v2147, 1.0
        %v2149 = vrcp.pop %v2148
        %v2150 = vmul.f32 1.0, %v2149
        %v2151 = vtanh.pop %v2137
        %v2152 = vxor.u32 %v2138, 2147483648
        %v2153 = vmul.f32 %v2152, 1.442695
        %v2154 = vpow.pop %v2153
        %v2155 = vadd.f32 %v2154, 1.0
        %v2156 = vrcp.pop %v2155
        %v2157 = vmul.f32 1.0, %v2156
        %v2158 = vmul.f32 %v2150, %v2044
        %v2159 = vmul.f32 %v2144, %v2151
        %v2160 = vadd.f32 %v2158, %v2159
        %v2161 = vtanh.pop %v2160
        %v2162 = vmul.f32 %v2157, %v2161
        %s2163 = sadd.s32 %s622, 7
        %v2164 = vstv %s2163
        %vm2165 = vcmp.gt.s32.totalorder %v621, %v2164
        %v2166 = vsel %vm2165, 1, 0
        %2167 = vset.pattern.permute.xlu0 0
        %2168 = vperm.xlu0 %2167, %v2166
        %v2169 = vpop.permute.xlu0 %2168
        %vm2170 = vcmp.eq.s32.totalorder %v2169, 1
        %v2171 = vsel %vm2170, %v2162, %v2043
        %v2172 = vsel %vm2170, %v2160, %v2044
        %s2173 = scalar_lea.vmem [#allocation4], 56
        %2174 = vst [vmem:[%s2173] sm:$0xff] %v2171
        %2175 = vst [vmem:[#allocation2] sm:$0xff] %v2171
        %2176 = vst [vmem:[#allocation3] sm:$0xff] %v2172
        %v2177 = vld [vmem:[#allocation4] sm:$0xff]
        %v2178 = vld [vmem:[#allocation4 + $0x8] sm:$0xff]
        %v2179 = vld [vmem:[#allocation4 + $0x10] sm:$0xff]
        %v2180 = vld [vmem:[#allocation4 + $0x18] sm:$0xff]
        %v2181 = vld [vmem:[#allocation4 + $0x20] sm:$0xff]
        %v2182 = vld [vmem:[#allocation4 + $0x28] sm:$0xff]
        %v2183 = vld [vmem:[#allocation4 + $0x30] sm:$0xff]
        %v2184 = vld [vmem:[#allocation4 + $0x38] sm:$0xff]
        %v2185 = vpack.c.bf16 %v2177, %v2177
        %v2186 = vpack.c.bf16 %v2178, %v2178
        %v2187 = vpack.c.bf16 %v2179, %v2179
        %v2188 = vpack.c.bf16 %v2180, %v2180
        %v2189 = vpack.c.bf16 %v2181, %v2181
        %v2190 = vpack.c.bf16 %v2182, %v2182
        %v2191 = vpack.c.bf16 %v2183, %v2183
        %v2192 = vpack.c.bf16 %v2184, %v2184
        %v2193 = vld [vmem:[#allocation12] sm:$0xff]
        %v2194 = vld [vmem:[#allocation12 + $0x8] sm:$0xff]
        %v2195 = vld [vmem:[#allocation12 + $0x10] sm:$0xff]
        %v2196 = vld [vmem:[#allocation12 + $0x18] sm:$0xff]
        %v2197 = vld [vmem:[#allocation12 + $0x20] sm:$0xff]
        %v2198 = vld [vmem:[#allocation12 + $0x28] sm:$0xff]
        %v2199 = vld [vmem:[#allocation12 + $0x30] sm:$0xff]
        %v2200 = vld [vmem:[#allocation12 + $0x38] sm:$0xff]
        %v2201 = vld [vmem:[#allocation12 + $0x40] sm:$0xff]
        %v2202 = vld [vmem:[#allocation12 + $0x48] sm:$0xff]
        %v2203 = vld [vmem:[#allocation12 + $0x50] sm:$0xff]
        %v2204 = vld [vmem:[#allocation12 + $0x58] sm:$0xff]
        %v2205 = vld [vmem:[#allocation12 + $0x60] sm:$0xff]
        %v2206 = vld [vmem:[#allocation12 + $0x68] sm:$0xff]
        %v2207 = vld [vmem:[#allocation12 + $0x70] sm:$0xff]
        %v2208 = vld [vmem:[#allocation12 + $0x78] sm:$0xff]
        %v2209 = vld [vmem:[#allocation12 + $0x80] sm:$0xff]
        %v2210 = vld [vmem:[#allocation12 + $0x88] sm:$0xff]
        %v2211 = vld [vmem:[#allocation12 + $0x90] sm:$0xff]
        %v2212 = vld [vmem:[#allocation12 + $0x98] sm:$0xff]
        %v2213 = vld [vmem:[#allocation12 + $0xa0] sm:$0xff]
        %v2214 = vld [vmem:[#allocation12 + $0xa8] sm:$0xff]
        %v2215 = vld [vmem:[#allocation12 + $0xb0] sm:$0xff]
        %v2216 = vld [vmem:[#allocation12 + $0xb8] sm:$0xff]
        %v2217 = vld [vmem:[#allocation12 + $0xc0] sm:$0xff]
        %v2218 = vld [vmem:[#allocation12 + $0xc8] sm:$0xff]
        %v2219 = vld [vmem:[#allocation12 + $0xd0] sm:$0xff]
        %v2220 = vld [vmem:[#allocation12 + $0xd8] sm:$0xff]
        %v2221 = vld [vmem:[#allocation12 + $0xe0] sm:$0xff]
        %v2222 = vld [vmem:[#allocation12 + $0xe8] sm:$0xff]
        %v2223 = vld [vmem:[#allocation12 + $0xf0] sm:$0xff]
        %v2224 = vld [vmem:[#allocation12 + $0xf8] sm:$0xff]
        %v2225 = vld [vmem:[#allocation14] sm:$0xf]
        %v2227 = vlaneseq
        %v2228 = vshrl.u32 %v2227, 7
        %v2229 = vsub.s32 0, %v2228
        %v2230 = vrot.slane %v2225, %v2229
        %v2231 = vlaneseq
        %v2232 = vshrl.u32 %v2231, 7
        %v2233 = vsub.s32 1, %v2232
        %v2234 = vrot.slane %v2225, %v2233
        %v2235 = vlaneseq
        %v2236 = vshrl.u32 %v2235, 7
        %v2237 = vsub.s32 2, %v2236
        %v2238 = vrot.slane %v2225, %v2237
        %v2239 = vlaneseq
        %v2240 = vshrl.u32 %v2239, 7
        %v2241 = vsub.s32 3, %v2240
        %v2242 = vrot.slane %v2225, %v2241
        %v2255 = vunpack.c.l.b16 %v2185
        %v2256 = vunpack.c.l.b16 %v2186
        %v2257 = vunpack.c.l.b16 %v2187
        %v2258 = vunpack.c.l.b16 %v2188
        %v2259 = vunpack.c.l.b16 %v2189
        %v2260 = vunpack.c.l.b16 %v2190
        %v2261 = vunpack.c.l.b16 %v2191
        %v2262 = vunpack.c.l.b16 %v2192
        %v2263 = vpack.c.b16 %v2256, %v2255
        %v2264 = vpack.c.b16 %v2258, %v2257
        %v2265 = vpack.c.b16 %v2260, %v2259
        %v2266 = vpack.c.b16 %v2262, %v2261
        %v2303 = vunpack.c.l.b16 %v2193
        %v2304 = vunpack.c.h.b16 %v2193
        %v2305 = vunpack.c.l.b16 %v2194
        %v2306 = vunpack.c.h.b16 %v2194
        %v2307 = vunpack.c.l.b16 %v2195
        %v2308 = vunpack.c.h.b16 %v2195
        %v2309 = vunpack.c.l.b16 %v2196
        %v2310 = vunpack.c.h.b16 %v2196
        %v2311 = vunpack.c.l.b16 %v2197
        %v2312 = vunpack.c.h.b16 %v2197
        %v2313 = vunpack.c.l.b16 %v2198
        %v2314 = vunpack.c.h.b16 %v2198
        %v2315 = vunpack.c.l.b16 %v2199
        %v2316 = vunpack.c.h.b16 %v2199
        %v2317 = vunpack.c.l.b16 %v2200
        %v2318 = vunpack.c.h.b16 %v2200
        %v2319 = vunpack.c.l.b16 %v2201
        %v2320 = vunpack.c.h.b16 %v2201
        %v2321 = vunpack.c.l.b16 %v2202
        %v2322 = vunpack.c.h.b16 %v2202
        %v2323 = vunpack.c.l.b16 %v2203
        %v2324 = vunpack.c.h.b16 %v2203
        %v2325 = vunpack.c.l.b16 %v2204
        %v2326 = vunpack.c.h.b16 %v2204
        %v2327 = vunpack.c.l.b16 %v2205
        %v2328 = vunpack.c.h.b16 %v2205
        %v2329 = vunpack.c.l.b16 %v2206
        %v2330 = vunpack.c.h.b16 %v2206
        %v2331 = vunpack.c.l.b16 %v2207
        %v2332 = vunpack.c.h.b16 %v2207
        %v2333 = vunpack.c.l.b16 %v2208
        %v2334 = vunpack.c.h.b16 %v2208
        %v2335 = vunpack.c.l.b16 %v2209
        %v2336 = vunpack.c.h.b16 %v2209
        %v2337 = vunpack.c.l.b16 %v2210
        %v2338 = vunpack.c.h.b16 %v2210
        %v2339 = vunpack.c.l.b16 %v2211
        %v2340 = vunpack.c.h.b16 %v2211
        %v2341 = vunpack.c.l.b16 %v2212
        %v2342 = vunpack.c.h.b16 %v2212
        %v2343 = vunpack.c.l.b16 %v2213
        %v2344 = vunpack.c.h.b16 %v2213
        %v2345 = vunpack.c.l.b16 %v2214
        %v2346 = vunpack.c.h.b16 %v2214
        %v2347 = vunpack.c.l.b16 %v2215
        %v2348 = vunpack.c.h.b16 %v2215
        %v2349 = vunpack.c.l.b16 %v2216
        %v2350 = vunpack.c.h.b16 %v2216
        %v2351 = vunpack.c.l.b16 %v2217
        %v2352 = vunpack.c.h.b16 %v2217
        %v2353 = vunpack.c.l.b16 %v2218
        %v2354 = vunpack.c.h.b16 %v2218
        %v2355 = vunpack.c.l.b16 %v2219
        %v2356 = vunpack.c.h.b16 %v2219
        %v2357 = vunpack.c.l.b16 %v2220
        %v2358 = vunpack.c.h.b16 %v2220
        %v2359 = vunpack.c.l.b16 %v2221
        %v2360 = vunpack.c.h.b16 %v2221
        %v2361 = vunpack.c.l.b16 %v2222
        %v2362 = vunpack.c.h.b16 %v2222
        %v2363 = vunpack.c.l.b16 %v2223
        %v2364 = vunpack.c.h.b16 %v2223
        %v2365 = vunpack.c.l.b16 %v2224
        %v2366 = vunpack.c.h.b16 %v2224
        %v2367 = vpack.c.b16 %v2307, %v2303
        %v2368 = vpack.c.b16 %v2308, %v2304
        %v2369 = vpack.c.b16 %v2309, %v2305
        %v2370 = vpack.c.b16 %v2310, %v2306
        %v2371 = vpack.c.b16 %v2315, %v2311
        %v2372 = vpack.c.b16 %v2316, %v2312
        %v2373 = vpack.c.b16 %v2317, %v2313
        %v2374 = vpack.c.b16 %v2318, %v2314
        %v2375 = vpack.c.b16 %v2323, %v2319
        %v2376 = vpack.c.b16 %v2324, %v2320
        %v2377 = vpack.c.b16 %v2325, %v2321
        %v2378 = vpack.c.b16 %v2326, %v2322
        %v2379 = vpack.c.b16 %v2331, %v2327
        %v2380 = vpack.c.b16 %v2332, %v2328
        %v2381 = vpack.c.b16 %v2333, %v2329
        %v2382 = vpack.c.b16 %v2334, %v2330
        %v2383 = vpack.c.b16 %v2339, %v2335
        %v2384 = vpack.c.b16 %v2340, %v2336
        %v2385 = vpack.c.b16 %v2341, %v2337
        %v2386 = vpack.c.b16 %v2342, %v2338
        %v2387 = vpack.c.b16 %v2347, %v2343
        %v2388 = vpack.c.b16 %v2348, %v2344
        %v2389 = vpack.c.b16 %v2349, %v2345
        %v2390 = vpack.c.b16 %v2350, %v2346
        %v2391 = vpack.c.b16 %v2355, %v2351
        %v2392 = vpack.c.b16 %v2356, %v2352
        %v2393 = vpack.c.b16 %v2357, %v2353
        %v2394 = vpack.c.b16 %v2358, %v2354
        %v2395 = vpack.c.b16 %v2363, %v2359
        %v2396 = vpack.c.b16 %v2364, %v2360
        %v2397 = vpack.c.b16 %v2365, %v2361
        %v2398 = vpack.c.b16 %v2366, %v2362
        %2431 = vmatprep.subr.bf16.mxu0 %v2368
        %2432 = vmatpush1.bf16.msra.mxu0 %v2367
        %2433 = vmatprep.subr.bf16.mxu0 %v2372
        %2434 = vmatpush1.bf16.msra.mxu0 %v2371
        %2435 = vmatprep.subr.bf16.mxu0 %v2376
        %2436 = vmatpush1.bf16.msra.mxu0 %v2375
        %2437 = vmatprep.subr.bf16.mxu0 %v2380
        %2438 = vmatpush1.bf16.msra.mxu0 %v2379
        %2439 = vmatprep.subr.bf16.mxu0 %v2384
        %2440 = vmatpush1.bf16.msra.mxu0 %v2383
        %2441 = vmatprep.subr.bf16.mxu0 %v2388
        %2442 = vmatpush1.bf16.msra.mxu0 %v2387
        %2443 = vmatprep.subr.bf16.mxu0 %v2392
        %2444 = vmatpush1.bf16.msra.mxu0 %v2391
        %2445 = vmatprep.subr.bf16.mxu0 %v2396
        %2446 = vmatpush1.bf16.msra.mxu0 %v2395
        %2447 = vmatprep.subr.bf16.mxu0 0
        %2448 = vmatpush1.bf16.msra.mxu0 0
        %2449 = vmatprep.subr.bf16.mxu0 0
        %2450 = vmatpush1.bf16.msra.mxu0 0
        %2451 = vmatprep.subr.bf16.mxu0 0
        %2452 = vmatpush1.bf16.msra.mxu0 0
        %2453 = vmatprep.subr.bf16.mxu0 0
        %2454 = vmatpush1.bf16.msra.mxu0 0
        %2455 = vmatprep.subr.bf16.mxu0 0
        %2456 = vmatpush1.bf16.msra.mxu0 0
        %2457 = vmatprep.subr.bf16.mxu0 0
        %2458 = vmatpush1.bf16.msra.mxu0 0
        %2459 = vmatprep.subr.bf16.mxu0 0
        %2460 = vmatpush1.bf16.msra.mxu0 0
        %2461 = vmatprep.subr.bf16.mxu0 0
        %2462 = vmatpush1.bf16.msra.mxu0 0
        %2463 = vmatprep.mubr.bf16.mxu0 0
        %2464 = vmatmul.mubr.bf16.gmra.mrb[0].mxu0 %v2263
        %v2465 = vpop.f32.mrb[0].mxu0
        %v2466 = vadd.f32 %v2230, %v2465
        %v2467 = vpop.f32.mrb[0].mxu0
        %v2468 = vadd.f32 %v2234, %v2467
        %v2469 = vpop.f32.mrb[0].mxu0
        %v2470 = vadd.f32 %v2230, %v2469
        %v2471 = vpop.f32.mrb[0].mxu0
        %v2472 = vadd.f32 %v2234, %v2471
        %2473 = vmatprep.mubr.bf16.mxu0 0
        %2474 = vmatmul.mubr.bf16.gmra.mrb[0].mxu0 %v2264
        %v2475 = vpop.f32.mrb[0].mxu0
        %v2476 = vadd.f32 %v2230, %v2475
        %v2477 = vpop.f32.mrb[0].mxu0
        %v2478 = vadd.f32 %v2234, %v2477
        %v2479 = vpop.f32.mrb[0].mxu0
        %v2480 = vadd.f32 %v2230, %v2479
        %v2481 = vpop.f32.mrb[0].mxu0
        %v2482 = vadd.f32 %v2234, %v2481
        %2483 = vmatprep.mubr.bf16.mxu0 0
        %2484 = vmatmul.mubr.bf16.gmra.mrb[0].mxu0 %v2265
        %v2485 = vpop.f32.mrb[0].mxu0
        %v2486 = vadd.f32 %v2230, %v2485
        %v2487 = vpop.f32.mrb[0].mxu0
        %v2488 = vadd.f32 %v2234, %v2487
        %v2489 = vpop.f32.mrb[0].mxu0
        %v2490 = vadd.f32 %v2230, %v2489
        %v2491 = vpop.f32.mrb[0].mxu0
        %v2492 = vadd.f32 %v2234, %v2491
        %2493 = vmatprep.mubr.bf16.mxu0 0
        %2494 = vmatmul.mubr.bf16.gmra.mrb[0].mxu0 %v2266
        %v2495 = vpop.f32.mrb[0].mxu0
        %v2496 = vadd.f32 %v2230, %v2495
        %v2497 = vpop.f32.mrb[0].mxu0
        %v2498 = vadd.f32 %v2234, %v2497
        %v2499 = vpop.f32.mrb[0].mxu0
        %v2500 = vadd.f32 %v2230, %v2499
        %v2501 = vpop.f32.mrb[0].mxu0
        %v2502 = vadd.f32 %v2234, %v2501
        %2503 = vdwg.mxu0
        %2504 = vmatprep.subr.bf16.mxu0 %v2370
        %2505 = vmatpush1.bf16.msra.mxu0 %v2369
        %2506 = vmatprep.subr.bf16.mxu0 %v2374
        %2507 = vmatpush1.bf16.msra.mxu0 %v2373
        %2508 = vmatprep.subr.bf16.mxu0 %v2378
        %2509 = vmatpush1.bf16.msra.mxu0 %v2377
        %2510 = vmatprep.subr.bf16.mxu0 %v2382
        %2511 = vmatpush1.bf16.msra.mxu0 %v2381
        %2512 = vmatprep.subr.bf16.mxu0 %v2386
        %2513 = vmatpush1.bf16.msra.mxu0 %v2385
        %2514 = vmatprep.subr.bf16.mxu0 %v2390
        %2515 = vmatpush1.bf16.msra.mxu0 %v2389
        %2516 = vmatprep.subr.bf16.mxu0 %v2394
        %2517 = vmatpush1.bf16.msra.mxu0 %v2393
        %2518 = vmatprep.subr.bf16.mxu0 %v2398
        %2519 = vmatpush1.bf16.msra.mxu0 %v2397
        %2520 = vmatprep.subr.bf16.mxu0 0
        %2521 = vmatpush1.bf16.msra.mxu0 0
        %2522 = vmatprep.subr.bf16.mxu0 0
        %2523 = vmatpush1.bf16.msra.mxu0 0
        %2524 = vmatprep.subr.bf16.mxu0 0
        %2525 = vmatpush1.bf16.msra.mxu0 0
        %2526 = vmatprep.subr.bf16.mxu0 0
        %2527 = vmatpush1.bf16.msra.mxu0 0
        %2528 = vmatprep.subr.bf16.mxu0 0
        %2529 = vmatpush1.bf16.msra.mxu0 0
        %2530 = vmatprep.subr.bf16.mxu0 0
        %2531 = vmatpush1.bf16.msra.mxu0 0
        %2532 = vmatprep.subr.bf16.mxu0 0
        %2533 = vmatpush1.bf16.msra.mxu0 0
        %2534 = vmatprep.subr.bf16.mxu0 0
        %2535 = vmatpush1.bf16.msra.mxu0 0
        %2536 = vmatprep.mubr.bf16.mxu0 0
        %2537 = vmatmul.mubr.bf16.gmra.mrb[0].mxu0 %v2263
        %v2538 = vpop.f32.mrb[0].mxu0
        %v2539 = vadd.f32 %v2238, %v2538
        %v2540 = vpop.f32.mrb[0].mxu0
        %v2541 = vadd.f32 %v2242, %v2540
        %v2542 = vpop.f32.mrb[0].mxu0
        %v2543 = vadd.f32 %v2238, %v2542
        %v2544 = vpop.f32.mrb[0].mxu0
        %v2545 = vadd.f32 %v2242, %v2544
        %2546 = vmatprep.mubr.bf16.mxu0 0
        %2547 = vmatmul.mubr.bf16.gmra.mrb[0].mxu0 %v2264
        %v2548 = vpop.f32.mrb[0].mxu0
        %v2549 = vadd.f32 %v2238, %v2548
        %v2550 = vpop.f32.mrb[0].mxu0
        %v2551 = vadd.f32 %v2242, %v2550
        %v2552 = vpop.f32.mrb[0].mxu0
        %v2553 = vadd.f32 %v2238, %v2552
        %v2554 = vpop.f32.mrb[0].mxu0
        %v2555 = vadd.f32 %v2242, %v2554
        %2556 = vmatprep.mubr.bf16.mxu0 0
        %2557 = vmatmul.mubr.bf16.gmra.mrb[0].mxu0 %v2265
        %v2558 = vpop.f32.mrb[0].mxu0
        %v2559 = vadd.f32 %v2238, %v2558
        %v2560 = vpop.f32.mrb[0].mxu0
        %v2561 = vadd.f32 %v2242, %v2560
        %v2562 = vpop.f32.mrb[0].mxu0
        %v2563 = vadd.f32 %v2238, %v2562
        %v2564 = vpop.f32.mrb[0].mxu0
        %v2565 = vadd.f32 %v2242, %v2564
        %2566 = vmatprep.mubr.bf16.mxu0 0
        %2567 = vmatmul.mubr.bf16.gmra.mrb[0].mxu0 %v2266
        %v2568 = vpop.f32.mrb[0].mxu0
        %v2569 = vadd.f32 %v2238, %v2568
        %v2570 = vpop.f32.mrb[0].mxu0
        %v2571 = vadd.f32 %v2242, %v2570
        %v2572 = vpop.f32.mrb[0].mxu0
        %v2573 = vadd.f32 %v2238, %v2572
        %v2574 = vpop.f32.mrb[0].mxu0
        %v2575 = vadd.f32 %v2242, %v2574
        %2576 = vdwg.mxu0
        %2577 = vst [vmem:[#allocation5] sm:$0xff] %v2466
        %2578 = vst [vmem:[#allocation5 + $0x8] sm:$0xff] %v2468
        %2579 = vst [vmem:[#allocation5 + $0x10] sm:$0xff] %v2539
        %2580 = vst [vmem:[#allocation5 + $0x18] sm:$0xff] %v2541
        %2581 = vst [vmem:[#allocation5 + $0x20] sm:$0xff] %v2470
        %2582 = vst [vmem:[#allocation5 + $0x28] sm:$0xff] %v2472
        %2583 = vst [vmem:[#allocation5 + $0x30] sm:$0xff] %v2543
        %2584 = vst [vmem:[#allocation5 + $0x38] sm:$0xff] %v2545
        %2585 = vst [vmem:[#allocation5 + $0x40] sm:$0xff] %v2476
        %2586 = vst [vmem:[#allocation5 + $0x48] sm:$0xff] %v2478
        %2587 = vst [vmem:[#allocation5 + $0x50] sm:$0xff] %v2549
        %2588 = vst [vmem:[#allocation5 + $0x58] sm:$0xff] %v2551
        %2589 = vst [vmem:[#allocation5 + $0x60] sm:$0xff] %v2480
        %2590 = vst [vmem:[#allocation5 + $0x68] sm:$0xff] %v2482
        %2591 = vst [vmem:[#allocation5 + $0x70] sm:$0xff] %v2553
        %2592 = vst [vmem:[#allocation5 + $0x78] sm:$0xff] %v2555
        %2593 = vst [vmem:[#allocation5 + $0x80] sm:$0xff] %v2486
        %2594 = vst [vmem:[#allocation5 + $0x88] sm:$0xff] %v2488
        %2595 = vst [vmem:[#allocation5 + $0x90] sm:$0xff] %v2559
        %2596 = vst [vmem:[#allocation5 + $0x98] sm:$0xff] %v2561
        %2597 = vst [vmem:[#allocation5 + $0xa0] sm:$0xff] %v2490
        %2598 = vst [vmem:[#allocation5 + $0xa8] sm:$0xff] %v2492
        %2599 = vst [vmem:[#allocation5 + $0xb0] sm:$0xff] %v2563
        %2600 = vst [vmem:[#allocation5 + $0xb8] sm:$0xff] %v2565
        %2601 = vst [vmem:[#allocation5 + $0xc0] sm:$0xff] %v2496
        %2602 = vst [vmem:[#allocation5 + $0xc8] sm:$0xff] %v2498
        %2603 = vst [vmem:[#allocation5 + $0xd0] sm:$0xff] %v2569
        %2604 = vst [vmem:[#allocation5 + $0xd8] sm:$0xff] %v2571
        %2605 = vst [vmem:[#allocation5 + $0xe0] sm:$0xff] %v2500
        %2606 = vst [vmem:[#allocation5 + $0xe8] sm:$0xff] %v2502
        %2607 = vst [vmem:[#allocation5 + $0xf0] sm:$0xff] %v2573
        %2608 = vst [vmem:[#allocation5 + $0xf8] sm:$0xff] %v2575
        %s2609 = scalar_lea.vmem [#allocation15], 256
        %v2610 = vld [vmem:[%s2609] sm:$0xff]
        %v2611 = vld [vmem:[%s2609 + $0x8] sm:$0xff]
        %v2612 = vld [vmem:[%s2609 + $0x10] sm:$0xff]
        %v2613 = vld [vmem:[%s2609 + $0x18] sm:$0xff]
        %v2614 = vld [vmem:[%s2609 + $0x20] sm:$0xff]
        %v2615 = vld [vmem:[%s2609 + $0x28] sm:$0xff]
        %v2616 = vld [vmem:[%s2609 + $0x30] sm:$0xff]
        %v2617 = vld [vmem:[%s2609 + $0x38] sm:$0xff]
        %v2618 = vld [vmem:[%s2609 + $0x40] sm:$0xff]
        %v2619 = vld [vmem:[%s2609 + $0x48] sm:$0xff]
        %v2620 = vld [vmem:[%s2609 + $0x50] sm:$0xff]
        %v2621 = vld [vmem:[%s2609 + $0x58] sm:$0xff]
        %v2622 = vld [vmem:[%s2609 + $0x60] sm:$0xff]
        %v2623 = vld [vmem:[%s2609 + $0x68] sm:$0xff]
        %v2624 = vld [vmem:[%s2609 + $0x70] sm:$0xff]
        %v2625 = vld [vmem:[%s2609 + $0x78] sm:$0xff]
        %v2626 = vld [vmem:[%s2609 + $0x80] sm:$0xff]
        %v2627 = vld [vmem:[%s2609 + $0x88] sm:$0xff]
        %v2628 = vld [vmem:[%s2609 + $0x90] sm:$0xff]
        %v2629 = vld [vmem:[%s2609 + $0x98] sm:$0xff]
        %v2630 = vld [vmem:[%s2609 + $0xa0] sm:$0xff]
        %v2631 = vld [vmem:[%s2609 + $0xa8] sm:$0xff]
        %v2632 = vld [vmem:[%s2609 + $0xb0] sm:$0xff]
        %v2633 = vld [vmem:[%s2609 + $0xb8] sm:$0xff]
        %v2634 = vld [vmem:[%s2609 + $0xc0] sm:$0xff]
        %v2635 = vld [vmem:[%s2609 + $0xc8] sm:$0xff]
        %v2636 = vld [vmem:[%s2609 + $0xd0] sm:$0xff]
        %v2637 = vld [vmem:[%s2609 + $0xd8] sm:$0xff]
        %v2638 = vld [vmem:[%s2609 + $0xe0] sm:$0xff]
        %v2639 = vld [vmem:[%s2609 + $0xe8] sm:$0xff]
        %v2640 = vld [vmem:[%s2609 + $0xf0] sm:$0xff]
        %v2641 = vld [vmem:[%s2609 + $0xf8] sm:$0xff]
        %s2642 = scalar_lea.vmem [#allocation2], 8
        %v2643 = vld [vmem:[%s2642] sm:$0xff]
        %s2644 = scalar_lea.vmem [#allocation3], 8
        %v2645 = vld [vmem:[%s2644] sm:$0xff]
        %v2646 = vld [vmem:[#allocation5] sm:$0xff]
        %v2647 = vld [vmem:[#allocation5 + $0x8] sm:$0xff]
        %v2648 = vld [vmem:[#allocation5 + $0x10] sm:$0xff]
        %v2649 = vld [vmem:[#allocation5 + $0x18] sm:$0xff]
        %v2650 = vpack.c.bf16 %v2643, %v2643
        %v2683 = vunpack.c.l.b16 %v2610
        %v2684 = vunpack.c.h.b16 %v2610
        %v2685 = vunpack.c.l.b16 %v2611
        %v2686 = vunpack.c.h.b16 %v2611
        %v2687 = vunpack.c.l.b16 %v2612
        %v2688 = vunpack.c.h.b16 %v2612
        %v2689 = vunpack.c.l.b16 %v2613
        %v2690 = vunpack.c.h.b16 %v2613
        %v2691 = vunpack.c.l.b16 %v2614
        %v2692 = vunpack.c.h.b16 %v2614
        %v2693 = vunpack.c.l.b16 %v2615
        %v2694 = vunpack.c.h.b16 %v2615
        %v2695 = vunpack.c.l.b16 %v2616
        %v2696 = vunpack.c.h.b16 %v2616
        %v2697 = vunpack.c.l.b16 %v2617
        %v2698 = vunpack.c.h.b16 %v2617
        %v2699 = vunpack.c.l.b16 %v2618
        %v2700 = vunpack.c.h.b16 %v2618
        %v2701 = vunpack.c.l.b16 %v2619
        %v2702 = vunpack.c.h.b16 %v2619
        %v2703 = vunpack.c.l.b16 %v2620
        %v2704 = vunpack.c.h.b16 %v2620
        %v2705 = vunpack.c.l.b16 %v2621
        %v2706 = vunpack.c.h.b16 %v2621
        %v2707 = vunpack.c.l.b16 %v2622
        %v2708 = vunpack.c.h.b16 %v2622
        %v2709 = vunpack.c.l.b16 %v2623
        %v2710 = vunpack.c.h.b16 %v2623
        %v2711 = vunpack.c.l.b16 %v2624
        %v2712 = vunpack.c.h.b16 %v2624
        %v2713 = vunpack.c.l.b16 %v2625
        %v2714 = vunpack.c.h.b16 %v2625
        %v2715 = vunpack.c.l.b16 %v2626
        %v2716 = vunpack.c.h.b16 %v2626
        %v2717 = vunpack.c.l.b16 %v2627
        %v2718 = vunpack.c.h.b16 %v2627
        %v2719 = vunpack.c.l.b16 %v2628
        %v2720 = vunpack.c.h.b16 %v2628
        %v2721 = vunpack.c.l.b16 %v2629
        %v2722 = vunpack.c.h.b16 %v2629
        %v2723 = vunpack.c.l.b16 %v2630
        %v2724 = vunpack.c.h.b16 %v2630
        %v2725 = vunpack.c.l.b16 %v2631
        %v2726 = vunpack.c.h.b16 %v2631
        %v2727 = vunpack.c.l.b16 %v2632
        %v2728 = vunpack.c.h.b16 %v2632
        %v2729 = vunpack.c.l.b16 %v2633
        %v2730 = vunpack.c.h.b16 %v2633
        %v2731 = vunpack.c.l.b16 %v2634
        %v2732 = vunpack.c.h.b16 %v2634
        %v2733 = vunpack.c.l.b16 %v2635
        %v2734 = vunpack.c.h.b16 %v2635
        %v2735 = vunpack.c.l.b16 %v2636
        %v2736 = vunpack.c.h.b16 %v2636
        %v2737 = vunpack.c.l.b16 %v2637
        %v2738 = vunpack.c.h.b16 %v2637
        %v2739 = vunpack.c.l.b16 %v2638
        %v2740 = vunpack.c.h.b16 %v2638
        %v2741 = vunpack.c.l.b16 %v2639
        %v2742 = vunpack.c.h.b16 %v2639
        %v2743 = vunpack.c.l.b16 %v2640
        %v2744 = vunpack.c.h.b16 %v2640
        %v2745 = vunpack.c.l.b16 %v2641
        %v2746 = vunpack.c.h.b16 %v2641
        %v2747 = vpack.c.b16 %v2687, %v2683
        %v2748 = vpack.c.b16 %v2688, %v2684
        %v2749 = vpack.c.b16 %v2689, %v2685
        %v2750 = vpack.c.b16 %v2690, %v2686
        %v2751 = vpack.c.b16 %v2695, %v2691
        %v2752 = vpack.c.b16 %v2696, %v2692
        %v2753 = vpack.c.b16 %v2697, %v2693
        %v2754 = vpack.c.b16 %v2698, %v2694
        %v2755 = vpack.c.b16 %v2703, %v2699
        %v2756 = vpack.c.b16 %v2704, %v2700
        %v2757 = vpack.c.b16 %v2705, %v2701
        %v2758 = vpack.c.b16 %v2706, %v2702
        %v2759 = vpack.c.b16 %v2711, %v2707
        %v2760 = vpack.c.b16 %v2712, %v2708
        %v2761 = vpack.c.b16 %v2713, %v2709
        %v2762 = vpack.c.b16 %v2714, %v2710
        %v2763 = vpack.c.b16 %v2719, %v2715
        %v2764 = vpack.c.b16 %v2720, %v2716
        %v2765 = vpack.c.b16 %v2721, %v2717
        %v2766 = vpack.c.b16 %v2722, %v2718
        %v2767 = vpack.c.b16 %v2727, %v2723
        %v2768 = vpack.c.b16 %v2728, %v2724
        %v2769 = vpack.c.b16 %v2729, %v2725
        %v2770 = vpack.c.b16 %v2730, %v2726
        %v2771 = vpack.c.b16 %v2735, %v2731
        %v2772 = vpack.c.b16 %v2736, %v2732
        %v2773 = vpack.c.b16 %v2737, %v2733
        %v2774 = vpack.c.b16 %v2738, %v2734
        %v2775 = vpack.c.b16 %v2743, %v2739
        %v2776 = vpack.c.b16 %v2744, %v2740
        %v2777 = vpack.c.b16 %v2745, %v2741
        %v2778 = vpack.c.b16 %v2746, %v2742
        %2811 = vmatprep.subr.bf16.mxu0 %v2748
        %2812 = vmatpush1.bf16.msra.mxu0 %v2747
        %2813 = vmatprep.subr.bf16.mxu0 %v2752
        %2814 = vmatpush1.bf16.msra.mxu0 %v2751
        %2815 = vmatprep.subr.bf16.mxu0 %v2756
        %2816 = vmatpush1.bf16.msra.mxu0 %v2755
        %2817 = vmatprep.subr.bf16.mxu0 %v2760
        %2818 = vmatpush1.bf16.msra.mxu0 %v2759
        %2819 = vmatprep.subr.bf16.mxu0 %v2764
        %2820 = vmatpush1.bf16.msra.mxu0 %v2763
        %2821 = vmatprep.subr.bf16.mxu0 %v2768
        %2822 = vmatpush1.bf16.msra.mxu0 %v2767
        %2823 = vmatprep.subr.bf16.mxu0 %v2772
        %2824 = vmatpush1.bf16.msra.mxu0 %v2771
        %2825 = vmatprep.subr.bf16.mxu0 %v2776
        %2826 = vmatpush1.bf16.msra.mxu0 %v2775
        %2827 = vmatprep.subr.bf16.mxu0 0
        %2828 = vmatpush1.bf16.msra.mxu0 0
        %2829 = vmatprep.subr.bf16.mxu0 0
        %2830 = vmatpush1.bf16.msra.mxu0 0
        %2831 = vmatprep.subr.bf16.mxu0 0
        %2832 = vmatpush1.bf16.msra.mxu0 0
        %2833 = vmatprep.subr.bf16.mxu0 0
        %2834 = vmatpush1.bf16.msra.mxu0 0
        %2835 = vmatprep.subr.bf16.mxu0 0
        %2836 = vmatpush1.bf16.msra.mxu0 0
        %2837 = vmatprep.subr.bf16.mxu0 0
        %2838 = vmatpush1.bf16.msra.mxu0 0
        %2839 = vmatprep.subr.bf16.mxu0 0
        %2840 = vmatpush1.bf16.msra.mxu0 0
        %2841 = vmatprep.subr.bf16.mxu0 0
        %2842 = vmatpush1.bf16.msra.mxu0 0
        %2843 = vmatprep.mubr.bf16.mxu0 0
        %2844 = vmatmul.mubr.bf16.gmra.mrb[0].mxu0 %v2650
        %v2845 = vpop.f32.mrb[0].mxu0
        %v2846 = vadd.f32 0.0, %v2845
        %v2847 = vpop.f32.mrb[0].mxu0
        %v2848 = vadd.f32 0.0, %v2847
        %v2849 = vpop.f32.mrb[0].mxu0
        %v2850 = vpop.f32.mrb[0].mxu0
        %2851 = vdwg.mxu0
        %2852 = vmatprep.subr.bf16.mxu0 %v2750
        %2853 = vmatpush1.bf16.msra.mxu0 %v2749
        %2854 = vmatprep.subr.bf16.mxu0 %v2754
        %2855 = vmatpush1.bf16.msra.mxu0 %v2753
        %2856 = vmatprep.subr.bf16.mxu0 %v2758
        %2857 = vmatpush1.bf16.msra.mxu0 %v2757
        %2858 = vmatprep.subr.bf16.mxu0 %v2762
        %2859 = vmatpush1.bf16.msra.mxu0 %v2761
        %2860 = vmatprep.subr.bf16.mxu0 %v2766
        %2861 = vmatpush1.bf16.msra.mxu0 %v2765
        %2862 = vmatprep.subr.bf16.mxu0 %v2770
        %2863 = vmatpush1.bf16.msra.mxu0 %v2769
        %2864 = vmatprep.subr.bf16.mxu0 %v2774
        %2865 = vmatpush1.bf16.msra.mxu0 %v2773
        %2866 = vmatprep.subr.bf16.mxu0 %v2778
        %2867 = vmatpush1.bf16.msra.mxu0 %v2777
        %2868 = vmatprep.subr.bf16.mxu0 0
        %2869 = vmatpush1.bf16.msra.mxu0 0
        %2870 = vmatprep.subr.bf16.mxu0 0
        %2871 = vmatpush1.bf16.msra.mxu0 0
        %2872 = vmatprep.subr.bf16.mxu0 0
        %2873 = vmatpush1.bf16.msra.mxu0 0
        %2874 = vmatprep.subr.bf16.mxu0 0
        %2875 = vmatpush1.bf16.msra.mxu0 0
        %2876 = vmatprep.subr.bf16.mxu0 0
        %2877 = vmatpush1.bf16.msra.mxu0 0
        %2878 = vmatprep.subr.bf16.mxu0 0
        %2879 = vmatpush1.bf16.msra.mxu0 0
        %2880 = vmatprep.subr.bf16.mxu0 0
        %2881 = vmatpush1.bf16.msra.mxu0 0
        %2882 = vmatprep.subr.bf16.mxu0 0
        %2883 = vmatpush1.bf16.msra.mxu0 0
        %2884 = vmatprep.mubr.bf16.mxu0 0
        %2885 = vmatmul.mubr.bf16.gmra.mrb[0].mxu0 %v2650
        %v2886 = vpop.f32.mrb[0].mxu0
        %v2887 = vadd.f32 0.0, %v2886
        %v2888 = vpop.f32.mrb[0].mxu0
        %v2889 = vadd.f32 0.0, %v2888
        %v2890 = vpop.f32.mrb[0].mxu0
        %v2891 = vpop.f32.mrb[0].mxu0
        %2892 = vdwg.mxu0
        %v2893 = vadd.f32 %v2646, %v2846
        %v2894 = vadd.f32 %v2647, %v2848
        %v2895 = vadd.f32 %v2648, %v2887
        %v2896 = vadd.f32 %v2649, %v2889
        %v2897 = vxor.u32 %v2893, 2147483648
        %v2898 = vmul.f32 %v2897, 1.442695
        %v2899 = vpow.pop %v2898
        %v2900 = vadd.f32 %v2899, 1.0
        %v2901 = vrcp.pop %v2900
        %v2902 = vmul.f32 1.0, %v2901
        %v2903 = vxor.u32 %v2894, 2147483648
        %v2904 = vmul.f32 %v2903, 1.442695
        %v2905 = vpow.pop %v2904
        %v2906 = vadd.f32 %v2905, 1.0
        %v2907 = vrcp.pop %v2906
        %v2908 = vmul.f32 1.0, %v2907
        %v2909 = vtanh.pop %v2895
        %v2910 = vxor.u32 %v2896, 2147483648
        %v2911 = vmul.f32 %v2910, 1.442695
        %v2912 = vpow.pop %v2911
        %v2913 = vadd.f32 %v2912, 1.0
        %v2914 = vrcp.pop %v2913
        %v2915 = vmul.f32 1.0, %v2914
        %v2916 = vmul.f32 %v2908, %v2645
        %v2917 = vmul.f32 %v2902, %v2909
        %v2918 = vadd.f32 %v2916, %v2917
        %v2919 = vtanh.pop %v2918
        %v2920 = vmul.f32 %v2915, %v2919
        %v2921 = vsel %vm1275, %v2920, %v2643
        %v2922 = vsel %vm1275, %v2918, %v2645
        %2923 = vst [vmem:[#allocation4] sm:$0xff] %v2921
        %v2924 = vld [vmem:[%s1279] sm:$0xff]
        %v2925 = vld [vmem:[%s1279 + $0x8] sm:$0xff]
        %v2926 = vld [vmem:[%s1279 + $0x10] sm:$0xff]
        %v2927 = vld [vmem:[%s1279 + $0x18] sm:$0xff]
        %v2928 = vpack.c.bf16 %v2921, %v2921
        %2929 = vmatprep.subr.bf16.mxu0 %v2748
        %2930 = vmatpush1.bf16.msra.mxu0 %v2747
        %2931 = vmatprep.subr.bf16.mxu0 %v2752
        %2932 = vmatpush1.bf16.msra.mxu0 %v2751
        %2933 = vmatprep.subr.bf16.mxu0 %v2756
        %2934 = vmatpush1.bf16.msra.mxu0 %v2755
        %2935 = vmatprep.subr.bf16.mxu0 %v2760
        %2936 = vmatpush1.bf16.msra.mxu0 %v2759
        %2937 = vmatprep.subr.bf16.mxu0 %v2764
        %2938 = vmatpush1.bf16.msra.mxu0 %v2763
        %2939 = vmatprep.subr.bf16.mxu0 %v2768
        %2940 = vmatpush1.bf16.msra.mxu0 %v2767
        %2941 = vmatprep.subr.bf16.mxu0 %v2772
        %2942 = vmatpush1.bf16.msra.mxu0 %v2771
        %2943 = vmatprep.subr.bf16.mxu0 %v2776
        %2944 = vmatpush1.bf16.msra.mxu0 %v2775
        %2945 = vmatprep.subr.bf16.mxu0 0
        %2946 = vmatpush1.bf16.msra.mxu0 0
        %2947 = vmatprep.subr.bf16.mxu0 0
        %2948 = vmatpush1.bf16.msra.mxu0 0
        %2949 = vmatprep.subr.bf16.mxu0 0
        %2950 = vmatpush1.bf16.msra.mxu0 0
        %2951 = vmatprep.subr.bf16.mxu0 0
        %2952 = vmatpush1.bf16.msra.mxu0 0
        %2953 = vmatprep.subr.bf16.mxu0 0
        %2954 = vmatpush1.bf16.msra.mxu0 0
        %2955 = vmatprep.subr.bf16.mxu0 0
        %2956 = vmatpush1.bf16.msra.mxu0 0
        %2957 = vmatprep.subr.bf16.mxu0 0
        %2958 = vmatpush1.bf16.msra.mxu0 0
        %2959 = vmatprep.subr.bf16.mxu0 0
        %2960 = vmatpush1.bf16.msra.mxu0 0
        %2961 = vmatprep.mubr.bf16.mxu0 0
        %2962 = vmatmul.mubr.bf16.gmra.mrb[0].mxu0 %v2928
        %v2963 = vpop.f32.mrb[0].mxu0
        %v2964 = vadd.f32 0.0, %v2963
        %v2965 = vpop.f32.mrb[0].mxu0
        %v2966 = vadd.f32 0.0, %v2965
        %v2967 = vpop.f32.mrb[0].mxu0
        %v2968 = vpop.f32.mrb[0].mxu0
        %2969 = vdwg.mxu0
        %2970 = vmatprep.subr.bf16.mxu0 %v2750
        %2971 = vmatpush1.bf16.msra.mxu0 %v2749
        %2972 = vmatprep.subr.bf16.mxu0 %v2754
        %2973 = vmatpush1.bf16.msra.mxu0 %v2753
        %2974 = vmatprep.subr.bf16.mxu0 %v2758
        %2975 = vmatpush1.bf16.msra.mxu0 %v2757
        %2976 = vmatprep.subr.bf16.mxu0 %v2762
        %2977 = vmatpush1.bf16.msra.mxu0 %v2761
        %2978 = vmatprep.subr.bf16.mxu0 %v2766
        %2979 = vmatpush1.bf16.msra.mxu0 %v2765
        %2980 = vmatprep.subr.bf16.mxu0 %v2770
        %2981 = vmatpush1.bf16.msra.mxu0 %v2769
        %2982 = vmatprep.subr.bf16.mxu0 %v2774
        %2983 = vmatpush1.bf16.msra.mxu0 %v2773
        %2984 = vmatprep.subr.bf16.mxu0 %v2778
        %2985 = vmatpush1.bf16.msra.mxu0 %v2777
        %2986 = vmatprep.subr.bf16.mxu0 0
        %2987 = vmatpush1.bf16.msra.mxu0 0
        %2988 = vmatprep.subr.bf16.mxu0 0
        %2989 = vmatpush1.bf16.msra.mxu0 0
        %2990 = vmatprep.subr.bf16.mxu0 0
        %2991 = vmatpush1.bf16.msra.mxu0 0
        %2992 = vmatprep.subr.bf16.mxu0 0
        %2993 = vmatpush1.bf16.msra.mxu0 0
        %2994 = vmatprep.subr.bf16.mxu0 0
        %2995 = vmatpush1.bf16.msra.mxu0 0
        %2996 = vmatprep.subr.bf16.mxu0 0
        %2997 = vmatpush1.bf16.msra.mxu0 0
        %2998 = vmatprep.subr.bf16.mxu0 0
        %2999 = vmatpush1.bf16.msra.mxu0 0
        %3000 = vmatprep.subr.bf16.mxu0 0
        %3001 = vmatpush1.bf16.msra.mxu0 0
        %3002 = vmatprep.mubr.bf16.mxu0 0
        %3003 = vmatmul.mubr.bf16.gmra.mrb[0].mxu0 %v2928
        %v3004 = vpop.f32.mrb[0].mxu0
        %v3005 = vadd.f32 0.0, %v3004
        %v3006 = vpop.f32.mrb[0].mxu0
        %v3007 = vadd.f32 0.0, %v3006
        %v3008 = vpop.f32.mrb[0].mxu0
        %v3009 = vpop.f32.mrb[0].mxu0
        %3010 = vdwg.mxu0
        %v3011 = vadd.f32 %v2924, %v2964
        %v3012 = vadd.f32 %v2925, %v2966
        %v3013 = vadd.f32 %v2926, %v3005
        %v3014 = vadd.f32 %v2927, %v3007
        %v3015 = vxor.u32 %v3011, 2147483648
        %v3016 = vmul.f32 %v3015, 1.442695
        %v3017 = vpow.pop %v3016
        %v3018 = vadd.f32 %v3017, 1.0
        %v3019 = vrcp.pop %v3018
        %v3020 = vmul.f32 1.0, %v3019
        %v3021 = vxor.u32 %v3012, 2147483648
        %v3022 = vmul.f32 %v3021, 1.442695
        %v3023 = vpow.pop %v3022
        %v3024 = vadd.f32 %v3023, 1.0
        %v3025 = vrcp.pop %v3024
        %v3026 = vmul.f32 1.0, %v3025
        %v3027 = vtanh.pop %v3013
        %v3028 = vxor.u32 %v3014, 2147483648
        %v3029 = vmul.f32 %v3028, 1.442695
        %v3030 = vpow.pop %v3029
        %v3031 = vadd.f32 %v3030, 1.0
        %v3032 = vrcp.pop %v3031
        %v3033 = vmul.f32 1.0, %v3032
        %v3034 = vmul.f32 %v3026, %v2922
        %v3035 = vmul.f32 %v3020, %v3027
        %v3036 = vadd.f32 %v3034, %v3035
        %v3037 = vtanh.pop %v3036
        %v3038 = vmul.f32 %v3033, %v3037
        %v3039 = vsel %vm1402, %v3038, %v2921
        %v3040 = vsel %vm1402, %v3036, %v2922
        %3041 = vst [vmem:[%s1405] sm:$0xff] %v3039
        %v3042 = vld [vmem:[%s1407] sm:$0xff]
        %v3043 = vld [vmem:[%s1407 + $0x8] sm:$0xff]
        %v3044 = vld [vmem:[%s1407 + $0x10] sm:$0xff]
        %v3045 = vld [vmem:[%s1407 + $0x18] sm:$0xff]
        %v3046 = vpack.c.bf16 %v3039, %v3039
        %3047 = vmatprep.subr.bf16.mxu0 %v2748
        %3048 = vmatpush1.bf16.msra.mxu0 %v2747
        %3049 = vmatprep.subr.bf16.mxu0 %v2752
        %3050 = vmatpush1.bf16.msra.mxu0 %v2751
        %3051 = vmatprep.subr.bf16.mxu0 %v2756
        %3052 = vmatpush1.bf16.msra.mxu0 %v2755
        %3053 = vmatprep.subr.bf16.mxu0 %v2760
        %3054 = vmatpush1.bf16.msra.mxu0 %v2759
        %3055 = vmatprep.subr.bf16.mxu0 %v2764
        %3056 = vmatpush1.bf16.msra.mxu0 %v2763
        %3057 = vmatprep.subr.bf16.mxu0 %v2768
        %3058 = vmatpush1.bf16.msra.mxu0 %v2767
        %3059 = vmatprep.subr.bf16.mxu0 %v2772
        %3060 = vmatpush1.bf16.msra.mxu0 %v2771
        %3061 = vmatprep.subr.bf16.mxu0 %v2776
        %3062 = vmatpush1.bf16.msra.mxu0 %v2775
        %3063 = vmatprep.subr.bf16.mxu0 0
        %3064 = vmatpush1.bf16.msra.mxu0 0
        %3065 = vmatprep.subr.bf16.mxu0 0
        %3066 = vmatpush1.bf16.msra.mxu0 0
        %3067 = vmatprep.subr.bf16.mxu0 0
        %3068 = vmatpush1.bf16.msra.mxu0 0
        %3069 = vmatprep.subr.bf16.mxu0 0
        %3070 = vmatpush1.bf16.msra.mxu0 0
        %3071 = vmatprep.subr.bf16.mxu0 0
        %3072 = vmatpush1.bf16.msra.mxu0 0
        %3073 = vmatprep.subr.bf16.mxu0 0
        %3074 = vmatpush1.bf16.msra.mxu0 0
        %3075 = vmatprep.subr.bf16.mxu0 0
        %3076 = vmatpush1.bf16.msra.mxu0 0
        %3077 = vmatprep.subr.bf16.mxu0 0
        %3078 = vmatpush1.bf16.msra.mxu0 0
        %3079 = vmatprep.mubr.bf16.mxu0 0
        %3080 = vmatmul.mubr.bf16.gmra.mrb[0].mxu0 %v3046
        %v3081 = vpop.f32.mrb[0].mxu0
        %v3082 = vadd.f32 0.0, %v3081
        %v3083 = vpop.f32.mrb[0].mxu0
        %v3084 = vadd.f32 0.0, %v3083
        %v3085 = vpop.f32.mrb[0].mxu0
        %v3086 = vpop.f32.mrb[0].mxu0
        %3087 = vdwg.mxu0
        %3088 = vmatprep.subr.bf16.mxu0 %v2750
        %3089 = vmatpush1.bf16.msra.mxu0 %v2749
        %3090 = vmatprep.subr.bf16.mxu0 %v2754
        %3091 = vmatpush1.bf16.msra.mxu0 %v2753
        %3092 = vmatprep.subr.bf16.mxu0 %v2758
        %3093 = vmatpush1.bf16.msra.mxu0 %v2757
        %3094 = vmatprep.subr.bf16.mxu0 %v2762
        %3095 = vmatpush1.bf16.msra.mxu0 %v2761
        %3096 = vmatprep.subr.bf16.mxu0 %v2766
        %3097 = vmatpush1.bf16.msra.mxu0 %v2765
        %3098 = vmatprep.subr.bf16.mxu0 %v2770
        %3099 = vmatpush1.bf16.msra.mxu0 %v2769
        %3100 = vmatprep.subr.bf16.mxu0 %v2774
        %3101 = vmatpush1.bf16.msra.mxu0 %v2773
        %3102 = vmatprep.subr.bf16.mxu0 %v2778
        %3103 = vmatpush1.bf16.msra.mxu0 %v2777
        %3104 = vmatprep.subr.bf16.mxu0 0
        %3105 = vmatpush1.bf16.msra.mxu0 0
        %3106 = vmatprep.subr.bf16.mxu0 0
        %3107 = vmatpush1.bf16.msra.mxu0 0
        %3108 = vmatprep.subr.bf16.mxu0 0
        %3109 = vmatpush1.bf16.msra.mxu0 0
        %3110 = vmatprep.subr.bf16.mxu0 0
        %3111 = vmatpush1.bf16.msra.mxu0 0
        %3112 = vmatprep.subr.bf16.mxu0 0
        %3113 = vmatpush1.bf16.msra.mxu0 0
        %3114 = vmatprep.subr.bf16.mxu0 0
        %3115 = vmatpush1.bf16.msra.mxu0 0
        %3116 = vmatprep.subr.bf16.mxu0 0
        %3117 = vmatpush1.bf16.msra.mxu0 0
        %3118 = vmatprep.subr.bf16.mxu0 0
        %3119 = vmatpush1.bf16.msra.mxu0 0
        %3120 = vmatprep.mubr.bf16.mxu0 0
        %3121 = vmatmul.mubr.bf16.gmra.mrb[0].mxu0 %v3046
        %v3122 = vpop.f32.mrb[0].mxu0
        %v3123 = vadd.f32 0.0, %v3122
        %v3124 = vpop.f32.mrb[0].mxu0
        %v3125 = vadd.f32 0.0, %v3124
        %v3126 = vpop.f32.mrb[0].mxu0
        %v3127 = vpop.f32.mrb[0].mxu0
        %3128 = vdwg.mxu0
        %v3129 = vadd.f32 %v3042, %v3082
        %v3130 = vadd.f32 %v3043, %v3084
        %v3131 = vadd.f32 %v3044, %v3123
        %v3132 = vadd.f32 %v3045, %v3125
        %v3133 = vxor.u32 %v3129, 2147483648
        %v3134 = vmul.f32 %v3133, 1.442695
        %v3135 = vpow.pop %v3134
        %v3136 = vadd.f32 %v3135, 1.0
        %v3137 = vrcp.pop %v3136
        %v3138 = vmul.f32 1.0, %v3137
        %v3139 = vxor.u32 %v3130, 2147483648
        %v3140 = vmul.f32 %v3139, 1.442695
        %v3141 = vpow.pop %v3140
        %v3142 = vadd.f32 %v3141, 1.0
        %v3143 = vrcp.pop %v3142
        %v3144 = vmul.f32 1.0, %v3143
        %v3145 = vtanh.pop %v3131
        %v3146 = vxor.u32 %v3132, 2147483648
        %v3147 = vmul.f32 %v3146, 1.442695
        %v3148 = vpow.pop %v3147
        %v3149 = vadd.f32 %v3148, 1.0
        %v3150 = vrcp.pop %v3149
        %v3151 = vmul.f32 1.0, %v3150
        %v3152 = vmul.f32 %v3144, %v3040
        %v3153 = vmul.f32 %v3138, %v3145
        %v3154 = vadd.f32 %v3152, %v3153
        %v3155 = vtanh.pop %v3154
        %v3156 = vmul.f32 %v3151, %v3155
        %v3157 = vsel %vm1530, %v3156, %v3039
        %v3158 = vsel %vm1530, %v3154, %v3040
        %3159 = vst [vmem:[%s1533] sm:$0xff] %v3157
        %v3160 = vld [vmem:[%s1535] sm:$0xff]
        %v3161 = vld [vmem:[%s1535 + $0x8] sm:$0xff]
        %v3162 = vld [vmem:[%s1535 + $0x10] sm:$0xff]
        %v3163 = vld [vmem:[%s1535 + $0x18] sm:$0xff]
        %v3164 = vpack.c.bf16 %v3157, %v3157
        %3165 = vmatprep.subr.bf16.mxu0 %v2748
        %3166 = vmatpush1.bf16.msra.mxu0 %v2747
        %3167 = vmatprep.subr.bf16.mxu0 %v2752
        %3168 = vmatpush1.bf16.msra.mxu0 %v2751
        %3169 = vmatprep.subr.bf16.mxu0 %v2756
        %3170 = vmatpush1.bf16.msra.mxu0 %v2755
        %3171 = vmatprep.subr.bf16.mxu0 %v2760
        %3172 = vmatpush1.bf16.msra.mxu0 %v2759
        %3173 = vmatprep.subr.bf16.mxu0 %v2764
        %3174 = vmatpush1.bf16.msra.mxu0 %v2763
        %3175 = vmatprep.subr.bf16.mxu0 %v2768
        %3176 = vmatpush1.bf16.msra.mxu0 %v2767
        %3177 = vmatprep.subr.bf16.mxu0 %v2772
        %3178 = vmatpush1.bf16.msra.mxu0 %v2771
        %3179 = vmatprep.subr.bf16.mxu0 %v2776
        %3180 = vmatpush1.bf16.msra.mxu0 %v2775
        %3181 = vmatprep.subr.bf16.mxu0 0
        %3182 = vmatpush1.bf16.msra.mxu0 0
        %3183 = vmatprep.subr.bf16.mxu0 0
        %3184 = vmatpush1.bf16.msra.mxu0 0
        %3185 = vmatprep.subr.bf16.mxu0 0
        %3186 = vmatpush1.bf16.msra.mxu0 0
        %3187 = vmatprep.subr.bf16.mxu0 0
        %3188 = vmatpush1.bf16.msra.mxu0 0
        %3189 = vmatprep.subr.bf16.mxu0 0
        %3190 = vmatpush1.bf16.msra.mxu0 0
        %3191 = vmatprep.subr.bf16.mxu0 0
        %3192 = vmatpush1.bf16.msra.mxu0 0
        %3193 = vmatprep.subr.bf16.mxu0 0
        %3194 = vmatpush1.bf16.msra.mxu0 0
        %3195 = vmatprep.subr.bf16.mxu0 0
        %3196 = vmatpush1.bf16.msra.mxu0 0
        %3197 = vmatprep.mubr.bf16.mxu0 0
        %3198 = vmatmul.mubr.bf16.gmra.mrb[0].mxu0 %v3164
        %v3199 = vpop.f32.mrb[0].mxu0
        %v3200 = vadd.f32 0.0, %v3199
        %v3201 = vpop.f32.mrb[0].mxu0
        %v3202 = vadd.f32 0.0, %v3201
        %v3203 = vpop.f32.mrb[0].mxu0
        %v3204 = vpop.f32.mrb[0].mxu0
        %3205 = vdwg.mxu0
        %3206 = vmatprep.subr.bf16.mxu0 %v2750
        %3207 = vmatpush1.bf16.msra.mxu0 %v2749
        %3208 = vmatprep.subr.bf16.mxu0 %v2754
        %3209 = vmatpush1.bf16.msra.mxu0 %v2753
        %3210 = vmatprep.subr.bf16.mxu0 %v2758
        %3211 = vmatpush1.bf16.msra.mxu0 %v2757
        %3212 = vmatprep.subr.bf16.mxu0 %v2762
        %3213 = vmatpush1.bf16.msra.mxu0 %v2761
        %3214 = vmatprep.subr.bf16.mxu0 %v2766
        %3215 = vmatpush1.bf16.msra.mxu0 %v2765
        %3216 = vmatprep.subr.bf16.mxu0 %v2770
        %3217 = vmatpush1.bf16.msra.mxu0 %v2769
        %3218 = vmatprep.subr.bf16.mxu0 %v2774
        %3219 = vmatpush1.bf16.msra.mxu0 %v2773
        %3220 = vmatprep.subr.bf16.mxu0 %v2778
        %3221 = vmatpush1.bf16.msra.mxu0 %v2777
        %3222 = vmatprep.subr.bf16.mxu0 0
        %3223 = vmatpush1.bf16.msra.mxu0 0
        %3224 = vmatprep.subr.bf16.mxu0 0
        %3225 = vmatpush1.bf16.msra.mxu0 0
        %3226 = vmatprep.subr.bf16.mxu0 0
        %3227 = vmatpush1.bf16.msra.mxu0 0
        %3228 = vmatprep.subr.bf16.mxu0 0
        %3229 = vmatpush1.bf16.msra.mxu0 0
        %3230 = vmatprep.subr.bf16.mxu0 0
        %3231 = vmatpush1.bf16.msra.mxu0 0
        %3232 = vmatprep.subr.bf16.mxu0 0
        %3233 = vmatpush1.bf16.msra.mxu0 0
        %3234 = vmatprep.subr.bf16.mxu0 0
        %3235 = vmatpush1.bf16.msra.mxu0 0
        %3236 = vmatprep.subr.bf16.mxu0 0
        %3237 = vmatpush1.bf16.msra.mxu0 0
        %3238 = vmatprep.mubr.bf16.mxu0 0
        %3239 = vmatmul.mubr.bf16.gmra.mrb[0].mxu0 %v3164
        %v3240 = vpop.f32.mrb[0].mxu0
        %v3241 = vadd.f32 0.0, %v3240
        %v3242 = vpop.f32.mrb[0].mxu0
        %v3243 = vadd.f32 0.0, %v3242
        %v3244 = vpop.f32.mrb[0].mxu0
        %v3245 = vpop.f32.mrb[0].mxu0
        %3246 = vdwg.mxu0
        %v3247 = vadd.f32 %v3160, %v3200
        %v3248 = vadd.f32 %v3161, %v3202
        %v3249 = vadd.f32 %v3162, %v3241
        %v3250 = vadd.f32 %v3163, %v3243
        %v3251 = vxor.u32 %v3247, 2147483648
        %v3252 = vmul.f32 %v3251, 1.442695
        %v3253 = vpow.pop %v3252
        %v3254 = vadd.f32 %v3253, 1.0
        %v3255 = vrcp.pop %v3254
        %v3256 = vmul.f32 1.0, %v3255
        %v3257 = vxor.u32 %v3248, 2147483648
        %v3258 = vmul.f32 %v3257, 1.442695
        %v3259 = vpow.pop %v3258
        %v3260 = vadd.f32 %v3259, 1.0
        %v3261 = vrcp.pop %v3260
        %v3262 = vmul.f32 1.0, %v3261
        %v3263 = vtanh.pop %v3249
        %v3264 = vxor.u32 %v3250, 2147483648
        %v3265 = vmul.f32 %v3264, 1.442695
        %v3266 = vpow.pop %v3265
        %v3267 = vadd.f32 %v3266, 1.0
        %v3268 = vrcp.pop %v3267
        %v3269 = vmul.f32 1.0, %v3268
        %v3270 = vmul.f32 %v3262, %v3158
        %v3271 = vmul.f32 %v3256, %v3263
        %v3272 = vadd.f32 %v3270, %v3271
        %v3273 = vtanh.pop %v3272
        %v3274 = vmul.f32 %v3269, %v3273
        %v3275 = vsel %vm1658, %v3274, %v3157
        %v3276 = vsel %vm1658, %v3272, %v3158
        %3277 = vst [vmem:[%s1661] sm:$0xff] %v3275
        %v3278 = vld [vmem:[%s1663] sm:$0xff]
        %v3279 = vld [vmem:[%s1663 + $0x8] sm:$0xff]
        %v3280 = vld [vmem:[%s1663 + $0x10] sm:$0xff]
        %v3281 = vld [vmem:[%s1663 + $0x18] sm:$0xff]
        %v3282 = vpack.c.bf16 %v3275, %v3275
        %3283 = vmatprep.subr.bf16.mxu0 %v2748
        %3284 = vmatpush1.bf16.msra.mxu0 %v2747
        %3285 = vmatprep.subr.bf16.mxu0 %v2752
        %3286 = vmatpush1.bf16.msra.mxu0 %v2751
        %3287 = vmatprep.subr.bf16.mxu0 %v2756
        %3288 = vmatpush1.bf16.msra.mxu0 %v2755
        %3289 = vmatprep.subr.bf16.mxu0 %v2760
        %3290 = vmatpush1.bf16.msra.mxu0 %v2759
        %3291 = vmatprep.subr.bf16.mxu0 %v2764
        %3292 = vmatpush1.bf16.msra.mxu0 %v2763
        %3293 = vmatprep.subr.bf16.mxu0 %v2768
        %3294 = vmatpush1.bf16.msra.mxu0 %v2767
        %3295 = vmatprep.subr.bf16.mxu0 %v2772
        %3296 = vmatpush1.bf16.msra.mxu0 %v2771
        %3297 = vmatprep.subr.bf16.mxu0 %v2776
        %3298 = vmatpush1.bf16.msra.mxu0 %v2775
        %3299 = vmatprep.subr.bf16.mxu0 0
        %3300 = vmatpush1.bf16.msra.mxu0 0
        %3301 = vmatprep.subr.bf16.mxu0 0
        %3302 = vmatpush1.bf16.msra.mxu0 0
        %3303 = vmatprep.subr.bf16.mxu0 0
        %3304 = vmatpush1.bf16.msra.mxu0 0
        %3305 = vmatprep.subr.bf16.mxu0 0
        %3306 = vmatpush1.bf16.msra.mxu0 0
        %3307 = vmatprep.subr.bf16.mxu0 0
        %3308 = vmatpush1.bf16.msra.mxu0 0
        %3309 = vmatprep.subr.bf16.mxu0 0
        %3310 = vmatpush1.bf16.msra.mxu0 0
        %3311 = vmatprep.subr.bf16.mxu0 0
        %3312 = vmatpush1.bf16.msra.mxu0 0
        %3313 = vmatprep.subr.bf16.mxu0 0
        %3314 = vmatpush1.bf16.msra.mxu0 0
        %3315 = vmatprep.mubr.bf16.mxu0 0
        %3316 = vmatmul.mubr.bf16.gmra.mrb[0].mxu0 %v3282
        %v3317 = vpop.f32.mrb[0].mxu0
        %v3318 = vadd.f32 0.0, %v3317
        %v3319 = vpop.f32.mrb[0].mxu0
        %v3320 = vadd.f32 0.0, %v3319
        %v3321 = vpop.f32.mrb[0].mxu0
        %v3322 = vpop.f32.mrb[0].mxu0
        %3323 = vdwg.mxu0
        %3324 = vmatprep.subr.bf16.mxu0 %v2750
        %3325 = vmatpush1.bf16.msra.mxu0 %v2749
        %3326 = vmatprep.subr.bf16.mxu0 %v2754
        %3327 = vmatpush1.bf16.msra.mxu0 %v2753
        %3328 = vmatprep.subr.bf16.mxu0 %v2758
        %3329 = vmatpush1.bf16.msra.mxu0 %v2757
        %3330 = vmatprep.subr.bf16.mxu0 %v2762
        %3331 = vmatpush1.bf16.msra.mxu0 %v2761
        %3332 = vmatprep.subr.bf16.mxu0 %v2766
        %3333 = vmatpush1.bf16.msra.mxu0 %v2765
        %3334 = vmatprep.subr.bf16.mxu0 %v2770
        %3335 = vmatpush1.bf16.msra.mxu0 %v2769
        %3336 = vmatprep.subr.bf16.mxu0 %v2774
        %3337 = vmatpush1.bf16.msra.mxu0 %v2773
        %3338 = vmatprep.subr.bf16.mxu0 %v2778
        %3339 = vmatpush1.bf16.msra.mxu0 %v2777
        %3340 = vmatprep.subr.bf16.mxu0 0
        %3341 = vmatpush1.bf16.msra.mxu0 0
        %3342 = vmatprep.subr.bf16.mxu0 0
        %3343 = vmatpush1.bf16.msra.mxu0 0
        %3344 = vmatprep.subr.bf16.mxu0 0
        %3345 = vmatpush1.bf16.msra.mxu0 0
        %3346 = vmatprep.subr.bf16.mxu0 0
        %3347 = vmatpush1.bf16.msra.mxu0 0
        %3348 = vmatprep.subr.bf16.mxu0 0
        %3349 = vmatpush1.bf16.msra.mxu0 0
        %3350 = vmatprep.subr.bf16.mxu0 0
        %3351 = vmatpush1.bf16.msra.mxu0 0
        %3352 = vmatprep.subr.bf16.mxu0 0
        %3353 = vmatpush1.bf16.msra.mxu0 0
        %3354 = vmatprep.subr.bf16.mxu0 0
        %3355 = vmatpush1.bf16.msra.mxu0 0
        %3356 = vmatprep.mubr.bf16.mxu0 0
        %3357 = vmatmul.mubr.bf16.gmra.mrb[0].mxu0 %v3282
        %v3358 = vpop.f32.mrb[0].mxu0
        %v3359 = vadd.f32 0.0, %v3358
        %v3360 = vpop.f32.mrb[0].mxu0
        %v3361 = vadd.f32 0.0, %v3360
        %v3362 = vpop.f32.mrb[0].mxu0
        %v3363 = vpop.f32.mrb[0].mxu0
        %3364 = vdwg.mxu0
        %v3365 = vadd.f32 %v3278, %v3318
        %v3366 = vadd.f32 %v3279, %v3320
        %v3367 = vadd.f32 %v3280, %v3359
        %v3368 = vadd.f32 %v3281, %v3361
        %v3369 = vxor.u32 %v3365, 2147483648
        %v3370 = vmul.f32 %v3369, 1.442695
        %v3371 = vpow.pop %v3370
        %v3372 = vadd.f32 %v3371, 1.0
        %v3373 = vrcp.pop %v3372
        %v3374 = vmul.f32 1.0, %v3373
        %v3375 = vxor.u32 %v3366, 2147483648
        %v3376 = vmul.f32 %v3375, 1.442695
        %v3377 = vpow.pop %v3376
        %v3378 = vadd.f32 %v3377, 1.0
        %v3379 = vrcp.pop %v3378
        %v3380 = vmul.f32 1.0, %v3379
        %v3381 = vtanh.pop %v3367
        %v3382 = vxor.u32 %v3368, 2147483648
        %v3383 = vmul.f32 %v3382, 1.442695
        %v3384 = vpow.pop %v3383
        %v3385 = vadd.f32 %v3384, 1.0
        %v3386 = vrcp.pop %v3385
        %v3387 = vmul.f32 1.0, %v3386
        %v3388 = vmul.f32 %v3380, %v3276
        %v3389 = vmul.f32 %v3374, %v3381
        %v3390 = vadd.f32 %v3388, %v3389
        %v3391 = vtanh.pop %v3390
        %v3392 = vmul.f32 %v3387, %v3391
        %v3393 = vsel %vm1786, %v3392, %v3275
        %v3394 = vsel %vm1786, %v3390, %v3276
        %3395 = vst [vmem:[%s1789] sm:$0xff] %v3393
        %v3396 = vld [vmem:[%s1791] sm:$0xff]
        %v3397 = vld [vmem:[%s1791 + $0x8] sm:$0xff]
        %v3398 = vld [vmem:[%s1791 + $0x10] sm:$0xff]
        %v3399 = vld [vmem:[%s1791 + $0x18] sm:$0xff]
        %v3400 = vpack.c.bf16 %v3393, %v3393
        %3401 = vmatprep.subr.bf16.mxu0 %v2748
        %3402 = vmatpush1.bf16.msra.mxu0 %v2747
        %3403 = vmatprep.subr.bf16.mxu0 %v2752
        %3404 = vmatpush1.bf16.msra.mxu0 %v2751
        %3405 = vmatprep.subr.bf16.mxu0 %v2756
        %3406 = vmatpush1.bf16.msra.mxu0 %v2755
        %3407 = vmatprep.subr.bf16.mxu0 %v2760
        %3408 = vmatpush1.bf16.msra.mxu0 %v2759
        %3409 = vmatprep.subr.bf16.mxu0 %v2764
        %3410 = vmatpush1.bf16.msra.mxu0 %v2763
        %3411 = vmatprep.subr.bf16.mxu0 %v2768
        %3412 = vmatpush1.bf16.msra.mxu0 %v2767
        %3413 = vmatprep.subr.bf16.mxu0 %v2772
        %3414 = vmatpush1.bf16.msra.mxu0 %v2771
        %3415 = vmatprep.subr.bf16.mxu0 %v2776
        %3416 = vmatpush1.bf16.msra.mxu0 %v2775
        %3417 = vmatprep.subr.bf16.mxu0 0
        %3418 = vmatpush1.bf16.msra.mxu0 0
        %3419 = vmatprep.subr.bf16.mxu0 0
        %3420 = vmatpush1.bf16.msra.mxu0 0
        %3421 = vmatprep.subr.bf16.mxu0 0
        %3422 = vmatpush1.bf16.msra.mxu0 0
        %3423 = vmatprep.subr.bf16.mxu0 0
        %3424 = vmatpush1.bf16.msra.mxu0 0
        %3425 = vmatprep.subr.bf16.mxu0 0
        %3426 = vmatpush1.bf16.msra.mxu0 0
        %3427 = vmatprep.subr.bf16.mxu0 0
        %3428 = vmatpush1.bf16.msra.mxu0 0
        %3429 = vmatprep.subr.bf16.mxu0 0
        %3430 = vmatpush1.bf16.msra.mxu0 0
        %3431 = vmatprep.subr.bf16.mxu0 0
        %3432 = vmatpush1.bf16.msra.mxu0 0
        %3433 = vmatprep.mubr.bf16.mxu0 0
        %3434 = vmatmul.mubr.bf16.gmra.mrb[0].mxu0 %v3400
        %v3435 = vpop.f32.mrb[0].mxu0
        %v3436 = vadd.f32 0.0, %v3435
        %v3437 = vpop.f32.mrb[0].mxu0
        %v3438 = vadd.f32 0.0, %v3437
        %v3439 = vpop.f32.mrb[0].mxu0
        %v3440 = vpop.f32.mrb[0].mxu0
        %3441 = vdwg.mxu0
        %3442 = vmatprep.subr.bf16.mxu0 %v2750
        %3443 = vmatpush1.bf16.msra.mxu0 %v2749
        %3444 = vmatprep.subr.bf16.mxu0 %v2754
        %3445 = vmatpush1.bf16.msra.mxu0 %v2753
        %3446 = vmatprep.subr.bf16.mxu0 %v2758
        %3447 = vmatpush1.bf16.msra.mxu0 %v2757
        %3448 = vmatprep.subr.bf16.mxu0 %v2762
        %3449 = vmatpush1.bf16.msra.mxu0 %v2761
        %3450 = vmatprep.subr.bf16.mxu0 %v2766
        %3451 = vmatpush1.bf16.msra.mxu0 %v2765
        %3452 = vmatprep.subr.bf16.mxu0 %v2770
        %3453 = vmatpush1.bf16.msra.mxu0 %v2769
        %3454 = vmatprep.subr.bf16.mxu0 %v2774
        %3455 = vmatpush1.bf16.msra.mxu0 %v2773
        %3456 = vmatprep.subr.bf16.mxu0 %v2778
        %3457 = vmatpush1.bf16.msra.mxu0 %v2777
        %3458 = vmatprep.subr.bf16.mxu0 0
        %3459 = vmatpush1.bf16.msra.mxu0 0
        %3460 = vmatprep.subr.bf16.mxu0 0
        %3461 = vmatpush1.bf16.msra.mxu0 0
        %3462 = vmatprep.subr.bf16.mxu0 0
        %3463 = vmatpush1.bf16.msra.mxu0 0
        %3464 = vmatprep.subr.bf16.mxu0 0
        %3465 = vmatpush1.bf16.msra.mxu0 0
        %3466 = vmatprep.subr.bf16.mxu0 0
        %3467 = vmatpush1.bf16.msra.mxu0 0
        %3468 = vmatprep.subr.bf16.mxu0 0
        %3469 = vmatpush1.bf16.msra.mxu0 0
        %3470 = vmatprep.subr.bf16.mxu0 0
        %3471 = vmatpush1.bf16.msra.mxu0 0
        %3472 = vmatprep.subr.bf16.mxu0 0
        %3473 = vmatpush1.bf16.msra.mxu0 0
        %3474 = vmatprep.mubr.bf16.mxu0 0
        %3475 = vmatmul.mubr.bf16.gmra.mrb[0].mxu0 %v3400
        %v3476 = vpop.f32.mrb[0].mxu0
        %v3477 = vadd.f32 0.0, %v3476
        %v3478 = vpop.f32.mrb[0].mxu0
        %v3479 = vadd.f32 0.0, %v3478
        %v3480 = vpop.f32.mrb[0].mxu0
        %v3481 = vpop.f32.mrb[0].mxu0
        %3482 = vdwg.mxu0
        %v3483 = vadd.f32 %v3396, %v3436
        %v3484 = vadd.f32 %v3397, %v3438
        %v3485 = vadd.f32 %v3398, %v3477
        %v3486 = vadd.f32 %v3399, %v3479
        %v3487 = vxor.u32 %v3483, 2147483648
        %v3488 = vmul.f32 %v3487, 1.442695
        %v3489 = vpow.pop %v3488
        %v3490 = vadd.f32 %v3489, 1.0
        %v3491 = vrcp.pop %v3490
        %v3492 = vmul.f32 1.0, %v3491
        %v3493 = vxor.u32 %v3484, 2147483648
        %v3494 = vmul.f32 %v3493, 1.442695
        %v3495 = vpow.pop %v3494
        %v3496 = vadd.f32 %v3495, 1.0
        %v3497 = vrcp.pop %v3496
        %v3498 = vmul.f32 1.0, %v3497
        %v3499 = vtanh.pop %v3485
        %v3500 = vxor.u32 %v3486, 2147483648
        %v3501 = vmul.f32 %v3500, 1.442695
        %v3502 = vpow.pop %v3501
        %v3503 = vadd.f32 %v3502, 1.0
        %v3504 = vrcp.pop %v3503
        %v3505 = vmul.f32 1.0, %v3504
        %v3506 = vmul.f32 %v3498, %v3394
        %v3507 = vmul.f32 %v3492, %v3499
        %v3508 = vadd.f32 %v3506, %v3507
        %v3509 = vtanh.pop %v3508
        %v3510 = vmul.f32 %v3505, %v3509
        %v3511 = vsel %vm1914, %v3510, %v3393
        %v3512 = vsel %vm1914, %v3508, %v3394
        %3513 = vst [vmem:[%s1917] sm:$0xff] %v3511
        %v3514 = vld [vmem:[%s1919] sm:$0xff]
        %v3515 = vld [vmem:[%s1919 + $0x8] sm:$0xff]
        %v3516 = vld [vmem:[%s1919 + $0x10] sm:$0xff]
        %v3517 = vld [vmem:[%s1919 + $0x18] sm:$0xff]
        %v3518 = vpack.c.bf16 %v3511, %v3511
        %3519 = vmatprep.subr.bf16.mxu0 %v2748
        %3520 = vmatpush1.bf16.msra.mxu0 %v2747
        %3521 = vmatprep.subr.bf16.mxu0 %v2752
        %3522 = vmatpush1.bf16.msra.mxu0 %v2751
        %3523 = vmatprep.subr.bf16.mxu0 %v2756
        %3524 = vmatpush1.bf16.msra.mxu0 %v2755
        %3525 = vmatprep.subr.bf16.mxu0 %v2760
        %3526 = vmatpush1.bf16.msra.mxu0 %v2759
        %3527 = vmatprep.subr.bf16.mxu0 %v2764
        %3528 = vmatpush1.bf16.msra.mxu0 %v2763
        %3529 = vmatprep.subr.bf16.mxu0 %v2768
        %3530 = vmatpush1.bf16.msra.mxu0 %v2767
        %3531 = vmatprep.subr.bf16.mxu0 %v2772
        %3532 = vmatpush1.bf16.msra.mxu0 %v2771
        %3533 = vmatprep.subr.bf16.mxu0 %v2776
        %3534 = vmatpush1.bf16.msra.mxu0 %v2775
        %3535 = vmatprep.subr.bf16.mxu0 0
        %3536 = vmatpush1.bf16.msra.mxu0 0
        %3537 = vmatprep.subr.bf16.mxu0 0
        %3538 = vmatpush1.bf16.msra.mxu0 0
        %3539 = vmatprep.subr.bf16.mxu0 0
        %3540 = vmatpush1.bf16.msra.mxu0 0
        %3541 = vmatprep.subr.bf16.mxu0 0
        %3542 = vmatpush1.bf16.msra.mxu0 0
        %3543 = vmatprep.subr.bf16.mxu0 0
        %3544 = vmatpush1.bf16.msra.mxu0 0
        %3545 = vmatprep.subr.bf16.mxu0 0
        %3546 = vmatpush1.bf16.msra.mxu0 0
        %3547 = vmatprep.subr.bf16.mxu0 0
        %3548 = vmatpush1.bf16.msra.mxu0 0
        %3549 = vmatprep.subr.bf16.mxu0 0
        %3550 = vmatpush1.bf16.msra.mxu0 0
        %3551 = vmatprep.mubr.bf16.mxu0 0
        %3552 = vmatmul.mubr.bf16.gmra.mrb[0].mxu0 %v3518
        %v3553 = vpop.f32.mrb[0].mxu0
        %v3554 = vadd.f32 0.0, %v3553
        %v3555 = vpop.f32.mrb[0].mxu0
        %v3556 = vadd.f32 0.0, %v3555
        %v3557 = vpop.f32.mrb[0].mxu0
        %v3558 = vpop.f32.mrb[0].mxu0
        %3559 = vdwg.mxu0
        %3560 = vmatprep.subr.bf16.mxu0 %v2750
        %3561 = vmatpush1.bf16.msra.mxu0 %v2749
        %3562 = vmatprep.subr.bf16.mxu0 %v2754
        %3563 = vmatpush1.bf16.msra.mxu0 %v2753
        %3564 = vmatprep.subr.bf16.mxu0 %v2758
        %3565 = vmatpush1.bf16.msra.mxu0 %v2757
        %3566 = vmatprep.subr.bf16.mxu0 %v2762
        %3567 = vmatpush1.bf16.msra.mxu0 %v2761
        %3568 = vmatprep.subr.bf16.mxu0 %v2766
        %3569 = vmatpush1.bf16.msra.mxu0 %v2765
        %3570 = vmatprep.subr.bf16.mxu0 %v2770
        %3571 = vmatpush1.bf16.msra.mxu0 %v2769
        %3572 = vmatprep.subr.bf16.mxu0 %v2774
        %3573 = vmatpush1.bf16.msra.mxu0 %v2773
        %3574 = vmatprep.subr.bf16.mxu0 %v2778
        %3575 = vmatpush1.bf16.msra.mxu0 %v2777
        %3576 = vmatprep.subr.bf16.mxu0 0
        %3577 = vmatpush1.bf16.msra.mxu0 0
        %3578 = vmatprep.subr.bf16.mxu0 0
        %3579 = vmatpush1.bf16.msra.mxu0 0
        %3580 = vmatprep.subr.bf16.mxu0 0
        %3581 = vmatpush1.bf16.msra.mxu0 0
        %3582 = vmatprep.subr.bf16.mxu0 0
        %3583 = vmatpush1.bf16.msra.mxu0 0
        %3584 = vmatprep.subr.bf16.mxu0 0
        %3585 = vmatpush1.bf16.msra.mxu0 0
        %3586 = vmatprep.subr.bf16.mxu0 0
        %3587 = vmatpush1.bf16.msra.mxu0 0
        %3588 = vmatprep.subr.bf16.mxu0 0
        %3589 = vmatpush1.bf16.msra.mxu0 0
        %3590 = vmatprep.subr.bf16.mxu0 0
        %3591 = vmatpush1.bf16.msra.mxu0 0
        %3592 = vmatprep.mubr.bf16.mxu0 0
        %3593 = vmatmul.mubr.bf16.gmra.mrb[0].mxu0 %v3518
        %v3594 = vpop.f32.mrb[0].mxu0
        %v3595 = vadd.f32 0.0, %v3594
        %v3596 = vpop.f32.mrb[0].mxu0
        %v3597 = vadd.f32 0.0, %v3596
        %v3598 = vpop.f32.mrb[0].mxu0
        %v3599 = vpop.f32.mrb[0].mxu0
        %3600 = vdwg.mxu0
        %v3601 = vadd.f32 %v3514, %v3554
        %v3602 = vadd.f32 %v3515, %v3556
        %v3603 = vadd.f32 %v3516, %v3595
        %v3604 = vadd.f32 %v3517, %v3597
        %v3605 = vxor.u32 %v3601, 2147483648
        %v3606 = vmul.f32 %v3605, 1.442695
        %v3607 = vpow.pop %v3606
        %v3608 = vadd.f32 %v3607, 1.0
        %v3609 = vrcp.pop %v3608
        %v3610 = vmul.f32 1.0, %v3609
        %v3611 = vxor.u32 %v3602, 2147483648
        %v3612 = vmul.f32 %v3611, 1.442695
        %v3613 = vpow.pop %v3612
        %v3614 = vadd.f32 %v3613, 1.0
        %v3615 = vrcp.pop %v3614
        %v3616 = vmul.f32 1.0, %v3615
        %v3617 = vtanh.pop %v3603
        %v3618 = vxor.u32 %v3604, 2147483648
        %v3619 = vmul.f32 %v3618, 1.442695
        %v3620 = vpow.pop %v3619
        %v3621 = vadd.f32 %v3620, 1.0
        %v3622 = vrcp.pop %v3621
        %v3623 = vmul.f32 1.0, %v3622
        %v3624 = vmul.f32 %v3616, %v3512
        %v3625 = vmul.f32 %v3610, %v3617
        %v3626 = vadd.f32 %v3624, %v3625
        %v3627 = vtanh.pop %v3626
        %v3628 = vmul.f32 %v3623, %v3627
        %v3629 = vsel %vm2042, %v3628, %v3511
        %v3630 = vsel %vm2042, %v3626, %v3512
        %3631 = vst [vmem:[%s2045] sm:$0xff] %v3629
        %v3632 = vld [vmem:[%s2047] sm:$0xff]
        %v3633 = vld [vmem:[%s2047 + $0x8] sm:$0xff]
        %v3634 = vld [vmem:[%s2047 + $0x10] sm:$0xff]
        %v3635 = vld [vmem:[%s2047 + $0x18] sm:$0xff]
        %v3636 = vpack.c.bf16 %v3629, %v3629
        %3637 = vmatprep.subr.bf16.mxu0 %v2748
        %3638 = vmatpush1.bf16.msra.mxu0 %v2747
        %3639 = vmatprep.subr.bf16.mxu0 %v2752
        %3640 = vmatpush1.bf16.msra.mxu0 %v2751
        %3641 = vmatprep.subr.bf16.mxu0 %v2756
        %3642 = vmatpush1.bf16.msra.mxu0 %v2755
        %3643 = vmatprep.subr.bf16.mxu0 %v2760
        %3644 = vmatpush1.bf16.msra.mxu0 %v2759
        %3645 = vmatprep.subr.bf16.mxu0 %v2764
        %3646 = vmatpush1.bf16.msra.mxu0 %v2763
        %3647 = vmatprep.subr.bf16.mxu0 %v2768
        %3648 = vmatpush1.bf16.msra.mxu0 %v2767
        %3649 = vmatprep.subr.bf16.mxu0 %v2772
        %3650 = vmatpush1.bf16.msra.mxu0 %v2771
        %3651 = vmatprep.subr.bf16.mxu0 %v2776
        %3652 = vmatpush1.bf16.msra.mxu0 %v2775
        %3653 = vmatprep.subr.bf16.mxu0 0
        %3654 = vmatpush1.bf16.msra.mxu0 0
        %3655 = vmatprep.subr.bf16.mxu0 0
        %3656 = vmatpush1.bf16.msra.mxu0 0
        %3657 = vmatprep.subr.bf16.mxu0 0
        %3658 = vmatpush1.bf16.msra.mxu0 0
        %3659 = vmatprep.subr.bf16.mxu0 0
        %3660 = vmatpush1.bf16.msra.mxu0 0
        %3661 = vmatprep.subr.bf16.mxu0 0
        %3662 = vmatpush1.bf16.msra.mxu0 0
        %3663 = vmatprep.subr.bf16.mxu0 0
        %3664 = vmatpush1.bf16.msra.mxu0 0
        %3665 = vmatprep.subr.bf16.mxu0 0
        %3666 = vmatpush1.bf16.msra.mxu0 0
        %3667 = vmatprep.subr.bf16.mxu0 0
        %3668 = vmatpush1.bf16.msra.mxu0 0
        %3669 = vmatprep.mubr.bf16.mxu0 0
        %3670 = vmatmul.mubr.bf16.gmra.mrb[0].mxu0 %v3636
        %v3671 = vpop.f32.mrb[0].mxu0
        %v3672 = vadd.f32 0.0, %v3671
        %v3673 = vpop.f32.mrb[0].mxu0
        %v3674 = vadd.f32 0.0, %v3673
        %v3675 = vpop.f32.mrb[0].mxu0
        %v3676 = vpop.f32.mrb[0].mxu0
        %3677 = vdwg.mxu0
        %3678 = vmatprep.subr.bf16.mxu0 %v2750
        %3679 = vmatpush1.bf16.msra.mxu0 %v2749
        %3680 = vmatprep.subr.bf16.mxu0 %v2754
        %3681 = vmatpush1.bf16.msra.mxu0 %v2753
        %3682 = vmatprep.subr.bf16.mxu0 %v2758
        %3683 = vmatpush1.bf16.msra.mxu0 %v2757
        %3684 = vmatprep.subr.bf16.mxu0 %v2762
        %3685 = vmatpush1.bf16.msra.mxu0 %v2761
        %3686 = vmatprep.subr.bf16.mxu0 %v2766
        %3687 = vmatpush1.bf16.msra.mxu0 %v2765
        %3688 = vmatprep.subr.bf16.mxu0 %v2770
        %3689 = vmatpush1.bf16.msra.mxu0 %v2769
        %3690 = vmatprep.subr.bf16.mxu0 %v2774
        %3691 = vmatpush1.bf16.msra.mxu0 %v2773
        %3692 = vmatprep.subr.bf16.mxu0 %v2778
        %3693 = vmatpush1.bf16.msra.mxu0 %v2777
        %3694 = vmatprep.subr.bf16.mxu0 0
        %3695 = vmatpush1.bf16.msra.mxu0 0
        %3696 = vmatprep.subr.bf16.mxu0 0
        %3697 = vmatpush1.bf16.msra.mxu0 0
        %3698 = vmatprep.subr.bf16.mxu0 0
        %3699 = vmatpush1.bf16.msra.mxu0 0
        %3700 = vmatprep.subr.bf16.mxu0 0
        %3701 = vmatpush1.bf16.msra.mxu0 0
        %3702 = vmatprep.subr.bf16.mxu0 0
        %3703 = vmatpush1.bf16.msra.mxu0 0
        %3704 = vmatprep.subr.bf16.mxu0 0
        %3705 = vmatpush1.bf16.msra.mxu0 0
        %3706 = vmatprep.subr.bf16.mxu0 0
        %3707 = vmatpush1.bf16.msra.mxu0 0
        %3708 = vmatprep.subr.bf16.mxu0 0
        %3709 = vmatpush1.bf16.msra.mxu0 0
        %3710 = vmatprep.mubr.bf16.mxu0 0
        %3711 = vmatmul.mubr.bf16.gmra.mrb[0].mxu0 %v3636
        %v3712 = vpop.f32.mrb[0].mxu0
        %v3713 = vadd.f32 0.0, %v3712
        %v3714 = vpop.f32.mrb[0].mxu0
        %v3715 = vadd.f32 0.0, %v3714
        %v3716 = vpop.f32.mrb[0].mxu0
        %v3717 = vpop.f32.mrb[0].mxu0
        %3718 = vdwg.mxu0
        %v3719 = vadd.f32 %v3632, %v3672
        %v3720 = vadd.f32 %v3633, %v3674
        %v3721 = vadd.f32 %v3634, %v3713
        %v3722 = vadd.f32 %v3635, %v3715
        %v3723 = vxor.u32 %v3719, 2147483648
        %v3724 = vmul.f32 %v3723, 1.442695
        %v3725 = vpow.pop %v3724
        %v3726 = vadd.f32 %v3725, 1.0
        %v3727 = vrcp.pop %v3726
        %v3728 = vmul.f32 1.0, %v3727
        %v3729 = vxor.u32 %v3720, 2147483648
        %v3730 = vmul.f32 %v3729, 1.442695
        %v3731 = vpow.pop %v3730
        %v3732 = vadd.f32 %v3731, 1.0
        %v3733 = vrcp.pop %v3732
        %v3734 = vmul.f32 1.0, %v3733
        %v3735 = vtanh.pop %v3721
        %v3736 = vxor.u32 %v3722, 2147483648
        %v3737 = vmul.f32 %v3736, 1.442695
        %v3738 = vpow.pop %v3737
        %v3739 = vadd.f32 %v3738, 1.0
        %v3740 = vrcp.pop %v3739
        %v3741 = vmul.f32 1.0, %v3740
        %v3742 = vmul.f32 %v3734, %v3630
        %v3743 = vmul.f32 %v3728, %v3735
        %v3744 = vadd.f32 %v3742, %v3743
        %v3745 = vtanh.pop %v3744
        %v3746 = vmul.f32 %v3741, %v3745
        %v3747 = vsel %vm2170, %v3746, %v3629
        %v3748 = vsel %vm2170, %v3744, %v3630
        %3749 = vst [vmem:[%s2173] sm:$0xff] %v3747
        %3750 = vst [vmem:[%s2642] sm:$0xff] %v3747
        %3751 = vst [vmem:[%s2644] sm:$0xff] %v3748
        %p3752 = scmp.eq.s32.totalorder %s38, 1
        // Predicated region
        $region97: #{tpu_custom_call.1} parent=63 // pred_check
          %p3753 = pneg %p3752
        $region98: #{tpu_custom_call.1} parent=63 // pred_check_branch
          %3755 = sbr.rel (%p3753) target = $region100
        $region99: #{tpu_custom_call.1} parent=63 // pred_region
          %v3756 = vld [vmem:[#allocation2] sm:$0xff]
          %v3757 = vld [vmem:[#allocation2 + $0x8] sm:$0xff]
          %3758 = vst [vmem:[#allocation19] sm:$0xff] %v3756
          %3759 = vst [vmem:[#allocation19 + $0x8] sm:$0xff] %v3757
          %v3760 = vld [vmem:[#allocation3] sm:$0xff]
          %v3761 = vld [vmem:[#allocation3 + $0x8] sm:$0xff]
          %3762 = vst [vmem:[#allocation21] sm:$0xff] %v3760
          %3763 = vst [vmem:[#allocation21 + $0x8] sm:$0xff] %v3761
          %v3764 = vld [vmem:[%s2642] sm:$0xff]
          %v3765 = vpack.c.bf16 %v3764, %v3764
          %v3766 = vld [vmem:[#allocation17] sm:$0xf]
          %v3767 = vld [vmem:[#allocation17 + $0x4] sm:$0xf]
          %v3768 = vld [vmem:[#allocation17 + $0x8] sm:$0xf]
          %v3769 = vld [vmem:[#allocation17 + $0xc] sm:$0xf]
          %v3770 = vld [vmem:[#allocation17 + $0x10] sm:$0xf]
          %v3771 = vld [vmem:[#allocation17 + $0x14] sm:$0xf]
          %v3772 = vld [vmem:[#allocation17 + $0x18] sm:$0xf]
          %v3773 = vld [vmem:[#allocation17 + $0x1c] sm:$0xf]
          %v3774 = vld [vmem:[#allocation17 + $0x20] sm:$0xf]
          %v3775 = vld [vmem:[#allocation17 + $0x24] sm:$0xf]
          %v3776 = vld [vmem:[#allocation17 + $0x28] sm:$0xf]
          %v3777 = vld [vmem:[#allocation17 + $0x2c] sm:$0xf]
          %v3778 = vld [vmem:[#allocation17 + $0x30] sm:$0xf]
          %v3779 = vld [vmem:[#allocation17 + $0x34] sm:$0xf]
          %v3780 = vld [vmem:[#allocation17 + $0x38] sm:$0xf]
          %v3781 = vld [vmem:[#allocation17 + $0x3c] sm:$0xf]
          %v3782 = vld [vmem:[%s10] sm:$0x1]
          %v3784 = vlaneseq
          %v3785 = vshrl.u32 %v3784, 7
          %v3786 = vsub.s32 0, %v3785
          %v3787 = vrot.slane %v3782, %v3786
          %v3805 = vunpack.c.l.b16 %v3766
          %v3806 = vunpack.c.l.b16 %v3767
          %v3807 = vunpack.c.l.b16 %v3768
          %v3808 = vunpack.c.l.b16 %v3769
          %v3809 = vunpack.c.l.b16 %v3770
          %v3810 = vunpack.c.l.b16 %v3771
          %v3811 = vunpack.c.l.b16 %v3772
          %v3812 = vunpack.c.l.b16 %v3773
          %v3813 = vunpack.c.l.b16 %v3774
          %v3814 = vunpack.c.l.b16 %v3775
          %v3815 = vunpack.c.l.b16 %v3776
          %v3816 = vunpack.c.l.b16 %v3777
          %v3817 = vunpack.c.l.b16 %v3778
          %v3818 = vunpack.c.l.b16 %v3779
          %v3819 = vunpack.c.l.b16 %v3780
          %v3820 = vunpack.c.l.b16 %v3781
          %v3821 = vpack.c.b16 %v3806, %v3805
          %v3822 = vpack.c.b16 %v3808, %v3807
          %v3823 = vpack.c.b16 %v3810, %v3809
          %v3824 = vpack.c.b16 %v3812, %v3811
          %v3825 = vpack.c.b16 %v3814, %v3813
          %v3826 = vpack.c.b16 %v3816, %v3815
          %v3827 = vpack.c.b16 %v3818, %v3817
          %v3828 = vpack.c.b16 %v3820, %v3819
          %3837 = vmatprep.subr.bf16.mxu0 0
          %3838 = vmatpush1.bf16.msra.mxu0 %v3821
          %3839 = vmatprep.subr.bf16.mxu0 0
          %3840 = vmatpush1.bf16.msra.mxu0 %v3822
          %3841 = vmatprep.subr.bf16.mxu0 0
          %3842 = vmatpush1.bf16.msra.mxu0 %v3823
          %3843 = vmatprep.subr.bf16.mxu0 0
          %3844 = vmatpush1.bf16.msra.mxu0 %v3824
          %3845 = vmatprep.subr.bf16.mxu0 0
          %3846 = vmatpush1.bf16.msra.mxu0 %v3825
          %3847 = vmatprep.subr.bf16.mxu0 0
          %3848 = vmatpush1.bf16.msra.mxu0 %v3826
          %3849 = vmatprep.subr.bf16.mxu0 0
          %3850 = vmatpush1.bf16.msra.mxu0 %v3827
          %3851 = vmatprep.subr.bf16.mxu0 0
          %3852 = vmatpush1.bf16.msra.mxu0 %v3828
          %3853 = vmatprep.subr.bf16.mxu0 0
          %3854 = vmatpush1.bf16.msra.mxu0 0
          %3855 = vmatprep.subr.bf16.mxu0 0
          %3856 = vmatpush1.bf16.msra.mxu0 0
          %3857 = vmatprep.subr.bf16.mxu0 0
          %3858 = vmatpush1.bf16.msra.mxu0 0
          %3859 = vmatprep.subr.bf16.mxu0 0
          %3860 = vmatpush1.bf16.msra.mxu0 0
          %3861 = vmatprep.subr.bf16.mxu0 0
          %3862 = vmatpush1.bf16.msra.mxu0 0
          %3863 = vmatprep.subr.bf16.mxu0 0
          %3864 = vmatpush1.bf16.msra.mxu0 0
          %3865 = vmatprep.subr.bf16.mxu0 0
          %3866 = vmatpush1.bf16.msra.mxu0 0
          %3867 = vmatprep.subr.bf16.mxu0 0
          %3868 = vmatpush1.bf16.msra.mxu0 0
          %3869 = vmatprep.mubr.bf16.mxu0 0
          %3870 = vmatmul.mubr.bf16.gmra.mrb[0].mxu0 %v3765
          %v3871 = vpop.f32.mrb[0].mxu0
          %v3872 = vadd.f32 %v3787, %v3871
          %v3873 = vpop.f32.mrb[0].mxu0
          %v3874 = vpop.f32.mrb[0].mxu0
          %v3875 = vpop.f32.mrb[0].mxu0
          %3876 = vdwg.mxu0
          %v3877 = vxor.u32 %v3872, 2147483648
          %v3878 = vmul.f32 %v3877, 1.442695
          %v3879 = vpow.pop %v3878
          %v3880 = vadd.f32 %v3879, 1.0
          %v3881 = vrcp.pop %v3880
          %v3882 = vmul.f32 1.0, %v3881
          %3883 = vst [vmem:[#allocation18] sm:$0xff] %v3882
        $region100: #{tpu_custom_call.1} parent=63 // pred_fallthru
          _
        // Predicated region
        $region101: #{tpu_custom_call.1} parent=63 // pred_check
          %p3884 = pneg %p316
        $region102: #{tpu_custom_call.1} parent=63 // pred_check_branch
          %3886 = sbr.rel (%p3884) target = $region104
        $region103: #{tpu_custom_call.1} parent=63 // pred_region
          %s3888 = ssub.s32 128, 128
          %3889 = vsyncadd [#allocation8], %s3888
          %s3890 = smul.addr %s37, 128
          %s3891 = scalar_lea.hbm %s11, %s3890
          %s3893 = sshll.u32 [#allocation18], 4
          %s3894 = int_to_ptr.vmem [resolvable:$true] %s3893
          %3896 = dma.vmem_to_hbm [thread:$0]  %s3894, 128, %s3891, [#allocation8]
        $region104: #{tpu_custom_call.1} parent=63 // pred_fallthru
          _
        // Predicated region
        $region105: #{tpu_custom_call.1} parent=63 // pred_check
          %p3897 = pneg %p342
        $region106: #{tpu_custom_call.1} parent=63 // pred_check_branch
          %3899 = sbr.rel (%p3897) target = $region108
        $region107: #{tpu_custom_call.1} parent=63 // pred_region
          %s3901 = ssub.s32 256, 256
          %3902 = vsyncadd [#allocation20], %s3901
          %s3903 = smul.addr %s37, 128
          %s3904 = scalar_lea.hbm %s12, %s3903
          %s3905 = sshll.u32 [#allocation19], 4
          %s3906 = int_to_ptr.vmem [resolvable:$true] %s3905
          %3911 = dma.vmem_to_hbm [thread:$0]  %s3906, 256, %s3904, [#allocation20], 128, 128, 8
        $region108: #{tpu_custom_call.1} parent=63 // pred_fallthru
          _
        // Predicated region
        $region109: #{tpu_custom_call.1} parent=63 // pred_check
          %p3912 = pneg %p368
        $region110: #{tpu_custom_call.1} parent=63 // pred_check_branch
          %3914 = sbr.rel (%p3912) target = $region112
        $region111: #{tpu_custom_call.1} parent=63 // pred_region
          %s3916 = ssub.s32 256, 256
          %3917 = vsyncadd [#allocation20], %s3916
          %s3918 = smul.addr %s37, 128
          %s3919 = scalar_lea.hbm %s13, %s3918
          %s3920 = sshll.u32 [#allocation21], 4
          %s3921 = int_to_ptr.vmem [resolvable:$true] %s3920
          %3926 = dma.vmem_to_hbm [thread:$0]  %s3921, 256, %s3919, [#allocation20], 128, 128, 8
        $region112: #{tpu_custom_call.1} parent=63 // pred_fallthru
          _
        // Predicated region
        $region113: #{tpu_custom_call.1} parent=63 // pred_check
          %p3927 = pneg %p316
        $region114: #{tpu_custom_call.1} parent=63 // pred_check_branch
          %3929 = sbr.rel (%p3927) target = $region116
        $region115: #{tpu_custom_call.1} parent=63 // pred_region
          %3930 = dma.done [#allocation8], 128
        $region116: #{tpu_custom_call.1} parent=63 // pred_fallthru
          _
        // Predicated region
        $region117: #{tpu_custom_call.1} parent=63 // pred_check
          %p3931 = pneg %p342
        $region118: #{tpu_custom_call.1} parent=63 // pred_check_branch
          %3933 = sbr.rel (%p3931) target = $region120
        $region119: #{tpu_custom_call.1} parent=63 // pred_region
          %3934 = dma.done [#allocation20], 256
        $region120: #{tpu_custom_call.1} parent=63 // pred_fallthru
          _
        // Predicated region
        $region121: #{tpu_custom_call.1} parent=63 // pred_check
          %p3935 = pneg %p368
        $region122: #{tpu_custom_call.1} parent=63 // pred_check_branch
          %3937 = sbr.rel (%p3935) target = $region124
        $region123: #{tpu_custom_call.1} parent=63 // pred_region
          %3938 = dma.done [#allocation20], 256
        $region124: #{tpu_custom_call.1} parent=63 // pred_fallthru
          _
      $region64: #{tpu_custom_call.1} parent=5 // pred_fallthru
        _
      %p3939 = scmp.le.s32.totalorder 2, %s28
      // Predicated region
      $region125: #{tpu_custom_call.1} parent=5 // pred_check
        %p3940 = pneg %p3939
      $region126: #{tpu_custom_call.1} parent=5 // pred_check_branch
        %3942 = sbr.rel (%p3940) target = $region128
      $region127: #{tpu_custom_call.1} parent=5 // pred_region
        %s3943 = ssub.s32 %s28, 2
      $region128: #{tpu_custom_call.1} parent=5 // pred_fallthru
        _
    $region6: #{tpu_custom_call.1} parent=1 // loop_footer
      %s32 = sadd.s32 1, %s28
    $region7: #{tpu_custom_call.1} parent=1 // loop_footer_branch
      %27 = sbr.rel target = $region3
    $region8: #{tpu_custom_call.1} parent=1 // loop_exit
      _
    %3944 = vsyncpa [#allocation7], 1
    %s3945 = scalar_lea.sflag [#allocation7], 1
    %3946 = vsyncpa %s3945, 1
    %3947 = vsyncpa [#allocation10], 1
    %3948 = vsyncpa [#allocation13], 1
    %3949 = vsyncpa [#allocation16], 1
    %3950 = vsyncpa [#allocation8], 1
    %s3951 = scalar_lea.sflag [#allocation8], 1
    %3952 = vsyncpa %s3951, 1
    %3953 = vsyncpa [#allocation20], 1

</llo_original>
